<compile_context>
chip_gen: v5e
topology: v5e:2x2
jax: 0.10.0
libtpu: 0.0.40
codegen_flags: <defaults>
</compile_context>

<pallas_src>
import jax
import jax.numpy as jnp
from jax.experimental import pallas as pl
from jax.experimental.pallas import tpu as pltpu


def _round_up(n, m):
    return ((n + m - 1) // m) * m


# PyTorch gate order [i, f, g, o] -> kernel order [i, f, o, g]
# (three sigmoid gates contiguous, tanh gate last).
_GATE_PERM = (0, 1, 3, 2)


def _pad_gates_w(w, k_in, k_in_p, h, hp, dtype):
    """(k_in, 4h) -> (k_in_p, 4hp), gate-blocked, permuted to [i,f,o,g].

    Padded rows/columns are zero, so padded hidden lanes stay exactly zero
    through the recurrence."""
    out = jnp.zeros((k_in_p, 4 * hp), jnp.float32)
    for new_g, old_g in enumerate(_GATE_PERM):
        out = out.at[:k_in, new_g * hp:new_g * hp + h].set(
            w[:, old_g * h:(old_g + 1) * h])
    return out.astype(dtype)


def _pad_gates_b(b, h, hp):
    out = jnp.zeros((1, 4 * hp), jnp.float32)
    for new_g, old_g in enumerate(_GATE_PERM):
        out = out.at[:, new_g * hp:new_g * hp + h].set(
            b[:, old_g * h:(old_g + 1) * h])
    return out


def _lstm_kernel(x_ref, wih0_ref, whh0_ref, b0_ref, wih1_ref, whh1_ref, b1_ref,
                 wfc_ref, bfc_ref,
                 pred_ref, hn_ref, cn_ref,
                 xproj_sc, h_all_sc):
    T, Bp, Dp = x_ref.shape
    Hp = hn_ref.shape[-1]

    # ---- Hoisted layer-0 input projection: one GEMM over all timesteps ----
    x_flat = x_ref[...].reshape(T * Bp, Dp)
    xproj = jnp.dot(x_flat, wih0_ref[...],
                    preferred_element_type=jnp.float32) + b0_ref[...]
    xproj_sc[...] = xproj.reshape(T, Bp, 4 * Hp)

    # Weights / biases read (and bias broadcast hoisted) once, outside the loop.
    whh0 = whh0_ref[...]
    wih1 = wih1_ref[...]
    whh1 = whh1_ref[...]
    b1 = jnp.broadcast_to(b1_ref[...], (Bp, 4 * Hp))
    mdt = whh0.dtype  # MXU operand dtype (f32 or bf16)

    def act(gates, c_prev):
        # Gate order [i, f, o, g]: one sigmoid over 3*Hp lanes + one tanh.
        sig = jax.nn.sigmoid(gates[:, :3 * Hp])
        g = jnp.tanh(gates[:, 3 * Hp:])
        i = sig[:, 0 * Hp:1 * Hp]
        f = sig[:, 1 * Hp:2 * Hp]
        o = sig[:, 2 * Hp:3 * Hp]
        c_new = f * c_prev + i * g            # state math stays f32
        h_new = o * jnp.tanh(c_new)
        return h_new, c_new

    def step(t, carry):
        h0, c0, h1, c1 = carry
        # Layer 0: x-part precomputed; only the recurrent GEMM is serial.
        g0 = xproj_sc[t] + jnp.dot(h0.astype(mdt), whh0,
                                   preferred_element_type=jnp.float32)
        h0, c0 = act(g0, c0)
        # Layer 1: two dots, no concat on the critical path.
        g1 = (jnp.dot(h0.astype(mdt), wih1, preferred_element_type=jnp.float32)
              + jnp.dot(h1.astype(mdt), whh1, preferred_element_type=jnp.float32)
              + b1)
        h1, c1 = act(g1, c1)
        h_all_sc[t] = h1                      # top-layer hidden slab
        return (h0, c0, h1, c1)

    zero = jnp.zeros((Bp, Hp), jnp.float32)
    h0, c0, h1, c1 = jax.lax.fori_loop(
        0, T, step, (zero, zero, zero, zero),
        unroll=(T if T <= 16 else 4))

    # Final states, PyTorch layout (num_layers, batch, hidden).
    hn_ref[0] = h0
    hn_ref[1] = h1
    cn_ref[0] = c0
    cn_ref[1] = c1

    # FC head hoisted out of the recurrence: one batched GEMM over all steps.
    # Output is lane-dense (Op is a multiple of 128).
    h_flat = h_all_sc[...].reshape(T * Bp, Hp)
    pred = jnp.dot(h_flat.astype(wfc_ref.dtype), wfc_ref[...],
                   preferred_element_type=jnp.float32) + bfc_ref[...]
    pred_ref[...] = pred.reshape(T, Bp, -1).astype(pred_ref.dtype)


def lstm_drag_predictor(x, params, matmul_dtype=jnp.bfloat16):
    """x: (T, B, D) float32.  Returns (predictions, (h_n, c_n)).

    matmul_dtype: dtype of MXU operands (weights + matmul inputs + x slab).
    bf16 is the default on all TPU generations (MXU takes bf16 natively);
    accumulation and all elementwise/state math stay f32.  Pass jnp.float32
    for a bit-tight match to the f32 reference.
    """
    T, B, D = x.shape
    H = params["whh0"].shape[0]          # whh0 is (H, 4H)
    O = params["wfc"].shape[1]           # wfc is (H, O)
    L = 2

    Bp = _round_up(B, 8)                 # sublane multiple
    Dp = _round_up(D, 128)               # lane multiple
    Hp = _round_up(H, 128)               # lane multiple -> aligned gate slices
    Op = _round_up(O, 128)               # lane-dense FC output

    # ---- Prepare padded / permuted operands (wrapper-side, cheap) ----
    Wih0 = _pad_gates_w(params["wih0"], D, Dp, H, Hp, matmul_dtype)
    Whh0 = _pad_gates_w(params["whh0"], H, Hp, H, Hp, matmul_dtype)
    Wih1 = _pad_gates_w(params["wih1"], H, Hp, H, Hp, matmul_dtype)
    Whh1 = _pad_gates_w(params["whh1"], H, Hp, H, Hp, matmul_dtype)
    b0p = _pad_gates_b(params["b0"], H, Hp)
    b1p = _pad_gates_b(params["b1"], H, Hp)
    wfc_p = jnp.zeros((Hp, Op), jnp.float32).at[:H, :O].set(params["wfc"])
    wfc_p = wfc_p.astype(matmul_dtype)
    bfc_p = jnp.zeros((1, Op), jnp.float32).at[:, :O].set(params["bfc"])

    x_p = jnp.zeros((T, Bp, Dp), matmul_dtype).at[:, :B, :D].set(
        x.astype(matmul_dtype))

    # ---- VMEM budget (whole-slab design) + size guard ----
    isz = jnp.dtype(matmul_dtype).itemsize
    est = (T * Bp * Dp * isz                       # x slab
           + (Dp + 3 * Hp) * 4 * Hp * isz          # 4 LSTM weight matrices
           + Hp * Op * isz                         # fc weight
           + (2 * 4 * Hp + Op) * 4                 # biases (f32)
           + T * Bp * 4 * Hp * 4                   # xproj scratch
           + T * Bp * Hp * 4                       # h_all scratch
           + T * Bp * Op * 4                       # pred out
           + 2 * L * Bp * Hp * 4)                  # hn, cn out
    if est > (48 << 20):
        # TODO(synk): add a time-chunk grid (carry h/c via aliased outputs) to
        # stream x / h_all once T*B outgrows v7x's 64 MiB VMEM per TensorCore.
        raise ValueError("LSTM slab (%d MiB) exceeds single-shot VMEM budget" %
                         (est >> 20))
    vmem_limit = int(min(max(2 * est, 32 << 20), 64 << 20))

    vmem = lambda: pl.BlockSpec(memory_space=pltpu.MemorySpace.VMEM)

    pred_p, hn_p, cn_p = pl.pallas_call(
        _lstm_kernel,
        out_shape=(
            jax.ShapeDtypeStruct((T, Bp, Op), jnp.float32),
            jax.ShapeDtypeStruct((L, Bp, Hp), jnp.float32),
            jax.ShapeDtypeStruct((L, Bp, Hp), jnp.float32),
        ),
        in_specs=[vmem() for _ in range(9)],
        out_specs=(vmem(), vmem(), vmem()),
        scratch_shapes=[
            pltpu.VMEM((T, Bp, 4 * Hp), jnp.float32),   # hoisted x-projection
            pltpu.VMEM((T, Bp, Hp), jnp.float32),       # top-layer hidden slab
        ],
        compiler_params=pltpu.CompilerParams(vmem_limit_bytes=vmem_limit),
    )(x_p, Wih0, Whh0, b0p, Wih1, Whh1, b1p, wfc_p, bfc_p)

    # Strip padding.
    predictions = pred_p[:, :B, :O]
    h_n = hn_p[:, :B, :H]
    c_n = cn_p[:, :B, :H]
    return predictions, (h_n, c_n)


def init_params(key, input_size, hidden_size, output_size):
    """Deterministic init mimicking PyTorch's U(-1/sqrt(H), 1/sqrt(H))."""
    H = hidden_size
    k = 1.0 / jnp.sqrt(jnp.float32(H))
    keys = jax.random.split(key, 10)

    def u(kk, shape):
        return jax.random.uniform(kk, shape, jnp.float32, minval=-k, maxval=k)

    # PyTorch stores W_ih as (4H, in); we pre-transpose to (in, 4H) for x @ W.
    wih0 = u(keys[0], (4 * H, input_size)).T
    whh0 = u(keys[1], (4 * H, H)).T
    b0 = (u(keys[2], (4 * H,)) + u(keys[3], (4 * H,))).reshape(1, 4 * H)  # b_ih + b_hh
    wih1 = u(keys[4], (4 * H, H)).T
    whh1 = u(keys[5], (4 * H, H)).T
    b1 = (u(keys[6], (4 * H,)) + u(keys[7], (4 * H,))).reshape(1, 4 * H)
    wfc = u(keys[8], (output_size, H)).T
    bfc = u(keys[9], (output_size,)).reshape(1, output_size)
    return {
        "wih0": jnp.asarray(wih0), "whh0": jnp.asarray(whh0), "b0": b0,
        "wih1": jnp.asarray(wih1), "whh1": jnp.asarray(whh1), "b1": b1,
        "wfc": jnp.asarray(wfc), "bfc": bfc,
    }


def reference_lstm(x, params):
    """Pure-JAX reference with identical semantics (for verification)."""
    T, B, D = x.shape
    H = params["whh0"].shape[0]

    def cell(x_in, h_prev, c_prev, wih, whh, b):
        gates = x_in @ wih + h_prev @ whh + b
        i = jax.nn.sigmoid(gates[:, 0 * H:1 * H])
        f = jax.nn.sigmoid(gates[:, 1 * H:2 * H])
        g = jnp.tanh(gates[:, 2 * H:3 * H])
        o = jax.nn.sigmoid(gates[:, 3 * H:4 * H])
        c_new = f * c_prev + i * g
        h_new = o * jnp.tanh(c_new)
        return h_new, c_new

    def step(carry, x_t):
        (h0, c0, h1, c1) = carry
        h0, c0 = cell(x_t, h0, c0, params["wih0"], params["whh0"], params["b0"])
        h1, c1 = cell(h0, h1, c1, params["wih1"], params["whh1"], params["b1"])
        pred = h1 @ params["wfc"] + params["bfc"]
        return (h0, c0, h1, c1), pred

    z = jnp.zeros((B, H), jnp.float32)
    (h0, c0, h1, c1), preds = jax.lax.scan(step, (z, z, z, z), x)
    h_n = jnp.stack([h0, h1], axis=0)
    c_n = jnp.stack([c0, c1], axis=0)
    return preds, (h_n, c_n)


if __name__ == "__main__":
    # Module defaults: input_size=128, hidden_size=64, num_layers=2, output_size=1
    T, B, D, H, O = 8, 4, 128, 64, 1

    key = jax.random.PRNGKey(0)
    k_x, k_p = jax.random.split(key)
    x = jax.random.normal(k_x, (T, B, D), jnp.float32)
    params = init_params(k_p, D, H, O)

    run = jax.jit(lstm_drag_predictor, static_argnames=("matmul_dtype",))
    pred_ref, (h_ref, c_ref) = reference_lstm(x, params)

    # f32 MXU-operand path — tight check against the pure-JAX reference.
    pred, (h_n, c_n) = run(x, params, matmul_dtype=jnp.float32)
    jax.block_until_ready((pred, h_n, c_n))
    assert pred.shape == (T, B, O) and h_n.shape == (2, B, H) and c_n.shape == (2, B, H)
    assert jnp.allclose(pred, pred_ref, atol=1e-5, rtol=1e-5)
    assert jnp.allclose(h_n, h_ref, atol=1e-5, rtol=1e-5)
    assert jnp.allclose(c_n, c_ref, atol=1e-5, rtol=1e-5)

    # Default bf16 MXU-operand path — loose check only (rounding compounds over T).
    pred_bf, (h_bf, c_bf) = run(x, params)
    jax.block_until_ready((pred_bf, h_bf, c_bf))
    assert pred_bf.shape == (T, B, O)
    assert jnp.max(jnp.abs(pred_bf - pred_ref)) < 0.1
    assert jnp.max(jnp.abs(h_bf - h_ref)) < 0.1

    print("KERNEL_OK")
</pallas_src>

<mosaic_0001>
module attributes {stable_mosaic.version = 11 : i64} {
  func.func @_lstm_kernel(%arg0: memref<8x8x128xf32, #tpu.memory_space<vmem>>, %arg1: memref<128x512xf32, #tpu.memory_space<vmem>>, %arg2: memref<128x512xf32, #tpu.memory_space<vmem>>, %arg3: memref<1x512xf32, #tpu.memory_space<vmem>>, %arg4: memref<128x512xf32, #tpu.memory_space<vmem>>, %arg5: memref<128x512xf32, #tpu.memory_space<vmem>>, %arg6: memref<1x512xf32, #tpu.memory_space<vmem>>, %arg7: memref<128x128xf32, #tpu.memory_space<vmem>>, %arg8: memref<1x128xf32, #tpu.memory_space<vmem>>, %arg9: memref<8x8x128xf32, #tpu.memory_space<vmem>>, %arg10: memref<2x8x128xf32, #tpu.memory_space<vmem>>, %arg11: memref<2x8x128xf32, #tpu.memory_space<vmem>>, %arg12: memref<8x8x512xf32, #tpu.memory_space<vmem>>, %arg13: memref<8x8x128xf32, #tpu.memory_space<vmem>>) attributes {dimension_semantics = [], scalar_prefetch = 0 : i64, scratch_operands = 2 : i64, tpu.core_type = #tpu.core_type<tc>} {
    %c0 = arith.constant 0 : index
    %c0_0 = arith.constant 0 : index
    %c0_1 = arith.constant 0 : index
    %0 = vector.load %arg0[%c0, %c0_0, %c0_1] : memref<8x8x128xf32, #tpu.memory_space<vmem>>, vector<8x8x128xf32>
    %1 = vector.shape_cast %0 : vector<8x8x128xf32> to vector<64x128xf32>
    %c0_2 = arith.constant 0 : index
    %c0_3 = arith.constant 0 : index
    %2 = vector.load %arg1[%c0_2, %c0_3] : memref<128x512xf32, #tpu.memory_space<vmem>>, vector<128x512xf32>
    %cst = arith.constant dense<0.000000e+00> : vector<64x512xf32>
    %3 = tpu.matmul %1, %2, %cst {dimension_numbers = #tpu.dot_dimension_numbers<[1], [0], [0], [1], [0, 0, 1, 1], [], []>} : vector<64x128xf32>, vector<128x512xf32>, vector<64x512xf32> -> vector<64x512xf32>
    %c0_4 = arith.constant 0 : index
    %c0_5 = arith.constant 0 : index
    %4 = vector.load %arg3[%c0_4, %c0_5] : memref<1x512xf32, #tpu.memory_space<vmem>>, vector<1x512xf32>
    %5 = vector.broadcast %4 : vector<1x512xf32> to vector<64x512xf32>
    %6 = arith.addf %3, %5 : vector<64x512xf32>
    %7 = vector.shape_cast %6 : vector<64x512xf32> to vector<8x8x512xf32>
    %c0_6 = arith.constant 0 : index
    %c0_7 = arith.constant 0 : index
    %c0_8 = arith.constant 0 : index
    %8 = vector.load %arg12[%c0_6, %c0_7, %c0_8] : memref<8x8x512xf32, #tpu.memory_space<vmem>>, vector<8x8x512xf32>
    tpu.vector_store %arg12[%c0_6, %c0_7, %c0_8], %7 {strides = array<i32>} : memref<8x8x512xf32, #tpu.memory_space<vmem>>, vector<8x8x512xf32>,
    %c0_9 = arith.constant 0 : index
    %c0_10 = arith.constant 0 : index
    %9 = vector.load %arg2[%c0_9, %c0_10] : memref<128x512xf32, #tpu.memory_space<vmem>>, vector<128x512xf32>
    %c0_11 = arith.constant 0 : index
    %c0_12 = arith.constant 0 : index
    %10 = vector.load %arg4[%c0_11, %c0_12] : memref<128x512xf32, #tpu.memory_space<vmem>>, vector<128x512xf32>
    %c0_13 = arith.constant 0 : index
    %c0_14 = arith.constant 0 : index
    %11 = vector.load %arg5[%c0_13, %c0_14] : memref<128x512xf32, #tpu.memory_space<vmem>>, vector<128x512xf32>
    %c0_15 = arith.constant 0 : index
    %c0_16 = arith.constant 0 : index
    %12 = vector.load %arg6[%c0_15, %c0_16] : memref<1x512xf32, #tpu.memory_space<vmem>>, vector<1x512xf32>
    %13 = vector.shape_cast %12 : vector<1x512xf32> to vector<1x512xf32>
    %14 = vector.broadcast %13 : vector<1x512xf32> to vector<8x512xf32>
    %cst_17 = arith.constant 0.000000e+00 : f32
    %15 = vector.broadcast %cst_17 : f32 to vector<8x128xf32>
    %c0_i32 = arith.constant 0 : i32
    %16 = arith.index_cast %c0_i32 : i32 to index
    %c0_18 = arith.constant 0 : index
    %c0_19 = arith.constant 0 : index
    %17 = vector.load %arg12[%16, %c0_18, %c0_19] : memref<8x8x512xf32, #tpu.memory_space<vmem>>, vector<1x8x512xf32>
    %18 = vector.shape_cast %17 : vector<1x8x512xf32> to vector<8x512xf32>
    %cst_20 = arith.constant dense<0.000000e+00> : vector<8x512xf32>
    %19 = tpu.matmul %15, %9, %cst_20 {dimension_numbers = #tpu.dot_dimension_numbers<[1], [0], [0], [1], [0, 0, 1, 1], [], []>} : vector<8x128xf32>, vector<128x512xf32>, vector<8x512xf32> -> vector<8x512xf32>
    %20 = arith.addf %18, %19 : vector<8x512xf32>
    %21 = vector.extract_strided_slice %20 {offsets = [0, 0], sizes = [8, 384], strides = [1, 1]} : vector<8x512xf32> to vector<8x384xf32>
    %22 = arith.negf %21 : vector<8x384xf32>
    %23 = math.exp %22 : vector<8x384xf32>
    %cst_21 = arith.constant 1.000000e+00 : f32
    %24 = vector.broadcast %cst_21 : f32 to vector<8x384xf32>
    %25 = arith.addf %24, %23 : vector<8x384xf32>
    %26 = arith.divf %24, %25 : vector<8x384xf32>
    %27 = vector.extract_strided_slice %20 {offsets = [0, 384], sizes = [8, 128], strides = [1, 1]} : vector<8x512xf32> to vector<8x128xf32>
    %28 = math.tanh %27 : vector<8x128xf32>
    %29 = vector.extract_strided_slice %26 {offsets = [0, 0], sizes = [8, 128], strides = [1, 1]} : vector<8x384xf32> to vector<8x128xf32>
    %30 = vector.extract_strided_slice %26 {offsets = [0, 128], sizes = [8, 128], strides = [1, 1]} : vector<8x384xf32> to vector<8x128xf32>
    %31 = vector.extract_strided_slice %26 {offsets = [0, 256], sizes = [8, 128], strides = [1, 1]} : vector<8x384xf32> to vector<8x128xf32>
    %32 = arith.mulf %30, %15 : vector<8x128xf32>
    %33 = arith.mulf %29, %28 : vector<8x128xf32>
    %34 = arith.addf %32, %33 : vector<8x128xf32>
    %35 = math.tanh %34 : vector<8x128xf32>
    %36 = arith.mulf %31, %35 : vector<8x128xf32>
    %cst_22 = arith.constant dense<0.000000e+00> : vector<8x512xf32>
    %37 = tpu.matmul %36, %10, %cst_22 {dimension_numbers = #tpu.dot_dimension_numbers<[1], [0], [0], [1], [0, 0, 1, 1], [], []>} : vector<8x128xf32>, vector<128x512xf32>, vector<8x512xf32> -> vector<8x512xf32>
    %cst_23 = arith.constant dense<0.000000e+00> : vector<8x512xf32>
    %38 = tpu.matmul %15, %11, %cst_23 {dimension_numbers = #tpu.dot_dimension_numbers<[1], [0], [0], [1], [0, 0, 1, 1], [], []>} : vector<8x128xf32>, vector<128x512xf32>, vector<8x512xf32> -> vector<8x512xf32>
    %39 = arith.addf %37, %38 : vector<8x512xf32>
    %40 = arith.addf %39, %14 : vector<8x512xf32>
    %41 = vector.extract_strided_slice %40 {offsets = [0, 0], sizes = [8, 384], strides = [1, 1]} : vector<8x512xf32> to vector<8x384xf32>
    %42 = arith.negf %41 : vector<8x384xf32>
    %43 = math.exp %42 : vector<8x384xf32>
    %cst_24 = arith.constant 1.000000e+00 : f32
    %44 = vector.broadcast %cst_24 : f32 to vector<8x384xf32>
    %45 = arith.addf %44, %43 : vector<8x384xf32>
    %46 = arith.divf %44, %45 : vector<8x384xf32>
    %47 = vector.extract_strided_slice %40 {offsets = [0, 384], sizes = [8, 128], strides = [1, 1]} : vector<8x512xf32> to vector<8x128xf32>
    %48 = math.tanh %47 : vector<8x128xf32>
    %49 = vector.extract_strided_slice %46 {offsets = [0, 0], sizes = [8, 128], strides = [1, 1]} : vector<8x384xf32> to vector<8x128xf32>
    %50 = vector.extract_strided_slice %46 {offsets = [0, 128], sizes = [8, 128], strides = [1, 1]} : vector<8x384xf32> to vector<8x128xf32>
    %51 = vector.extract_strided_slice %46 {offsets = [0, 256], sizes = [8, 128], strides = [1, 1]} : vector<8x384xf32> to vector<8x128xf32>
    %52 = arith.mulf %50, %15 : vector<8x128xf32>
    %53 = arith.mulf %49, %48 : vector<8x128xf32>
    %54 = arith.addf %52, %53 : vector<8x128xf32>
    %55 = math.tanh %54 : vector<8x128xf32>
    %56 = arith.mulf %51, %55 : vector<8x128xf32>
    %57 = arith.index_cast %c0_i32 : i32 to index
    %c0_25 = arith.constant 0 : index
    %c0_26 = arith.constant 0 : index
    %58 = vector.load %arg13[%57, %c0_25, %c0_26] : memref<8x8x128xf32, #tpu.memory_space<vmem>>, vector<1x8x128xf32>
    %59 = vector.shape_cast %58 : vector<1x8x128xf32> to vector<8x128xf32>
    %60 = vector.shape_cast %56 : vector<8x128xf32> to vector<1x8x128xf32>
    tpu.vector_store %arg13[%57, %c0_25, %c0_26], %60 {strides = array<i32>} : memref<8x8x128xf32, #tpu.memory_space<vmem>>, vector<1x8x128xf32>,
    %c1_i32 = arith.constant 1 : i32
    %61 = arith.index_cast %c1_i32 : i32 to index
    %c0_27 = arith.constant 0 : index
    %c0_28 = arith.constant 0 : index
    %62 = vector.load %arg12[%61, %c0_27, %c0_28] : memref<8x8x512xf32, #tpu.memory_space<vmem>>, vector<1x8x512xf32>
    %63 = vector.shape_cast %62 : vector<1x8x512xf32> to vector<8x512xf32>
    %cst_29 = arith.constant dense<0.000000e+00> : vector<8x512xf32>
    %64 = tpu.matmul %36, %9, %cst_29 {dimension_numbers = #tpu.dot_dimension_numbers<[1], [0], [0], [1], [0, 0, 1, 1], [], []>} : vector<8x128xf32>, vector<128x512xf32>, vector<8x512xf32> -> vector<8x512xf32>
    %65 = arith.addf %63, %64 : vector<8x512xf32>
    %66 = vector.extract_strided_slice %65 {offsets = [0, 0], sizes = [8, 384], strides = [1, 1]} : vector<8x512xf32> to vector<8x384xf32>
    %67 = arith.negf %66 : vector<8x384xf32>
    %68 = math.exp %67 : vector<8x384xf32>
    %cst_30 = arith.constant 1.000000e+00 : f32
    %69 = vector.broadcast %cst_30 : f32 to vector<8x384xf32>
    %70 = arith.addf %69, %68 : vector<8x384xf32>
    %71 = arith.divf %69, %70 : vector<8x384xf32>
    %72 = vector.extract_strided_slice %65 {offsets = [0, 384], sizes = [8, 128], strides = [1, 1]} : vector<8x512xf32> to vector<8x128xf32>
    %73 = math.tanh %72 : vector<8x128xf32>
    %74 = vector.extract_strided_slice %71 {offsets = [0, 0], sizes = [8, 128], strides = [1, 1]} : vector<8x384xf32> to vector<8x128xf32>
    %75 = vector.extract_strided_slice %71 {offsets = [0, 128], sizes = [8, 128], strides = [1, 1]} : vector<8x384xf32> to vector<8x128xf32>
    %76 = vector.extract_strided_slice %71 {offsets = [0, 256], sizes = [8, 128], strides = [1, 1]} : vector<8x384xf32> to vector<8x128xf32>
    %77 = arith.mulf %75, %34 : vector<8x128xf32>
    %78 = arith.mulf %74, %73 : vector<8x128xf32>
    %79 = arith.addf %77, %78 : vector<8x128xf32>
    %80 = math.tanh %79 : vector<8x128xf32>
    %81 = arith.mulf %76, %80 : vector<8x128xf32>
    %cst_31 = arith.constant dense<0.000000e+00> : vector<8x512xf32>
    %82 = tpu.matmul %81, %10, %cst_31 {dimension_numbers = #tpu.dot_dimension_numbers<[1], [0], [0], [1], [0, 0, 1, 1], [], []>} : vector<8x128xf32>, vector<128x512xf32>, vector<8x512xf32> -> vector<8x512xf32>
    %cst_32 = arith.constant dense<0.000000e+00> : vector<8x512xf32>
    %83 = tpu.matmul %56, %11, %cst_32 {dimension_numbers = #tpu.dot_dimension_numbers<[1], [0], [0], [1], [0, 0, 1, 1], [], []>} : vector<8x128xf32>, vector<128x512xf32>, vector<8x512xf32> -> vector<8x512xf32>
    %84 = arith.addf %82, %83 : vector<8x512xf32>
    %85 = arith.addf %84, %14 : vector<8x512xf32>
    %86 = vector.extract_strided_slice %85 {offsets = [0, 0], sizes = [8, 384], strides = [1, 1]} : vector<8x512xf32> to vector<8x384xf32>
    %87 = arith.negf %86 : vector<8x384xf32>
    %88 = math.exp %87 : vector<8x384xf32>
    %cst_33 = arith.constant 1.000000e+00 : f32
    %89 = vector.broadcast %cst_33 : f32 to vector<8x384xf32>
    %90 = arith.addf %89, %88 : vector<8x384xf32>
    %91 = arith.divf %89, %90 : vector<8x384xf32>
    %92 = vector.extract_strided_slice %85 {offsets = [0, 384], sizes = [8, 128], strides = [1, 1]} : vector<8x512xf32> to vector<8x128xf32>
    %93 = math.tanh %92 : vector<8x128xf32>
    %94 = vector.extract_strided_slice %91 {offsets = [0, 0], sizes = [8, 128], strides = [1, 1]} : vector<8x384xf32> to vector<8x128xf32>
    %95 = vector.extract_strided_slice %91 {offsets = [0, 128], sizes = [8, 128], strides = [1, 1]} : vector<8x384xf32> to vector<8x128xf32>
    %96 = vector.extract_strided_slice %91 {offsets = [0, 256], sizes = [8, 128], strides = [1, 1]} : vector<8x384xf32> to vector<8x128xf32>
    %97 = arith.mulf %95, %54 : vector<8x128xf32>
    %98 = arith.mulf %94, %93 : vector<8x128xf32>
    %99 = arith.addf %97, %98 : vector<8x128xf32>
    %100 = math.tanh %99 : vector<8x128xf32>
    %101 = arith.mulf %96, %100 : vector<8x128xf32>
    %102 = arith.index_cast %c1_i32 : i32 to index
    %c0_34 = arith.constant 0 : index
    %c0_35 = arith.constant 0 : index
    %103 = vector.load %arg13[%102, %c0_34, %c0_35] : memref<8x8x128xf32, #tpu.memory_space<vmem>>, vector<1x8x128xf32>
    %104 = vector.shape_cast %103 : vector<1x8x128xf32> to vector<8x128xf32>
    %105 = vector.shape_cast %101 : vector<8x128xf32> to vector<1x8x128xf32>
    tpu.vector_store %arg13[%102, %c0_34, %c0_35], %105 {strides = array<i32>} : memref<8x8x128xf32, #tpu.memory_space<vmem>>, vector<1x8x128xf32>,
    %c2_i32 = arith.constant 2 : i32
    %106 = arith.index_cast %c2_i32 : i32 to index
    %c0_36 = arith.constant 0 : index
    %c0_37 = arith.constant 0 : index
    %107 = vector.load %arg12[%106, %c0_36, %c0_37] : memref<8x8x512xf32, #tpu.memory_space<vmem>>, vector<1x8x512xf32>
    %108 = vector.shape_cast %107 : vector<1x8x512xf32> to vector<8x512xf32>
    %cst_38 = arith.constant dense<0.000000e+00> : vector<8x512xf32>
    %109 = tpu.matmul %81, %9, %cst_38 {dimension_numbers = #tpu.dot_dimension_numbers<[1], [0], [0], [1], [0, 0, 1, 1], [], []>} : vector<8x128xf32>, vector<128x512xf32>, vector<8x512xf32> -> vector<8x512xf32>
    %110 = arith.addf %108, %109 : vector<8x512xf32>
    %111 = vector.extract_strided_slice %110 {offsets = [0, 0], sizes = [8, 384], strides = [1, 1]} : vector<8x512xf32> to vector<8x384xf32>
    %112 = arith.negf %111 : vector<8x384xf32>
    %113 = math.exp %112 : vector<8x384xf32>
    %cst_39 = arith.constant 1.000000e+00 : f32
    %114 = vector.broadcast %cst_39 : f32 to vector<8x384xf32>
    %115 = arith.addf %114, %113 : vector<8x384xf32>
    %116 = arith.divf %114, %115 : vector<8x384xf32>
    %117 = vector.extract_strided_slice %110 {offsets = [0, 384], sizes = [8, 128], strides = [1, 1]} : vector<8x512xf32> to vector<8x128xf32>
    %118 = math.tanh %117 : vector<8x128xf32>
    %119 = vector.extract_strided_slice %116 {offsets = [0, 0], sizes = [8, 128], strides = [1, 1]} : vector<8x384xf32> to vector<8x128xf32>
    %120 = vector.extract_strided_slice %116 {offsets = [0, 128], sizes = [8, 128], strides = [1, 1]} : vector<8x384xf32> to vector<8x128xf32>
    %121 = vector.extract_strided_slice %116 {offsets = [0, 256], sizes = [8, 128], strides = [1, 1]} : vector<8x384xf32> to vector<8x128xf32>
    %122 = arith.mulf %120, %79 : vector<8x128xf32>
    %123 = arith.mulf %119, %118 : vector<8x128xf32>
    %124 = arith.addf %122, %123 : vector<8x128xf32>
    %125 = math.tanh %124 : vector<8x128xf32>
    %126 = arith.mulf %121, %125 : vector<8x128xf32>
    %cst_40 = arith.constant dense<0.000000e+00> : vector<8x512xf32>
    %127 = tpu.matmul %126, %10, %cst_40 {dimension_numbers = #tpu.dot_dimension_numbers<[1], [0], [0], [1], [0, 0, 1, 1], [], []>} : vector<8x128xf32>, vector<128x512xf32>, vector<8x512xf32> -> vector<8x512xf32>
    %cst_41 = arith.constant dense<0.000000e+00> : vector<8x512xf32>
    %128 = tpu.matmul %101, %11, %cst_41 {dimension_numbers = #tpu.dot_dimension_numbers<[1], [0], [0], [1], [0, 0, 1, 1], [], []>} : vector<8x128xf32>, vector<128x512xf32>, vector<8x512xf32> -> vector<8x512xf32>
    %129 = arith.addf %127, %128 : vector<8x512xf32>
    %130 = arith.addf %129, %14 : vector<8x512xf32>
    %131 = vector.extract_strided_slice %130 {offsets = [0, 0], sizes = [8, 384], strides = [1, 1]} : vector<8x512xf32> to vector<8x384xf32>
    %132 = arith.negf %131 : vector<8x384xf32>
    %133 = math.exp %132 : vector<8x384xf32>
    %cst_42 = arith.constant 1.000000e+00 : f32
    %134 = vector.broadcast %cst_42 : f32 to vector<8x384xf32>
    %135 = arith.addf %134, %133 : vector<8x384xf32>
    %136 = arith.divf %134, %135 : vector<8x384xf32>
    %137 = vector.extract_strided_slice %130 {offsets = [0, 384], sizes = [8, 128], strides = [1, 1]} : vector<8x512xf32> to vector<8x128xf32>
    %138 = math.tanh %137 : vector<8x128xf32>
    %139 = vector.extract_strided_slice %136 {offsets = [0, 0], sizes = [8, 128], strides = [1, 1]} : vector<8x384xf32> to vector<8x128xf32>
    %140 = vector.extract_strided_slice %136 {offsets = [0, 128], sizes = [8, 128], strides = [1, 1]} : vector<8x384xf32> to vector<8x128xf32>
    %141 = vector.extract_strided_slice %136 {offsets = [0, 256], sizes = [8, 128], strides = [1, 1]} : vector<8x384xf32> to vector<8x128xf32>
    %142 = arith.mulf %140, %99 : vector<8x128xf32>
    %143 = arith.mulf %139, %138 : vector<8x128xf32>
    %144 = arith.addf %142, %143 : vector<8x128xf32>
    %145 = math.tanh %144 : vector<8x128xf32>
    %146 = arith.mulf %141, %145 : vector<8x128xf32>
    %147 = arith.index_cast %c2_i32 : i32 to index
    %c0_43 = arith.constant 0 : index
    %c0_44 = arith.constant 0 : index
    %148 = vector.load %arg13[%147, %c0_43, %c0_44] : memref<8x8x128xf32, #tpu.memory_space<vmem>>, vector<1x8x128xf32>
    %149 = vector.shape_cast %148 : vector<1x8x128xf32> to vector<8x128xf32>
    %150 = vector.shape_cast %146 : vector<8x128xf32> to vector<1x8x128xf32>
    tpu.vector_store %arg13[%147, %c0_43, %c0_44], %150 {strides = array<i32>} : memref<8x8x128xf32, #tpu.memory_space<vmem>>, vector<1x8x128xf32>,
    %c3_i32 = arith.constant 3 : i32
    %151 = arith.index_cast %c3_i32 : i32 to index
    %c0_45 = arith.constant 0 : index
    %c0_46 = arith.constant 0 : index
    %152 = vector.load %arg12[%151, %c0_45, %c0_46] : memref<8x8x512xf32, #tpu.memory_space<vmem>>, vector<1x8x512xf32>
    %153 = vector.shape_cast %152 : vector<1x8x512xf32> to vector<8x512xf32>
    %cst_47 = arith.constant dense<0.000000e+00> : vector<8x512xf32>
    %154 = tpu.matmul %126, %9, %cst_47 {dimension_numbers = #tpu.dot_dimension_numbers<[1], [0], [0], [1], [0, 0, 1, 1], [], []>} : vector<8x128xf32>, vector<128x512xf32>, vector<8x512xf32> -> vector<8x512xf32>
    %155 = arith.addf %153, %154 : vector<8x512xf32>
    %156 = vector.extract_strided_slice %155 {offsets = [0, 0], sizes = [8, 384], strides = [1, 1]} : vector<8x512xf32> to vector<8x384xf32>
    %157 = arith.negf %156 : vector<8x384xf32>
    %158 = math.exp %157 : vector<8x384xf32>
    %cst_48 = arith.constant 1.000000e+00 : f32
    %159 = vector.broadcast %cst_48 : f32 to vector<8x384xf32>
    %160 = arith.addf %159, %158 : vector<8x384xf32>
    %161 = arith.divf %159, %160 : vector<8x384xf32>
    %162 = vector.extract_strided_slice %155 {offsets = [0, 384], sizes = [8, 128], strides = [1, 1]} : vector<8x512xf32> to vector<8x128xf32>
    %163 = math.tanh %162 : vector<8x128xf32>
    %164 = vector.extract_strided_slice %161 {offsets = [0, 0], sizes = [8, 128], strides = [1, 1]} : vector<8x384xf32> to vector<8x128xf32>
    %165 = vector.extract_strided_slice %161 {offsets = [0, 128], sizes = [8, 128], strides = [1, 1]} : vector<8x384xf32> to vector<8x128xf32>
    %166 = vector.extract_strided_slice %161 {offsets = [0, 256], sizes = [8, 128], strides = [1, 1]} : vector<8x384xf32> to vector<8x128xf32>
    %167 = arith.mulf %165, %124 : vector<8x128xf32>
    %168 = arith.mulf %164, %163 : vector<8x128xf32>
    %169 = arith.addf %167, %168 : vector<8x128xf32>
    %170 = math.tanh %169 : vector<8x128xf32>
    %171 = arith.mulf %166, %170 : vector<8x128xf32>
    %cst_49 = arith.constant dense<0.000000e+00> : vector<8x512xf32>
    %172 = tpu.matmul %171, %10, %cst_49 {dimension_numbers = #tpu.dot_dimension_numbers<[1], [0], [0], [1], [0, 0, 1, 1], [], []>} : vector<8x128xf32>, vector<128x512xf32>, vector<8x512xf32> -> vector<8x512xf32>
    %cst_50 = arith.constant dense<0.000000e+00> : vector<8x512xf32>
    %173 = tpu.matmul %146, %11, %cst_50 {dimension_numbers = #tpu.dot_dimension_numbers<[1], [0], [0], [1], [0, 0, 1, 1], [], []>} : vector<8x128xf32>, vector<128x512xf32>, vector<8x512xf32> -> vector<8x512xf32>
    %174 = arith.addf %172, %173 : vector<8x512xf32>
    %175 = arith.addf %174, %14 : vector<8x512xf32>
    %176 = vector.extract_strided_slice %175 {offsets = [0, 0], sizes = [8, 384], strides = [1, 1]} : vector<8x512xf32> to vector<8x384xf32>
    %177 = arith.negf %176 : vector<8x384xf32>
    %178 = math.exp %177 : vector<8x384xf32>
    %cst_51 = arith.constant 1.000000e+00 : f32
    %179 = vector.broadcast %cst_51 : f32 to vector<8x384xf32>
    %180 = arith.addf %179, %178 : vector<8x384xf32>
    %181 = arith.divf %179, %180 : vector<8x384xf32>
    %182 = vector.extract_strided_slice %175 {offsets = [0, 384], sizes = [8, 128], strides = [1, 1]} : vector<8x512xf32> to vector<8x128xf32>
    %183 = math.tanh %182 : vector<8x128xf32>
    %184 = vector.extract_strided_slice %181 {offsets = [0, 0], sizes = [8, 128], strides = [1, 1]} : vector<8x384xf32> to vector<8x128xf32>
    %185 = vector.extract_strided_slice %181 {offsets = [0, 128], sizes = [8, 128], strides = [1, 1]} : vector<8x384xf32> to vector<8x128xf32>
    %186 = vector.extract_strided_slice %181 {offsets = [0, 256], sizes = [8, 128], strides = [1, 1]} : vector<8x384xf32> to vector<8x128xf32>
    %187 = arith.mulf %185, %144 : vector<8x128xf32>
    %188 = arith.mulf %184, %183 : vector<8x128xf32>
    %189 = arith.addf %187, %188 : vector<8x128xf32>
    %190 = math.tanh %189 : vector<8x128xf32>
    %191 = arith.mulf %186, %190 : vector<8x128xf32>
    %192 = arith.index_cast %c3_i32 : i32 to index
    %c0_52 = arith.constant 0 : index
    %c0_53 = arith.constant 0 : index
    %193 = vector.load %arg13[%192, %c0_52, %c0_53] : memref<8x8x128xf32, #tpu.memory_space<vmem>>, vector<1x8x128xf32>
    %194 = vector.shape_cast %193 : vector<1x8x128xf32> to vector<8x128xf32>
    %195 = vector.shape_cast %191 : vector<8x128xf32> to vector<1x8x128xf32>
    tpu.vector_store %arg13[%192, %c0_52, %c0_53], %195 {strides = array<i32>} : memref<8x8x128xf32, #tpu.memory_space<vmem>>, vector<1x8x128xf32>,
    %c4_i32 = arith.constant 4 : i32
    %196 = arith.index_cast %c4_i32 : i32 to index
    %c0_54 = arith.constant 0 : index
    %c0_55 = arith.constant 0 : index
    %197 = vector.load %arg12[%196, %c0_54, %c0_55] : memref<8x8x512xf32, #tpu.memory_space<vmem>>, vector<1x8x512xf32>
    %198 = vector.shape_cast %197 : vector<1x8x512xf32> to vector<8x512xf32>
    %cst_56 = arith.constant dense<0.000000e+00> : vector<8x512xf32>
    %199 = tpu.matmul %171, %9, %cst_56 {dimension_numbers = #tpu.dot_dimension_numbers<[1], [0], [0], [1], [0, 0, 1, 1], [], []>} : vector<8x128xf32>, vector<128x512xf32>, vector<8x512xf32> -> vector<8x512xf32>
    %200 = arith.addf %198, %199 : vector<8x512xf32>
    %201 = vector.extract_strided_slice %200 {offsets = [0, 0], sizes = [8, 384], strides = [1, 1]} : vector<8x512xf32> to vector<8x384xf32>
    %202 = arith.negf %201 : vector<8x384xf32>
    %203 = math.exp %202 : vector<8x384xf32>
    %cst_57 = arith.constant 1.000000e+00 : f32
    %204 = vector.broadcast %cst_57 : f32 to vector<8x384xf32>
    %205 = arith.addf %204, %203 : vector<8x384xf32>
    %206 = arith.divf %204, %205 : vector<8x384xf32>
    %207 = vector.extract_strided_slice %200 {offsets = [0, 384], sizes = [8, 128], strides = [1, 1]} : vector<8x512xf32> to vector<8x128xf32>
    %208 = math.tanh %207 : vector<8x128xf32>
    %209 = vector.extract_strided_slice %206 {offsets = [0, 0], sizes = [8, 128], strides = [1, 1]} : vector<8x384xf32> to vector<8x128xf32>
    %210 = vector.extract_strided_slice %206 {offsets = [0, 128], sizes = [8, 128], strides = [1, 1]} : vector<8x384xf32> to vector<8x128xf32>
    %211 = vector.extract_strided_slice %206 {offsets = [0, 256], sizes = [8, 128], strides = [1, 1]} : vector<8x384xf32> to vector<8x128xf32>
    %212 = arith.mulf %210, %169 : vector<8x128xf32>
    %213 = arith.mulf %209, %208 : vector<8x128xf32>
    %214 = arith.addf %212, %213 : vector<8x128xf32>
    %215 = math.tanh %214 : vector<8x128xf32>
    %216 = arith.mulf %211, %215 : vector<8x128xf32>
    %cst_58 = arith.constant dense<0.000000e+00> : vector<8x512xf32>
    %217 = tpu.matmul %216, %10, %cst_58 {dimension_numbers = #tpu.dot_dimension_numbers<[1], [0], [0], [1], [0, 0, 1, 1], [], []>} : vector<8x128xf32>, vector<128x512xf32>, vector<8x512xf32> -> vector<8x512xf32>
    %cst_59 = arith.constant dense<0.000000e+00> : vector<8x512xf32>
    %218 = tpu.matmul %191, %11, %cst_59 {dimension_numbers = #tpu.dot_dimension_numbers<[1], [0], [0], [1], [0, 0, 1, 1], [], []>} : vector<8x128xf32>, vector<128x512xf32>, vector<8x512xf32> -> vector<8x512xf32>
    %219 = arith.addf %217, %218 : vector<8x512xf32>
    %220 = arith.addf %219, %14 : vector<8x512xf32>
    %221 = vector.extract_strided_slice %220 {offsets = [0, 0], sizes = [8, 384], strides = [1, 1]} : vector<8x512xf32> to vector<8x384xf32>
    %222 = arith.negf %221 : vector<8x384xf32>
    %223 = math.exp %222 : vector<8x384xf32>
    %cst_60 = arith.constant 1.000000e+00 : f32
    %224 = vector.broadcast %cst_60 : f32 to vector<8x384xf32>
    %225 = arith.addf %224, %223 : vector<8x384xf32>
    %226 = arith.divf %224, %225 : vector<8x384xf32>
    %227 = vector.extract_strided_slice %220 {offsets = [0, 384], sizes = [8, 128], strides = [1, 1]} : vector<8x512xf32> to vector<8x128xf32>
    %228 = math.tanh %227 : vector<8x128xf32>
    %229 = vector.extract_strided_slice %226 {offsets = [0, 0], sizes = [8, 128], strides = [1, 1]} : vector<8x384xf32> to vector<8x128xf32>
    %230 = vector.extract_strided_slice %226 {offsets = [0, 128], sizes = [8, 128], strides = [1, 1]} : vector<8x384xf32> to vector<8x128xf32>
    %231 = vector.extract_strided_slice %226 {offsets = [0, 256], sizes = [8, 128], strides = [1, 1]} : vector<8x384xf32> to vector<8x128xf32>
    %232 = arith.mulf %230, %189 : vector<8x128xf32>
    %233 = arith.mulf %229, %228 : vector<8x128xf32>
    %234 = arith.addf %232, %233 : vector<8x128xf32>
    %235 = math.tanh %234 : vector<8x128xf32>
    %236 = arith.mulf %231, %235 : vector<8x128xf32>
    %237 = arith.index_cast %c4_i32 : i32 to index
    %c0_61 = arith.constant 0 : index
    %c0_62 = arith.constant 0 : index
    %238 = vector.load %arg13[%237, %c0_61, %c0_62] : memref<8x8x128xf32, #tpu.memory_space<vmem>>, vector<1x8x128xf32>
    %239 = vector.shape_cast %238 : vector<1x8x128xf32> to vector<8x128xf32>
    %240 = vector.shape_cast %236 : vector<8x128xf32> to vector<1x8x128xf32>
    tpu.vector_store %arg13[%237, %c0_61, %c0_62], %240 {strides = array<i32>} : memref<8x8x128xf32, #tpu.memory_space<vmem>>, vector<1x8x128xf32>,
    %c5_i32 = arith.constant 5 : i32
    %241 = arith.index_cast %c5_i32 : i32 to index
    %c0_63 = arith.constant 0 : index
    %c0_64 = arith.constant 0 : index
    %242 = vector.load %arg12[%241, %c0_63, %c0_64] : memref<8x8x512xf32, #tpu.memory_space<vmem>>, vector<1x8x512xf32>
    %243 = vector.shape_cast %242 : vector<1x8x512xf32> to vector<8x512xf32>
    %cst_65 = arith.constant dense<0.000000e+00> : vector<8x512xf32>
    %244 = tpu.matmul %216, %9, %cst_65 {dimension_numbers = #tpu.dot_dimension_numbers<[1], [0], [0], [1], [0, 0, 1, 1], [], []>} : vector<8x128xf32>, vector<128x512xf32>, vector<8x512xf32> -> vector<8x512xf32>
    %245 = arith.addf %243, %244 : vector<8x512xf32>
    %246 = vector.extract_strided_slice %245 {offsets = [0, 0], sizes = [8, 384], strides = [1, 1]} : vector<8x512xf32> to vector<8x384xf32>
    %247 = arith.negf %246 : vector<8x384xf32>
    %248 = math.exp %247 : vector<8x384xf32>
    %cst_66 = arith.constant 1.000000e+00 : f32
    %249 = vector.broadcast %cst_66 : f32 to vector<8x384xf32>
    %250 = arith.addf %249, %248 : vector<8x384xf32>
    %251 = arith.divf %249, %250 : vector<8x384xf32>
    %252 = vector.extract_strided_slice %245 {offsets = [0, 384], sizes = [8, 128], strides = [1, 1]} : vector<8x512xf32> to vector<8x128xf32>
    %253 = math.tanh %252 : vector<8x128xf32>
    %254 = vector.extract_strided_slice %251 {offsets = [0, 0], sizes = [8, 128], strides = [1, 1]} : vector<8x384xf32> to vector<8x128xf32>
    %255 = vector.extract_strided_slice %251 {offsets = [0, 128], sizes = [8, 128], strides = [1, 1]} : vector<8x384xf32> to vector<8x128xf32>
    %256 = vector.extract_strided_slice %251 {offsets = [0, 256], sizes = [8, 128], strides = [1, 1]} : vector<8x384xf32> to vector<8x128xf32>
    %257 = arith.mulf %255, %214 : vector<8x128xf32>
    %258 = arith.mulf %254, %253 : vector<8x128xf32>
    %259 = arith.addf %257, %258 : vector<8x128xf32>
    %260 = math.tanh %259 : vector<8x128xf32>
    %261 = arith.mulf %256, %260 : vector<8x128xf32>
    %cst_67 = arith.constant dense<0.000000e+00> : vector<8x512xf32>
    %262 = tpu.matmul %261, %10, %cst_67 {dimension_numbers = #tpu.dot_dimension_numbers<[1], [0], [0], [1], [0, 0, 1, 1], [], []>} : vector<8x128xf32>, vector<128x512xf32>, vector<8x512xf32> -> vector<8x512xf32>
    %cst_68 = arith.constant dense<0.000000e+00> : vector<8x512xf32>
    %263 = tpu.matmul %236, %11, %cst_68 {dimension_numbers = #tpu.dot_dimension_numbers<[1], [0], [0], [1], [0, 0, 1, 1], [], []>} : vector<8x128xf32>, vector<128x512xf32>, vector<8x512xf32> -> vector<8x512xf32>
    %264 = arith.addf %262, %263 : vector<8x512xf32>
    %265 = arith.addf %264, %14 : vector<8x512xf32>
    %266 = vector.extract_strided_slice %265 {offsets = [0, 0], sizes = [8, 384], strides = [1, 1]} : vector<8x512xf32> to vector<8x384xf32>
    %267 = arith.negf %266 : vector<8x384xf32>
    %268 = math.exp %267 : vector<8x384xf32>
    %cst_69 = arith.constant 1.000000e+00 : f32
    %269 = vector.broadcast %cst_69 : f32 to vector<8x384xf32>
    %270 = arith.addf %269, %268 : vector<8x384xf32>
    %271 = arith.divf %269, %270 : vector<8x384xf32>
    %272 = vector.extract_strided_slice %265 {offsets = [0, 384], sizes = [8, 128], strides = [1, 1]} : vector<8x512xf32> to vector<8x128xf32>
    %273 = math.tanh %272 : vector<8x128xf32>
    %274 = vector.extract_strided_slice %271 {offsets = [0, 0], sizes = [8, 128], strides = [1, 1]} : vector<8x384xf32> to vector<8x128xf32>
    %275 = vector.extract_strided_slice %271 {offsets = [0, 128], sizes = [8, 128], strides = [1, 1]} : vector<8x384xf32> to vector<8x128xf32>
    %276 = vector.extract_strided_slice %271 {offsets = [0, 256], sizes = [8, 128], strides = [1, 1]} : vector<8x384xf32> to vector<8x128xf32>
    %277 = arith.mulf %275, %234 : vector<8x128xf32>
    %278 = arith.mulf %274, %273 : vector<8x128xf32>
    %279 = arith.addf %277, %278 : vector<8x128xf32>
    %280 = math.tanh %279 : vector<8x128xf32>
    %281 = arith.mulf %276, %280 : vector<8x128xf32>
    %282 = arith.index_cast %c5_i32 : i32 to index
    %c0_70 = arith.constant 0 : index
    %c0_71 = arith.constant 0 : index
    %283 = vector.load %arg13[%282, %c0_70, %c0_71] : memref<8x8x128xf32, #tpu.memory_space<vmem>>, vector<1x8x128xf32>
    %284 = vector.shape_cast %283 : vector<1x8x128xf32> to vector<8x128xf32>
    %285 = vector.shape_cast %281 : vector<8x128xf32> to vector<1x8x128xf32>
    tpu.vector_store %arg13[%282, %c0_70, %c0_71], %285 {strides = array<i32>} : memref<8x8x128xf32, #tpu.memory_space<vmem>>, vector<1x8x128xf32>,
    %c6_i32 = arith.constant 6 : i32
    %286 = arith.index_cast %c6_i32 : i32 to index
    %c0_72 = arith.constant 0 : index
    %c0_73 = arith.constant 0 : index
    %287 = vector.load %arg12[%286, %c0_72, %c0_73] : memref<8x8x512xf32, #tpu.memory_space<vmem>>, vector<1x8x512xf32>
    %288 = vector.shape_cast %287 : vector<1x8x512xf32> to vector<8x512xf32>
    %cst_74 = arith.constant dense<0.000000e+00> : vector<8x512xf32>
    %289 = tpu.matmul %261, %9, %cst_74 {dimension_numbers = #tpu.dot_dimension_numbers<[1], [0], [0], [1], [0, 0, 1, 1], [], []>} : vector<8x128xf32>, vector<128x512xf32>, vector<8x512xf32> -> vector<8x512xf32>
    %290 = arith.addf %288, %289 : vector<8x512xf32>
    %291 = vector.extract_strided_slice %290 {offsets = [0, 0], sizes = [8, 384], strides = [1, 1]} : vector<8x512xf32> to vector<8x384xf32>
    %292 = arith.negf %291 : vector<8x384xf32>
    %293 = math.exp %292 : vector<8x384xf32>
    %cst_75 = arith.constant 1.000000e+00 : f32
    %294 = vector.broadcast %cst_75 : f32 to vector<8x384xf32>
    %295 = arith.addf %294, %293 : vector<8x384xf32>
    %296 = arith.divf %294, %295 : vector<8x384xf32>
    %297 = vector.extract_strided_slice %290 {offsets = [0, 384], sizes = [8, 128], strides = [1, 1]} : vector<8x512xf32> to vector<8x128xf32>
    %298 = math.tanh %297 : vector<8x128xf32>
    %299 = vector.extract_strided_slice %296 {offsets = [0, 0], sizes = [8, 128], strides = [1, 1]} : vector<8x384xf32> to vector<8x128xf32>
    %300 = vector.extract_strided_slice %296 {offsets = [0, 128], sizes = [8, 128], strides = [1, 1]} : vector<8x384xf32> to vector<8x128xf32>
    %301 = vector.extract_strided_slice %296 {offsets = [0, 256], sizes = [8, 128], strides = [1, 1]} : vector<8x384xf32> to vector<8x128xf32>
    %302 = arith.mulf %300, %259 : vector<8x128xf32>
    %303 = arith.mulf %299, %298 : vector<8x128xf32>
    %304 = arith.addf %302, %303 : vector<8x128xf32>
    %305 = math.tanh %304 : vector<8x128xf32>
    %306 = arith.mulf %301, %305 : vector<8x128xf32>
    %cst_76 = arith.constant dense<0.000000e+00> : vector<8x512xf32>
    %307 = tpu.matmul %306, %10, %cst_76 {dimension_numbers = #tpu.dot_dimension_numbers<[1], [0], [0], [1], [0, 0, 1, 1], [], []>} : vector<8x128xf32>, vector<128x512xf32>, vector<8x512xf32> -> vector<8x512xf32>
    %cst_77 = arith.constant dense<0.000000e+00> : vector<8x512xf32>
    %308 = tpu.matmul %281, %11, %cst_77 {dimension_numbers = #tpu.dot_dimension_numbers<[1], [0], [0], [1], [0, 0, 1, 1], [], []>} : vector<8x128xf32>, vector<128x512xf32>, vector<8x512xf32> -> vector<8x512xf32>
    %309 = arith.addf %307, %308 : vector<8x512xf32>
    %310 = arith.addf %309, %14 : vector<8x512xf32>
    %311 = vector.extract_strided_slice %310 {offsets = [0, 0], sizes = [8, 384], strides = [1, 1]} : vector<8x512xf32> to vector<8x384xf32>
    %312 = arith.negf %311 : vector<8x384xf32>
    %313 = math.exp %312 : vector<8x384xf32>
    %cst_78 = arith.constant 1.000000e+00 : f32
    %314 = vector.broadcast %cst_78 : f32 to vector<8x384xf32>
    %315 = arith.addf %314, %313 : vector<8x384xf32>
    %316 = arith.divf %314, %315 : vector<8x384xf32>
    %317 = vector.extract_strided_slice %310 {offsets = [0, 384], sizes = [8, 128], strides = [1, 1]} : vector<8x512xf32> to vector<8x128xf32>
    %318 = math.tanh %317 : vector<8x128xf32>
    %319 = vector.extract_strided_slice %316 {offsets = [0, 0], sizes = [8, 128], strides = [1, 1]} : vector<8x384xf32> to vector<8x128xf32>
    %320 = vector.extract_strided_slice %316 {offsets = [0, 128], sizes = [8, 128], strides = [1, 1]} : vector<8x384xf32> to vector<8x128xf32>
    %321 = vector.extract_strided_slice %316 {offsets = [0, 256], sizes = [8, 128], strides = [1, 1]} : vector<8x384xf32> to vector<8x128xf32>
    %322 = arith.mulf %320, %279 : vector<8x128xf32>
    %323 = arith.mulf %319, %318 : vector<8x128xf32>
    %324 = arith.addf %322, %323 : vector<8x128xf32>
    %325 = math.tanh %324 : vector<8x128xf32>
    %326 = arith.mulf %321, %325 : vector<8x128xf32>
    %327 = arith.index_cast %c6_i32 : i32 to index
    %c0_79 = arith.constant 0 : index
    %c0_80 = arith.constant 0 : index
    %328 = vector.load %arg13[%327, %c0_79, %c0_80] : memref<8x8x128xf32, #tpu.memory_space<vmem>>, vector<1x8x128xf32>
    %329 = vector.shape_cast %328 : vector<1x8x128xf32> to vector<8x128xf32>
    %330 = vector.shape_cast %326 : vector<8x128xf32> to vector<1x8x128xf32>
    tpu.vector_store %arg13[%327, %c0_79, %c0_80], %330 {strides = array<i32>} : memref<8x8x128xf32, #tpu.memory_space<vmem>>, vector<1x8x128xf32>,
    %c7_i32 = arith.constant 7 : i32
    %331 = arith.index_cast %c7_i32 : i32 to index
    %c0_81 = arith.constant 0 : index
    %c0_82 = arith.constant 0 : index
    %332 = vector.load %arg12[%331, %c0_81, %c0_82] : memref<8x8x512xf32, #tpu.memory_space<vmem>>, vector<1x8x512xf32>
    %333 = vector.shape_cast %332 : vector<1x8x512xf32> to vector<8x512xf32>
    %cst_83 = arith.constant dense<0.000000e+00> : vector<8x512xf32>
    %334 = tpu.matmul %306, %9, %cst_83 {dimension_numbers = #tpu.dot_dimension_numbers<[1], [0], [0], [1], [0, 0, 1, 1], [], []>} : vector<8x128xf32>, vector<128x512xf32>, vector<8x512xf32> -> vector<8x512xf32>
    %335 = arith.addf %333, %334 : vector<8x512xf32>
    %336 = vector.extract_strided_slice %335 {offsets = [0, 0], sizes = [8, 384], strides = [1, 1]} : vector<8x512xf32> to vector<8x384xf32>
    %337 = arith.negf %336 : vector<8x384xf32>
    %338 = math.exp %337 : vector<8x384xf32>
    %cst_84 = arith.constant 1.000000e+00 : f32
    %339 = vector.broadcast %cst_84 : f32 to vector<8x384xf32>
    %340 = arith.addf %339, %338 : vector<8x384xf32>
    %341 = arith.divf %339, %340 : vector<8x384xf32>
    %342 = vector.extract_strided_slice %335 {offsets = [0, 384], sizes = [8, 128], strides = [1, 1]} : vector<8x512xf32> to vector<8x128xf32>
    %343 = math.tanh %342 : vector<8x128xf32>
    %344 = vector.extract_strided_slice %341 {offsets = [0, 0], sizes = [8, 128], strides = [1, 1]} : vector<8x384xf32> to vector<8x128xf32>
    %345 = vector.extract_strided_slice %341 {offsets = [0, 128], sizes = [8, 128], strides = [1, 1]} : vector<8x384xf32> to vector<8x128xf32>
    %346 = vector.extract_strided_slice %341 {offsets = [0, 256], sizes = [8, 128], strides = [1, 1]} : vector<8x384xf32> to vector<8x128xf32>
    %347 = arith.mulf %345, %304 : vector<8x128xf32>
    %348 = arith.mulf %344, %343 : vector<8x128xf32>
    %349 = arith.addf %347, %348 : vector<8x128xf32>
    %350 = math.tanh %349 : vector<8x128xf32>
    %351 = arith.mulf %346, %350 : vector<8x128xf32>
    %cst_85 = arith.constant dense<0.000000e+00> : vector<8x512xf32>
    %352 = tpu.matmul %351, %10, %cst_85 {dimension_numbers = #tpu.dot_dimension_numbers<[1], [0], [0], [1], [0, 0, 1, 1], [], []>} : vector<8x128xf32>, vector<128x512xf32>, vector<8x512xf32> -> vector<8x512xf32>
    %cst_86 = arith.constant dense<0.000000e+00> : vector<8x512xf32>
    %353 = tpu.matmul %326, %11, %cst_86 {dimension_numbers = #tpu.dot_dimension_numbers<[1], [0], [0], [1], [0, 0, 1, 1], [], []>} : vector<8x128xf32>, vector<128x512xf32>, vector<8x512xf32> -> vector<8x512xf32>
    %354 = arith.addf %352, %353 : vector<8x512xf32>
    %355 = arith.addf %354, %14 : vector<8x512xf32>
    %356 = vector.extract_strided_slice %355 {offsets = [0, 0], sizes = [8, 384], strides = [1, 1]} : vector<8x512xf32> to vector<8x384xf32>
    %357 = arith.negf %356 : vector<8x384xf32>
    %358 = math.exp %357 : vector<8x384xf32>
    %cst_87 = arith.constant 1.000000e+00 : f32
    %359 = vector.broadcast %cst_87 : f32 to vector<8x384xf32>
    %360 = arith.addf %359, %358 : vector<8x384xf32>
    %361 = arith.divf %359, %360 : vector<8x384xf32>
    %362 = vector.extract_strided_slice %355 {offsets = [0, 384], sizes = [8, 128], strides = [1, 1]} : vector<8x512xf32> to vector<8x128xf32>
    %363 = math.tanh %362 : vector<8x128xf32>
    %364 = vector.extract_strided_slice %361 {offsets = [0, 0], sizes = [8, 128], strides = [1, 1]} : vector<8x384xf32> to vector<8x128xf32>
    %365 = vector.extract_strided_slice %361 {offsets = [0, 128], sizes = [8, 128], strides = [1, 1]} : vector<8x384xf32> to vector<8x128xf32>
    %366 = vector.extract_strided_slice %361 {offsets = [0, 256], sizes = [8, 128], strides = [1, 1]} : vector<8x384xf32> to vector<8x128xf32>
    %367 = arith.mulf %365, %324 : vector<8x128xf32>
    %368 = arith.mulf %364, %363 : vector<8x128xf32>
    %369 = arith.addf %367, %368 : vector<8x128xf32>
    %370 = math.tanh %369 : vector<8x128xf32>
    %371 = arith.mulf %366, %370 : vector<8x128xf32>
    %372 = arith.index_cast %c7_i32 : i32 to index
    %c0_88 = arith.constant 0 : index
    %c0_89 = arith.constant 0 : index
    %373 = vector.load %arg13[%372, %c0_88, %c0_89] : memref<8x8x128xf32, #tpu.memory_space<vmem>>, vector<1x8x128xf32>
    %374 = vector.shape_cast %373 : vector<1x8x128xf32> to vector<8x128xf32>
    %375 = vector.shape_cast %371 : vector<8x128xf32> to vector<1x8x128xf32>
    tpu.vector_store %arg13[%372, %c0_88, %c0_89], %375 {strides = array<i32>} : memref<8x8x128xf32, #tpu.memory_space<vmem>>, vector<1x8x128xf32>,
    %c8_i32 = arith.constant 8 : i32
    %c0_90 = arith.constant 0 : index
    %c0_91 = arith.constant 0 : index
    %c0_92 = arith.constant 0 : index
    %376 = vector.load %arg10[%c0_90, %c0_91, %c0_92] : memref<2x8x128xf32, #tpu.memory_space<vmem>>, vector<1x8x128xf32>
    %377 = vector.shape_cast %376 : vector<1x8x128xf32> to vector<8x128xf32>
    %378 = vector.shape_cast %351 : vector<8x128xf32> to vector<1x8x128xf32>
    tpu.vector_store %arg10[%c0_90, %c0_91, %c0_92], %378 {strides = array<i32>} : memref<2x8x128xf32, #tpu.memory_space<vmem>>, vector<1x8x128xf32>,
    %c1 = arith.constant 1 : index
    %c0_93 = arith.constant 0 : index
    %c0_94 = arith.constant 0 : index
    %379 = vector.load %arg10[%c1, %c0_93, %c0_94] : memref<2x8x128xf32, #tpu.memory_space<vmem>>, vector<1x8x128xf32>
    %380 = vector.shape_cast %379 : vector<1x8x128xf32> to vector<8x128xf32>
    %381 = vector.shape_cast %371 : vector<8x128xf32> to vector<1x8x128xf32>
    tpu.vector_store %arg10[%c1, %c0_93, %c0_94], %381 {strides = array<i32>} : memref<2x8x128xf32, #tpu.memory_space<vmem>>, vector<1x8x128xf32>,
    %c0_95 = arith.constant 0 : index
    %c0_96 = arith.constant 0 : index
    %c0_97 = arith.constant 0 : index
    %382 = vector.load %arg11[%c0_95, %c0_96, %c0_97] : memref<2x8x128xf32, #tpu.memory_space<vmem>>, vector<1x8x128xf32>
    %383 = vector.shape_cast %382 : vector<1x8x128xf32> to vector<8x128xf32>
    %384 = vector.shape_cast %349 : vector<8x128xf32> to vector<1x8x128xf32>
    tpu.vector_store %arg11[%c0_95, %c0_96, %c0_97], %384 {strides = array<i32>} : memref<2x8x128xf32, #tpu.memory_space<vmem>>, vector<1x8x128xf32>,
    %c1_98 = arith.constant 1 : index
    %c0_99 = arith.constant 0 : index
    %c0_100 = arith.constant 0 : index
    %385 = vector.load %arg11[%c1_98, %c0_99, %c0_100] : memref<2x8x128xf32, #tpu.memory_space<vmem>>, vector<1x8x128xf32>
    %386 = vector.shape_cast %385 : vector<1x8x128xf32> to vector<8x128xf32>
    %387 = vector.shape_cast %369 : vector<8x128xf32> to vector<1x8x128xf32>
    tpu.vector_store %arg11[%c1_98, %c0_99, %c0_100], %387 {strides = array<i32>} : memref<2x8x128xf32, #tpu.memory_space<vmem>>, vector<1x8x128xf32>,
    %c0_101 = arith.constant 0 : index
    %c0_102 = arith.constant 0 : index
    %c0_103 = arith.constant 0 : index
    %388 = vector.load %arg13[%c0_101, %c0_102, %c0_103] : memref<8x8x128xf32, #tpu.memory_space<vmem>>, vector<8x8x128xf32>
    %389 = vector.shape_cast %388 : vector<8x8x128xf32> to vector<64x128xf32>
    %c0_104 = arith.constant 0 : index
    %c0_105 = arith.constant 0 : index
    %390 = vector.load %arg7[%c0_104, %c0_105] : memref<128x128xf32, #tpu.memory_space<vmem>>, vector<128x128xf32>
    %cst_106 = arith.constant dense<0.000000e+00> : vector<64x128xf32>
    %391 = tpu.matmul %389, %390, %cst_106 {dimension_numbers = #tpu.dot_dimension_numbers<[1], [0], [0], [1], [0, 0, 1, 1], [], []>} : vector<64x128xf32>, vector<128x128xf32>, vector<64x128xf32> -> vector<64x128xf32>
    %c0_107 = arith.constant 0 : index
    %c0_108 = arith.constant 0 : index
    %392 = vector.load %arg8[%c0_107, %c0_108] : memref<1x128xf32, #tpu.memory_space<vmem>>, vector<1x128xf32>
    %393 = vector.broadcast %392 : vector<1x128xf32> to vector<64x128xf32>
    %394 = arith.addf %391, %393 : vector<64x128xf32>
    %395 = vector.shape_cast %394 : vector<64x128xf32> to vector<8x8x128xf32>
    %c0_109 = arith.constant 0 : index
    %c0_110 = arith.constant 0 : index
    %c0_111 = arith.constant 0 : index
    %396 = vector.load %arg9[%c0_109, %c0_110, %c0_111] : memref<8x8x128xf32, #tpu.memory_space<vmem>>, vector<8x8x128xf32>
    tpu.vector_store %arg9[%c0_109, %c0_110, %c0_111], %395 {strides = array<i32>} : memref<8x8x128xf32, #tpu.memory_space<vmem>>, vector<8x8x128xf32>,
    return
  }
}

</mosaic_0001>

<llo_original>
// kernel: lstm_drag_predictor.1
$region0: #{lstm_drag_predictor.1}
  #allocation0 [shape = 'u32[]', space=smem, size = 0x4, offset = 0x4, fixed_abs, tag = 'smem constant byte address 0x4 - core index']
  #allocation1 [shape = 'u32[72,128]{1,0:T(1,128)}', space=vmem, size = 0x9000, scoped, tag = 'internal scratch']
  #allocation2 [shape = 'f32[8,8,512]{2,1,0:T(8,128)}', space=vmem, size = 0x20000, scoped, tag = 'scratch operand']
  #allocation3 [shape = 'f32[8,8,128]{2,1,0:T(8,128)}', space=vmem, size = 0x8000, scoped, tag = 'scratch operand']
  %s0 = inlined_call_operand.vmem [shape: f32[8,8,128], index: 0, kind: input, shape index: {}]
  %s1 = inlined_call_operand.vmem [shape: f32[128,512], index: 1, kind: input, shape index: {}]
  %s2 = inlined_call_operand.vmem [shape: f32[128,512], index: 2, kind: input, shape index: {}]
  %s3 = inlined_call_operand.vmem [shape: f32[1,512], index: 3, kind: input, shape index: {}]
  %s4 = inlined_call_operand.vmem [shape: f32[128,512], index: 4, kind: input, shape index: {}]
  %s5 = inlined_call_operand.vmem [shape: f32[128,512], index: 5, kind: input, shape index: {}]
  %s6 = inlined_call_operand.vmem [shape: f32[1,512], index: 6, kind: input, shape index: {}]
  %s7 = inlined_call_operand.vmem [shape: f32[128,128], index: 7, kind: input, shape index: {}]
  %s8 = inlined_call_operand.vmem [shape: f32[1,128], index: 8, kind: input, shape index: {}]
  %s9 = inlined_call_operand.vmem [shape: f32[8,8,128], index: 9, kind: output, shape index: {0}]
  %s10 = inlined_call_operand.vmem [shape: f32[2,8,128], index: 10, kind: output, shape index: {1}]
  %s11 = inlined_call_operand.vmem [shape: f32[2,8,128], index: 11, kind: output, shape index: {2}]
  %12 = xla_tuple %s9, %s10, %s11
  %s13 = sld [smem:[#allocation0]]
  $region62: #{lstm_drag_predictor.1} parent=0
    _
  %s15 = ssub.s32 1, %s13
  %s16 = scalar_select 0, %s15, %s13
  // Predicated region
  $region2: #{lstm_drag_predictor.1} parent=0 // pred_check
    _
  $region3: #{lstm_drag_predictor.1} parent=0 // pred_check_branch
    %18 = sbr.rel (0) target = $region5
  $region4: #{lstm_drag_predictor.1} parent=0 // pred_region
    _
  $region5: #{lstm_drag_predictor.1} parent=0 // pred_fallthru
    _
  // Predicated region
  $region6: #{lstm_drag_predictor.1} parent=0 // pred_check
    _
  $region7: #{lstm_drag_predictor.1} parent=0 // pred_check_branch
    %20 = sbr.rel (0) target = $region9
  $region8: #{lstm_drag_predictor.1} parent=0 // pred_region
    _
  $region9: #{lstm_drag_predictor.1} parent=0 // pred_fallthru
    _
  // Predicated region
  $region10: #{lstm_drag_predictor.1} parent=0 // pred_check
    _
  $region11: #{lstm_drag_predictor.1} parent=0 // pred_check_branch
    %22 = sbr.rel (0) target = $region13
  $region12: #{lstm_drag_predictor.1} parent=0 // pred_region
    _
  $region13: #{lstm_drag_predictor.1} parent=0 // pred_fallthru
    _
  // Predicated region
  $region14: #{lstm_drag_predictor.1} parent=0 // pred_check
    _
  $region15: #{lstm_drag_predictor.1} parent=0 // pred_check_branch
    %24 = sbr.rel (0) target = $region17
  $region16: #{lstm_drag_predictor.1} parent=0 // pred_region
    _
  $region17: #{lstm_drag_predictor.1} parent=0 // pred_fallthru
    _
  // Predicated region
  $region18: #{lstm_drag_predictor.1} parent=0 // pred_check
    _
  $region19: #{lstm_drag_predictor.1} parent=0 // pred_check_branch
    %26 = sbr.rel (0) target = $region21
  $region20: #{lstm_drag_predictor.1} parent=0 // pred_region
    _
  $region21: #{lstm_drag_predictor.1} parent=0 // pred_fallthru
    _
  // Predicated region
  $region22: #{lstm_drag_predictor.1} parent=0 // pred_check
    _
  $region23: #{lstm_drag_predictor.1} parent=0 // pred_check_branch
    %28 = sbr.rel (0) target = $region25
  $region24: #{lstm_drag_predictor.1} parent=0 // pred_region
    _
  $region25: #{lstm_drag_predictor.1} parent=0 // pred_fallthru
    _
  // Predicated region
  $region26: #{lstm_drag_predictor.1} parent=0 // pred_check
    _
  $region27: #{lstm_drag_predictor.1} parent=0 // pred_check_branch
    %30 = sbr.rel (0) target = $region29
  $region28: #{lstm_drag_predictor.1} parent=0 // pred_region
    _
  $region29: #{lstm_drag_predictor.1} parent=0 // pred_fallthru
    _
  // Predicated region
  $region30: #{lstm_drag_predictor.1} parent=0 // pred_check
    _
  $region31: #{lstm_drag_predictor.1} parent=0 // pred_check_branch
    %32 = sbr.rel (0) target = $region33
  $region32: #{lstm_drag_predictor.1} parent=0 // pred_region
    _
  $region33: #{lstm_drag_predictor.1} parent=0 // pred_fallthru
    _
  // Predicated region
  $region34: #{lstm_drag_predictor.1} parent=0 // pred_check
    _
  $region35: #{lstm_drag_predictor.1} parent=0 // pred_check_branch
    %34 = sbr.rel (0) target = $region37
  $region36: #{lstm_drag_predictor.1} parent=0 // pred_region
    _
  $region37: #{lstm_drag_predictor.1} parent=0 // pred_fallthru
    _
  %v35 = vld [vmem:[%s0] sm:$0xff]
  %v36 = vld [vmem:[%s0 + $0x8] sm:$0xff]
  %v37 = vld [vmem:[%s0 + $0x10] sm:$0xff]
  %v38 = vld [vmem:[%s0 + $0x18] sm:$0xff]
  %v39 = vld [vmem:[%s0 + $0x20] sm:$0xff]
  %v40 = vld [vmem:[%s0 + $0x28] sm:$0xff]
  %v41 = vld [vmem:[%s0 + $0x30] sm:$0xff]
  %v42 = vld [vmem:[%s0 + $0x38] sm:$0xff]
  %v43 = vld [vmem:[%s1] sm:$0xff]
  %v44 = vld [vmem:[%s1 + $0x8] sm:$0xff]
  %v45 = vld [vmem:[%s1 + $0x10] sm:$0xff]
  %v46 = vld [vmem:[%s1 + $0x18] sm:$0xff]
  %v47 = vld [vmem:[%s1 + $0x20] sm:$0xff]
  %v48 = vld [vmem:[%s1 + $0x28] sm:$0xff]
  %v49 = vld [vmem:[%s1 + $0x30] sm:$0xff]
  %v50 = vld [vmem:[%s1 + $0x38] sm:$0xff]
  %v51 = vld [vmem:[%s1 + $0x40] sm:$0xff]
  %v52 = vld [vmem:[%s1 + $0x48] sm:$0xff]
  %v53 = vld [vmem:[%s1 + $0x50] sm:$0xff]
  %v54 = vld [vmem:[%s1 + $0x58] sm:$0xff]
  %v55 = vld [vmem:[%s1 + $0x60] sm:$0xff]
  %v56 = vld [vmem:[%s1 + $0x68] sm:$0xff]
  %v57 = vld [vmem:[%s1 + $0x70] sm:$0xff]
  %v58 = vld [vmem:[%s1 + $0x78] sm:$0xff]
  %v59 = vld [vmem:[%s1 + $0x80] sm:$0xff]
  %v60 = vld [vmem:[%s1 + $0x88] sm:$0xff]
  %v61 = vld [vmem:[%s1 + $0x90] sm:$0xff]
  %v62 = vld [vmem:[%s1 + $0x98] sm:$0xff]
  %v63 = vld [vmem:[%s1 + $0xa0] sm:$0xff]
  %v64 = vld [vmem:[%s1 + $0xa8] sm:$0xff]
  %v65 = vld [vmem:[%s1 + $0xb0] sm:$0xff]
  %v66 = vld [vmem:[%s1 + $0xb8] sm:$0xff]
  %v67 = vld [vmem:[%s1 + $0xc0] sm:$0xff]
  %v68 = vld [vmem:[%s1 + $0xc8] sm:$0xff]
  %v69 = vld [vmem:[%s1 + $0xd0] sm:$0xff]
  %v70 = vld [vmem:[%s1 + $0xd8] sm:$0xff]
  %v71 = vld [vmem:[%s1 + $0xe0] sm:$0xff]
  %v72 = vld [vmem:[%s1 + $0xe8] sm:$0xff]
  %v73 = vld [vmem:[%s1 + $0xf0] sm:$0xff]
  %v74 = vld [vmem:[%s1 + $0xf8] sm:$0xff]
  %v75 = vld [vmem:[%s1 + $0x100] sm:$0xff]
  %v76 = vld [vmem:[%s1 + $0x108] sm:$0xff]
  %v77 = vld [vmem:[%s1 + $0x110] sm:$0xff]
  %v78 = vld [vmem:[%s1 + $0x118] sm:$0xff]
  %v79 = vld [vmem:[%s1 + $0x120] sm:$0xff]
  %v80 = vld [vmem:[%s1 + $0x128] sm:$0xff]
  %v81 = vld [vmem:[%s1 + $0x130] sm:$0xff]
  %v82 = vld [vmem:[%s1 + $0x138] sm:$0xff]
  %v83 = vld [vmem:[%s1 + $0x140] sm:$0xff]
  %v84 = vld [vmem:[%s1 + $0x148] sm:$0xff]
  %v85 = vld [vmem:[%s1 + $0x150] sm:$0xff]
  %v86 = vld [vmem:[%s1 + $0x158] sm:$0xff]
  %v87 = vld [vmem:[%s1 + $0x160] sm:$0xff]
  %v88 = vld [vmem:[%s1 + $0x168] sm:$0xff]
  %v89 = vld [vmem:[%s1 + $0x170] sm:$0xff]
  %v90 = vld [vmem:[%s1 + $0x178] sm:$0xff]
  %v91 = vld [vmem:[%s1 + $0x180] sm:$0xff]
  %v92 = vld [vmem:[%s1 + $0x188] sm:$0xff]
  %v93 = vld [vmem:[%s1 + $0x190] sm:$0xff]
  %v94 = vld [vmem:[%s1 + $0x198] sm:$0xff]
  %v95 = vld [vmem:[%s1 + $0x1a0] sm:$0xff]
  %v96 = vld [vmem:[%s1 + $0x1a8] sm:$0xff]
  %v97 = vld [vmem:[%s1 + $0x1b0] sm:$0xff]
  %v98 = vld [vmem:[%s1 + $0x1b8] sm:$0xff]
  %v99 = vld [vmem:[%s1 + $0x1c0] sm:$0xff]
  %v100 = vld [vmem:[%s1 + $0x1c8] sm:$0xff]
  %v101 = vld [vmem:[%s1 + $0x1d0] sm:$0xff]
  %v102 = vld [vmem:[%s1 + $0x1d8] sm:$0xff]
  %v103 = vld [vmem:[%s1 + $0x1e0] sm:$0xff]
  %v104 = vld [vmem:[%s1 + $0x1e8] sm:$0xff]
  %v105 = vld [vmem:[%s1 + $0x1f0] sm:$0xff]
  %v106 = vld [vmem:[%s1 + $0x1f8] sm:$0xff]
  %v107 = vld [vmem:[%s3] sm:$0xf]
  %v109 = vperm.slane %v107, 0
  %v110 = vperm.slane %v107, 1
  %v111 = vperm.slane %v107, 2
  %v112 = vperm.slane %v107, 3
  %117 = vmatpush.msra.mxu0 %v103
  %118 = vmatpush.msra.mxu0 %v99
  %119 = vmatpush.msra.mxu0 %v95
  %120 = vmatpush.msra.mxu0 %v91
  %121 = vmatpush.msra.mxu0 %v87
  %122 = vmatpush.msra.mxu0 %v83
  %123 = vmatpush.msra.mxu0 %v79
  %124 = vmatpush.msra.mxu0 %v75
  %125 = vmatpush.msra.mxu0 %v71
  %126 = vmatpush.msra.mxu0 %v67
  %127 = vmatpush.msra.mxu0 %v63
  %128 = vmatpush.msra.mxu0 %v59
  %129 = vmatpush.msra.mxu0 %v55
  %130 = vmatpush.msra.mxu0 %v51
  %131 = vmatpush.msra.mxu0 %v47
  %132 = vmatpush.msra.mxu0 %v43
  %133 = vmatmul.f32.gmra.mxu0 %v35
  %v134 = vpop.f32.mrf.mxu0
  %v135 = vadd.f32 %v109, %v134
  %136 = vmatmul.f32.gmra.mxu0 %v36
  %v137 = vpop.f32.mrf.mxu0
  %v138 = vadd.f32 %v109, %v137
  %139 = vmatmul.f32.gmra.mxu0 %v37
  %v140 = vpop.f32.mrf.mxu0
  %v141 = vadd.f32 %v109, %v140
  %142 = vmatmul.f32.gmra.mxu0 %v38
  %v143 = vpop.f32.mrf.mxu0
  %v144 = vadd.f32 %v109, %v143
  %145 = vmatmul.f32.gmra.mxu0 %v39
  %v146 = vpop.f32.mrf.mxu0
  %v147 = vadd.f32 %v109, %v146
  %148 = vmatmul.f32.gmra.mxu0 %v40
  %v149 = vpop.f32.mrf.mxu0
  %v150 = vadd.f32 %v109, %v149
  %151 = vmatmul.f32.gmra.mxu0 %v41
  %v152 = vpop.f32.mrf.mxu0
  %v153 = vadd.f32 %v109, %v152
  %154 = vmatmul.f32.gmra.mxu0 %v42
  %v155 = vpop.f32.mrf.mxu0
  %v156 = vadd.f32 %v109, %v155
  %157 = vdwg.mxu0
  %158 = vmatpush.msra.mxu0 %v104
  %159 = vmatpush.msra.mxu0 %v100
  %160 = vmatpush.msra.mxu0 %v96
  %161 = vmatpush.msra.mxu0 %v92
  %162 = vmatpush.msra.mxu0 %v88
  %163 = vmatpush.msra.mxu0 %v84
  %164 = vmatpush.msra.mxu0 %v80
  %165 = vmatpush.msra.mxu0 %v76
  %166 = vmatpush.msra.mxu0 %v72
  %167 = vmatpush.msra.mxu0 %v68
  %168 = vmatpush.msra.mxu0 %v64
  %169 = vmatpush.msra.mxu0 %v60
  %170 = vmatpush.msra.mxu0 %v56
  %171 = vmatpush.msra.mxu0 %v52
  %172 = vmatpush.msra.mxu0 %v48
  %173 = vmatpush.msra.mxu0 %v44
  %174 = vmatmul.f32.gmra.mxu0 %v35
  %v175 = vpop.f32.mrf.mxu0
  %v176 = vadd.f32 %v110, %v175
  %177 = vmatmul.f32.gmra.mxu0 %v36
  %v178 = vpop.f32.mrf.mxu0
  %v179 = vadd.f32 %v110, %v178
  %180 = vmatmul.f32.gmra.mxu0 %v37
  %v181 = vpop.f32.mrf.mxu0
  %v182 = vadd.f32 %v110, %v181
  %183 = vmatmul.f32.gmra.mxu0 %v38
  %v184 = vpop.f32.mrf.mxu0
  %v185 = vadd.f32 %v110, %v184
  %186 = vmatmul.f32.gmra.mxu0 %v39
  %v187 = vpop.f32.mrf.mxu0
  %v188 = vadd.f32 %v110, %v187
  %189 = vmatmul.f32.gmra.mxu0 %v40
  %v190 = vpop.f32.mrf.mxu0
  %v191 = vadd.f32 %v110, %v190
  %192 = vmatmul.f32.gmra.mxu0 %v41
  %v193 = vpop.f32.mrf.mxu0
  %v194 = vadd.f32 %v110, %v193
  %195 = vmatmul.f32.gmra.mxu0 %v42
  %v196 = vpop.f32.mrf.mxu0
  %v197 = vadd.f32 %v110, %v196
  %198 = vdwg.mxu0
  %199 = vmatpush.msra.mxu0 %v105
  %200 = vmatpush.msra.mxu0 %v101
  %201 = vmatpush.msra.mxu0 %v97
  %202 = vmatpush.msra.mxu0 %v93
  %203 = vmatpush.msra.mxu0 %v89
  %204 = vmatpush.msra.mxu0 %v85
  %205 = vmatpush.msra.mxu0 %v81
  %206 = vmatpush.msra.mxu0 %v77
  %207 = vmatpush.msra.mxu0 %v73
  %208 = vmatpush.msra.mxu0 %v69
  %209 = vmatpush.msra.mxu0 %v65
  %210 = vmatpush.msra.mxu0 %v61
  %211 = vmatpush.msra.mxu0 %v57
  %212 = vmatpush.msra.mxu0 %v53
  %213 = vmatpush.msra.mxu0 %v49
  %214 = vmatpush.msra.mxu0 %v45
  %215 = vmatmul.f32.gmra.mxu0 %v35
  %v216 = vpop.f32.mrf.mxu0
  %v217 = vadd.f32 %v111, %v216
  %218 = vmatmul.f32.gmra.mxu0 %v36
  %v219 = vpop.f32.mrf.mxu0
  %v220 = vadd.f32 %v111, %v219
  %221 = vmatmul.f32.gmra.mxu0 %v37
  %v222 = vpop.f32.mrf.mxu0
  %v223 = vadd.f32 %v111, %v222
  %224 = vmatmul.f32.gmra.mxu0 %v38
  %v225 = vpop.f32.mrf.mxu0
  %v226 = vadd.f32 %v111, %v225
  %227 = vmatmul.f32.gmra.mxu0 %v39
  %v228 = vpop.f32.mrf.mxu0
  %v229 = vadd.f32 %v111, %v228
  %230 = vmatmul.f32.gmra.mxu0 %v40
  %v231 = vpop.f32.mrf.mxu0
  %v232 = vadd.f32 %v111, %v231
  %233 = vmatmul.f32.gmra.mxu0 %v41
  %v234 = vpop.f32.mrf.mxu0
  %v235 = vadd.f32 %v111, %v234
  %236 = vmatmul.f32.gmra.mxu0 %v42
  %v237 = vpop.f32.mrf.mxu0
  %v238 = vadd.f32 %v111, %v237
  %239 = vdwg.mxu0
  %240 = vmatpush.msra.mxu0 %v106
  %241 = vmatpush.msra.mxu0 %v102
  %242 = vmatpush.msra.mxu0 %v98
  %243 = vmatpush.msra.mxu0 %v94
  %244 = vmatpush.msra.mxu0 %v90
  %245 = vmatpush.msra.mxu0 %v86
  %246 = vmatpush.msra.mxu0 %v82
  %247 = vmatpush.msra.mxu0 %v78
  %248 = vmatpush.msra.mxu0 %v74
  %249 = vmatpush.msra.mxu0 %v70
  %250 = vmatpush.msra.mxu0 %v66
  %251 = vmatpush.msra.mxu0 %v62
  %252 = vmatpush.msra.mxu0 %v58
  %253 = vmatpush.msra.mxu0 %v54
  %254 = vmatpush.msra.mxu0 %v50
  %255 = vmatpush.msra.mxu0 %v46
  %256 = vmatmul.f32.gmra.mxu0 %v35
  %v257 = vpop.f32.mrf.mxu0
  %v258 = vadd.f32 %v112, %v257
  %259 = vmatmul.f32.gmra.mxu0 %v36
  %v260 = vpop.f32.mrf.mxu0
  %v261 = vadd.f32 %v112, %v260
  %262 = vmatmul.f32.gmra.mxu0 %v37
  %v263 = vpop.f32.mrf.mxu0
  %v264 = vadd.f32 %v112, %v263
  %265 = vmatmul.f32.gmra.mxu0 %v38
  %v266 = vpop.f32.mrf.mxu0
  %v267 = vadd.f32 %v112, %v266
  %268 = vmatmul.f32.gmra.mxu0 %v39
  %v269 = vpop.f32.mrf.mxu0
  %v270 = vadd.f32 %v112, %v269
  %271 = vmatmul.f32.gmra.mxu0 %v40
  %v272 = vpop.f32.mrf.mxu0
  %v273 = vadd.f32 %v112, %v272
  %274 = vmatmul.f32.gmra.mxu0 %v41
  %v275 = vpop.f32.mrf.mxu0
  %v276 = vadd.f32 %v112, %v275
  %277 = vmatmul.f32.gmra.mxu0 %v42
  %v278 = vpop.f32.mrf.mxu0
  %v279 = vadd.f32 %v112, %v278
  %280 = vdwg.mxu0
  %281 = vst [vmem:[#allocation2] sm:$0xff] %v135
  %282 = vst [vmem:[#allocation2 + $0x8] sm:$0xff] %v176
  %283 = vst [vmem:[#allocation2 + $0x10] sm:$0xff] %v217
  %284 = vst [vmem:[#allocation2 + $0x18] sm:$0xff] %v258
  %285 = vst [vmem:[#allocation2 + $0x20] sm:$0xff] %v138
  %286 = vst [vmem:[#allocation2 + $0x28] sm:$0xff] %v179
  %287 = vst [vmem:[#allocation2 + $0x30] sm:$0xff] %v220
  %288 = vst [vmem:[#allocation2 + $0x38] sm:$0xff] %v261
  %289 = vst [vmem:[#allocation2 + $0x40] sm:$0xff] %v141
  %290 = vst [vmem:[#allocation2 + $0x48] sm:$0xff] %v182
  %291 = vst [vmem:[#allocation2 + $0x50] sm:$0xff] %v223
  %292 = vst [vmem:[#allocation2 + $0x58] sm:$0xff] %v264
  %293 = vst [vmem:[#allocation2 + $0x60] sm:$0xff] %v144
  %294 = vst [vmem:[#allocation2 + $0x68] sm:$0xff] %v185
  %295 = vst [vmem:[#allocation2 + $0x70] sm:$0xff] %v226
  %296 = vst [vmem:[#allocation2 + $0x78] sm:$0xff] %v267
  %297 = vst [vmem:[#allocation2 + $0x80] sm:$0xff] %v147
  %298 = vst [vmem:[#allocation2 + $0x88] sm:$0xff] %v188
  %299 = vst [vmem:[#allocation2 + $0x90] sm:$0xff] %v229
  %300 = vst [vmem:[#allocation2 + $0x98] sm:$0xff] %v270
  %301 = vst [vmem:[#allocation2 + $0xa0] sm:$0xff] %v150
  %302 = vst [vmem:[#allocation2 + $0xa8] sm:$0xff] %v191
  %303 = vst [vmem:[#allocation2 + $0xb0] sm:$0xff] %v232
  %304 = vst [vmem:[#allocation2 + $0xb8] sm:$0xff] %v273
  %305 = vst [vmem:[#allocation2 + $0xc0] sm:$0xff] %v153
  %306 = vst [vmem:[#allocation2 + $0xc8] sm:$0xff] %v194
  %307 = vst [vmem:[#allocation2 + $0xd0] sm:$0xff] %v235
  %308 = vst [vmem:[#allocation2 + $0xd8] sm:$0xff] %v276
  %309 = vst [vmem:[#allocation2 + $0xe0] sm:$0xff] %v156
  %310 = vst [vmem:[#allocation2 + $0xe8] sm:$0xff] %v197
  %311 = vst [vmem:[#allocation2 + $0xf0] sm:$0xff] %v238
  %312 = vst [vmem:[#allocation2 + $0xf8] sm:$0xff] %v279
  %v313 = vld [vmem:[%s2] sm:$0xff]
  %v314 = vld [vmem:[%s2 + $0x8] sm:$0xff]
  %v315 = vld [vmem:[%s2 + $0x10] sm:$0xff]
  %v316 = vld [vmem:[%s2 + $0x18] sm:$0xff]
  %v317 = vld [vmem:[%s2 + $0x20] sm:$0xff]
  %v318 = vld [vmem:[%s2 + $0x28] sm:$0xff]
  %v319 = vld [vmem:[%s2 + $0x30] sm:$0xff]
  %v320 = vld [vmem:[%s2 + $0x38] sm:$0xff]
  %v321 = vld [vmem:[%s2 + $0x40] sm:$0xff]
  %v322 = vld [vmem:[%s2 + $0x48] sm:$0xff]
  %v323 = vld [vmem:[%s2 + $0x50] sm:$0xff]
  %v324 = vld [vmem:[%s2 + $0x58] sm:$0xff]
  %v325 = vld [vmem:[%s2 + $0x60] sm:$0xff]
  %v326 = vld [vmem:[%s2 + $0x68] sm:$0xff]
  %v327 = vld [vmem:[%s2 + $0x70] sm:$0xff]
  %v328 = vld [vmem:[%s2 + $0x78] sm:$0xff]
  %v329 = vld [vmem:[%s2 + $0x80] sm:$0xff]
  %v330 = vld [vmem:[%s2 + $0x88] sm:$0xff]
  %v331 = vld [vmem:[%s2 + $0x90] sm:$0xff]
  %v332 = vld [vmem:[%s2 + $0x98] sm:$0xff]
  %v333 = vld [vmem:[%s2 + $0xa0] sm:$0xff]
  %v334 = vld [vmem:[%s2 + $0xa8] sm:$0xff]
  %v335 = vld [vmem:[%s2 + $0xb0] sm:$0xff]
  %v336 = vld [vmem:[%s2 + $0xb8] sm:$0xff]
  %v337 = vld [vmem:[%s2 + $0xc0] sm:$0xff]
  %v338 = vld [vmem:[%s2 + $0xc8] sm:$0xff]
  %v339 = vld [vmem:[%s2 + $0xd0] sm:$0xff]
  %v340 = vld [vmem:[%s2 + $0xd8] sm:$0xff]
  %v341 = vld [vmem:[%s2 + $0xe0] sm:$0xff]
  %v342 = vld [vmem:[%s2 + $0xe8] sm:$0xff]
  %v343 = vld [vmem:[%s2 + $0xf0] sm:$0xff]
  %v344 = vld [vmem:[%s2 + $0xf8] sm:$0xff]
  %v345 = vld [vmem:[%s2 + $0x100] sm:$0xff]
  %v346 = vld [vmem:[%s2 + $0x108] sm:$0xff]
  %v347 = vld [vmem:[%s2 + $0x110] sm:$0xff]
  %v348 = vld [vmem:[%s2 + $0x118] sm:$0xff]
  %v349 = vld [vmem:[%s2 + $0x120] sm:$0xff]
  %v350 = vld [vmem:[%s2 + $0x128] sm:$0xff]
  %v351 = vld [vmem:[%s2 + $0x130] sm:$0xff]
  %v352 = vld [vmem:[%s2 + $0x138] sm:$0xff]
  %v353 = vld [vmem:[%s2 + $0x140] sm:$0xff]
  %v354 = vld [vmem:[%s2 + $0x148] sm:$0xff]
  %v355 = vld [vmem:[%s2 + $0x150] sm:$0xff]
  %v356 = vld [vmem:[%s2 + $0x158] sm:$0xff]
  %v357 = vld [vmem:[%s2 + $0x160] sm:$0xff]
  %v358 = vld [vmem:[%s2 + $0x168] sm:$0xff]
  %v359 = vld [vmem:[%s2 + $0x170] sm:$0xff]
  %v360 = vld [vmem:[%s2 + $0x178] sm:$0xff]
  %v361 = vld [vmem:[%s2 + $0x180] sm:$0xff]
  %v362 = vld [vmem:[%s2 + $0x188] sm:$0xff]
  %v363 = vld [vmem:[%s2 + $0x190] sm:$0xff]
  %v364 = vld [vmem:[%s2 + $0x198] sm:$0xff]
  %v365 = vld [vmem:[%s2 + $0x1a0] sm:$0xff]
  %v366 = vld [vmem:[%s2 + $0x1a8] sm:$0xff]
  %v367 = vld [vmem:[%s2 + $0x1b0] sm:$0xff]
  %v368 = vld [vmem:[%s2 + $0x1b8] sm:$0xff]
  %v369 = vld [vmem:[%s2 + $0x1c0] sm:$0xff]
  %v370 = vld [vmem:[%s2 + $0x1c8] sm:$0xff]
  %v371 = vld [vmem:[%s2 + $0x1d0] sm:$0xff]
  %v372 = vld [vmem:[%s2 + $0x1d8] sm:$0xff]
  %v373 = vld [vmem:[%s2 + $0x1e0] sm:$0xff]
  %v374 = vld [vmem:[%s2 + $0x1e8] sm:$0xff]
  %v375 = vld [vmem:[%s2 + $0x1f0] sm:$0xff]
  %v376 = vld [vmem:[%s2 + $0x1f8] sm:$0xff]
  %v377 = vld [vmem:[%s4] sm:$0xff]
  %v378 = vld [vmem:[%s4 + $0x8] sm:$0xff]
  %v379 = vld [vmem:[%s4 + $0x10] sm:$0xff]
  %v380 = vld [vmem:[%s4 + $0x18] sm:$0xff]
  %v381 = vld [vmem:[%s4 + $0x20] sm:$0xff]
  %v382 = vld [vmem:[%s4 + $0x28] sm:$0xff]
  %v383 = vld [vmem:[%s4 + $0x30] sm:$0xff]
  %v384 = vld [vmem:[%s4 + $0x38] sm:$0xff]
  %v385 = vld [vmem:[%s4 + $0x40] sm:$0xff]
  %v386 = vld [vmem:[%s4 + $0x48] sm:$0xff]
  %v387 = vld [vmem:[%s4 + $0x50] sm:$0xff]
  %v388 = vld [vmem:[%s4 + $0x58] sm:$0xff]
  %v389 = vld [vmem:[%s4 + $0x60] sm:$0xff]
  %v390 = vld [vmem:[%s4 + $0x68] sm:$0xff]
  %v391 = vld [vmem:[%s4 + $0x70] sm:$0xff]
  %v392 = vld [vmem:[%s4 + $0x78] sm:$0xff]
  %v393 = vld [vmem:[%s4 + $0x80] sm:$0xff]
  %v394 = vld [vmem:[%s4 + $0x88] sm:$0xff]
  %v395 = vld [vmem:[%s4 + $0x90] sm:$0xff]
  %v396 = vld [vmem:[%s4 + $0x98] sm:$0xff]
  %v397 = vld [vmem:[%s4 + $0xa0] sm:$0xff]
  %v398 = vld [vmem:[%s4 + $0xa8] sm:$0xff]
  %v399 = vld [vmem:[%s4 + $0xb0] sm:$0xff]
  %v400 = vld [vmem:[%s4 + $0xb8] sm:$0xff]
  %v401 = vld [vmem:[%s4 + $0xc0] sm:$0xff]
  %v402 = vld [vmem:[%s4 + $0xc8] sm:$0xff]
  %v403 = vld [vmem:[%s4 + $0xd0] sm:$0xff]
  %v404 = vld [vmem:[%s4 + $0xd8] sm:$0xff]
  %v405 = vld [vmem:[%s4 + $0xe0] sm:$0xff]
  %v406 = vld [vmem:[%s4 + $0xe8] sm:$0xff]
  %v407 = vld [vmem:[%s4 + $0xf0] sm:$0xff]
  %v408 = vld [vmem:[%s4 + $0xf8] sm:$0xff]
  %v409 = vld [vmem:[%s4 + $0x100] sm:$0xff]
  %v410 = vld [vmem:[%s4 + $0x108] sm:$0xff]
  %v411 = vld [vmem:[%s4 + $0x110] sm:$0xff]
  %v412 = vld [vmem:[%s4 + $0x118] sm:$0xff]
  %v413 = vld [vmem:[%s4 + $0x120] sm:$0xff]
  %v414 = vld [vmem:[%s4 + $0x128] sm:$0xff]
  %v415 = vld [vmem:[%s4 + $0x130] sm:$0xff]
  %v416 = vld [vmem:[%s4 + $0x138] sm:$0xff]
  %v417 = vld [vmem:[%s4 + $0x140] sm:$0xff]
  %v418 = vld [vmem:[%s4 + $0x148] sm:$0xff]
  %v419 = vld [vmem:[%s4 + $0x150] sm:$0xff]
  %v420 = vld [vmem:[%s4 + $0x158] sm:$0xff]
  %v421 = vld [vmem:[%s4 + $0x160] sm:$0xff]
  %v422 = vld [vmem:[%s4 + $0x168] sm:$0xff]
  %v423 = vld [vmem:[%s4 + $0x170] sm:$0xff]
  %v424 = vld [vmem:[%s4 + $0x178] sm:$0xff]
  %v425 = vld [vmem:[%s4 + $0x180] sm:$0xff]
  %v426 = vld [vmem:[%s4 + $0x188] sm:$0xff]
  %v427 = vld [vmem:[%s4 + $0x190] sm:$0xff]
  %v428 = vld [vmem:[%s4 + $0x198] sm:$0xff]
  %v429 = vld [vmem:[%s4 + $0x1a0] sm:$0xff]
  %v430 = vld [vmem:[%s4 + $0x1a8] sm:$0xff]
  %v431 = vld [vmem:[%s4 + $0x1b0] sm:$0xff]
  %v432 = vld [vmem:[%s4 + $0x1b8] sm:$0xff]
  %v433 = vld [vmem:[%s4 + $0x1c0] sm:$0xff]
  %v434 = vld [vmem:[%s4 + $0x1c8] sm:$0xff]
  %v435 = vld [vmem:[%s4 + $0x1d0] sm:$0xff]
  %v436 = vld [vmem:[%s4 + $0x1d8] sm:$0xff]
  %v437 = vld [vmem:[%s4 + $0x1e0] sm:$0xff]
  %v438 = vld [vmem:[%s4 + $0x1e8] sm:$0xff]
  %v439 = vld [vmem:[%s4 + $0x1f0] sm:$0xff]
  %v440 = vld [vmem:[%s4 + $0x1f8] sm:$0xff]
  %v441 = vld [vmem:[%s5] sm:$0xff]
  %v442 = vld [vmem:[%s5 + $0x8] sm:$0xff]
  %v443 = vld [vmem:[%s5 + $0x10] sm:$0xff]
  %v444 = vld [vmem:[%s5 + $0x18] sm:$0xff]
  %v445 = vld [vmem:[%s5 + $0x20] sm:$0xff]
  %v446 = vld [vmem:[%s5 + $0x28] sm:$0xff]
  %v447 = vld [vmem:[%s5 + $0x30] sm:$0xff]
  %v448 = vld [vmem:[%s5 + $0x38] sm:$0xff]
  %v449 = vld [vmem:[%s5 + $0x40] sm:$0xff]
  %v450 = vld [vmem:[%s5 + $0x48] sm:$0xff]
  %v451 = vld [vmem:[%s5 + $0x50] sm:$0xff]
  %v452 = vld [vmem:[%s5 + $0x58] sm:$0xff]
  %v453 = vld [vmem:[%s5 + $0x60] sm:$0xff]
  %v454 = vld [vmem:[%s5 + $0x68] sm:$0xff]
  %v455 = vld [vmem:[%s5 + $0x70] sm:$0xff]
  %v456 = vld [vmem:[%s5 + $0x78] sm:$0xff]
  %v457 = vld [vmem:[%s5 + $0x80] sm:$0xff]
  %v458 = vld [vmem:[%s5 + $0x88] sm:$0xff]
  %v459 = vld [vmem:[%s5 + $0x90] sm:$0xff]
  %v460 = vld [vmem:[%s5 + $0x98] sm:$0xff]
  %v461 = vld [vmem:[%s5 + $0xa0] sm:$0xff]
  %v462 = vld [vmem:[%s5 + $0xa8] sm:$0xff]
  %v463 = vld [vmem:[%s5 + $0xb0] sm:$0xff]
  %v464 = vld [vmem:[%s5 + $0xb8] sm:$0xff]
  %v465 = vld [vmem:[%s5 + $0xc0] sm:$0xff]
  %v466 = vld [vmem:[%s5 + $0xc8] sm:$0xff]
  %v467 = vld [vmem:[%s5 + $0xd0] sm:$0xff]
  %v468 = vld [vmem:[%s5 + $0xd8] sm:$0xff]
  %v469 = vld [vmem:[%s5 + $0xe0] sm:$0xff]
  %v470 = vld [vmem:[%s5 + $0xe8] sm:$0xff]
  %v471 = vld [vmem:[%s5 + $0xf0] sm:$0xff]
  %v472 = vld [vmem:[%s5 + $0xf8] sm:$0xff]
  %v473 = vld [vmem:[%s5 + $0x100] sm:$0xff]
  %v474 = vld [vmem:[%s5 + $0x108] sm:$0xff]
  %v475 = vld [vmem:[%s5 + $0x110] sm:$0xff]
  %v476 = vld [vmem:[%s5 + $0x118] sm:$0xff]
  %v477 = vld [vmem:[%s5 + $0x120] sm:$0xff]
  %v478 = vld [vmem:[%s5 + $0x128] sm:$0xff]
  %v479 = vld [vmem:[%s5 + $0x130] sm:$0xff]
  %v480 = vld [vmem:[%s5 + $0x138] sm:$0xff]
  %v481 = vld [vmem:[%s5 + $0x140] sm:$0xff]
  %v482 = vld [vmem:[%s5 + $0x148] sm:$0xff]
  %v483 = vld [vmem:[%s5 + $0x150] sm:$0xff]
  %v484 = vld [vmem:[%s5 + $0x158] sm:$0xff]
  %v485 = vld [vmem:[%s5 + $0x160] sm:$0xff]
  %v486 = vld [vmem:[%s5 + $0x168] sm:$0xff]
  %v487 = vld [vmem:[%s5 + $0x170] sm:$0xff]
  %v488 = vld [vmem:[%s5 + $0x178] sm:$0xff]
  %v489 = vld [vmem:[%s5 + $0x180] sm:$0xff]
  %v490 = vld [vmem:[%s5 + $0x188] sm:$0xff]
  %v491 = vld [vmem:[%s5 + $0x190] sm:$0xff]
  %v492 = vld [vmem:[%s5 + $0x198] sm:$0xff]
  %v493 = vld [vmem:[%s5 + $0x1a0] sm:$0xff]
  %v494 = vld [vmem:[%s5 + $0x1a8] sm:$0xff]
  %v495 = vld [vmem:[%s5 + $0x1b0] sm:$0xff]
  %v496 = vld [vmem:[%s5 + $0x1b8] sm:$0xff]
  %v497 = vld [vmem:[%s5 + $0x1c0] sm:$0xff]
  %v498 = vld [vmem:[%s5 + $0x1c8] sm:$0xff]
  %v499 = vld [vmem:[%s5 + $0x1d0] sm:$0xff]
  %v500 = vld [vmem:[%s5 + $0x1d8] sm:$0xff]
  %v501 = vld [vmem:[%s5 + $0x1e0] sm:$0xff]
  %v502 = vld [vmem:[%s5 + $0x1e8] sm:$0xff]
  %v503 = vld [vmem:[%s5 + $0x1f0] sm:$0xff]
  %v504 = vld [vmem:[%s5 + $0x1f8] sm:$0xff]
  %v505 = vld [vmem:[%s6] sm:$0xf]
  %v507 = vperm.slane %v505, 0
  %v508 = vperm.slane %v505, 1
  %v509 = vperm.slane %v505, 2
  %v510 = vperm.slane %v505, 3
  %v515 = vld [vmem:[#allocation2] sm:$0xff]
  %v516 = vld [vmem:[#allocation2 + $0x8] sm:$0xff]
  %v517 = vld [vmem:[#allocation2 + $0x10] sm:$0xff]
  %v518 = vld [vmem:[#allocation2 + $0x18] sm:$0xff]
  %519 = vmatpush.msra.mxu0 %v373
  %520 = vmatpush.msra.mxu0 %v369
  %521 = vmatpush.msra.mxu0 %v365
  %522 = vmatpush.msra.mxu0 %v361
  %523 = vmatpush.msra.mxu0 %v357
  %524 = vmatpush.msra.mxu0 %v353
  %525 = vmatpush.msra.mxu0 %v349
  %526 = vmatpush.msra.mxu0 %v345
  %527 = vmatpush.msra.mxu0 %v341
  %528 = vmatpush.msra.mxu0 %v337
  %529 = vmatpush.msra.mxu0 %v333
  %530 = vmatpush.msra.mxu0 %v329
  %531 = vmatpush.msra.mxu0 %v325
  %532 = vmatpush.msra.mxu0 %v321
  %533 = vmatpush.msra.mxu0 %v317
  %534 = vmatpush.msra.mxu0 %v313
  %535 = vmatmul.f32.gmra.mxu0 0.0
  %v536 = vpop.f32.mrf.mxu0
  %v537 = vadd.f32 0.0, %v536
  %538 = vdwg.mxu0
  %539 = vmatpush.msra.mxu0 %v374
  %540 = vmatpush.msra.mxu0 %v370
  %541 = vmatpush.msra.mxu0 %v366
  %542 = vmatpush.msra.mxu0 %v362
  %543 = vmatpush.msra.mxu0 %v358
  %544 = vmatpush.msra.mxu0 %v354
  %545 = vmatpush.msra.mxu0 %v350
  %546 = vmatpush.msra.mxu0 %v346
  %547 = vmatpush.msra.mxu0 %v342
  %548 = vmatpush.msra.mxu0 %v338
  %549 = vmatpush.msra.mxu0 %v334
  %550 = vmatpush.msra.mxu0 %v330
  %551 = vmatpush.msra.mxu0 %v326
  %552 = vmatpush.msra.mxu0 %v322
  %553 = vmatpush.msra.mxu0 %v318
  %554 = vmatpush.msra.mxu0 %v314
  %555 = vmatmul.f32.gmra.mxu0 0.0
  %v556 = vpop.f32.mrf.mxu0
  %v557 = vadd.f32 0.0, %v556
  %558 = vdwg.mxu0
  %559 = vmatpush.msra.mxu0 %v375
  %560 = vmatpush.msra.mxu0 %v371
  %561 = vmatpush.msra.mxu0 %v367
  %562 = vmatpush.msra.mxu0 %v363
  %563 = vmatpush.msra.mxu0 %v359
  %564 = vmatpush.msra.mxu0 %v355
  %565 = vmatpush.msra.mxu0 %v351
  %566 = vmatpush.msra.mxu0 %v347
  %567 = vmatpush.msra.mxu0 %v343
  %568 = vmatpush.msra.mxu0 %v339
  %569 = vmatpush.msra.mxu0 %v335
  %570 = vmatpush.msra.mxu0 %v331
  %571 = vmatpush.msra.mxu0 %v327
  %572 = vmatpush.msra.mxu0 %v323
  %573 = vmatpush.msra.mxu0 %v319
  %574 = vmatpush.msra.mxu0 %v315
  %575 = vmatmul.f32.gmra.mxu0 0.0
  %v576 = vpop.f32.mrf.mxu0
  %v577 = vadd.f32 0.0, %v576
  %578 = vdwg.mxu0
  %579 = vmatpush.msra.mxu0 %v376
  %580 = vmatpush.msra.mxu0 %v372
  %581 = vmatpush.msra.mxu0 %v368
  %582 = vmatpush.msra.mxu0 %v364
  %583 = vmatpush.msra.mxu0 %v360
  %584 = vmatpush.msra.mxu0 %v356
  %585 = vmatpush.msra.mxu0 %v352
  %586 = vmatpush.msra.mxu0 %v348
  %587 = vmatpush.msra.mxu0 %v344
  %588 = vmatpush.msra.mxu0 %v340
  %589 = vmatpush.msra.mxu0 %v336
  %590 = vmatpush.msra.mxu0 %v332
  %591 = vmatpush.msra.mxu0 %v328
  %592 = vmatpush.msra.mxu0 %v324
  %593 = vmatpush.msra.mxu0 %v320
  %594 = vmatpush.msra.mxu0 %v316
  %595 = vmatmul.f32.gmra.mxu0 0.0
  %v596 = vpop.f32.mrf.mxu0
  %v597 = vadd.f32 0.0, %v596
  %598 = vdwg.mxu0
  %v599 = vadd.f32 %v515, %v537
  %v600 = vadd.f32 %v516, %v557
  %v601 = vadd.f32 %v517, %v577
  %v602 = vadd.f32 %v518, %v597
  %v603 = vxor.u32 %v599, 2147483648
  %v604 = vxor.u32 %v600, 2147483648
  %v605 = vxor.u32 %v601, 2147483648
  %v606 = vmul.f32 %v603, 1.442695
  %v607 = vpow.pop %v606
  %v608 = vmul.f32 %v604, 1.442695
  %v609 = vpow.pop %v608
  %v610 = vmul.f32 %v605, 1.442695
  %v611 = vpow.pop %v610
  %v612 = vadd.f32 %v607, 1.0
  %v613 = vadd.f32 %v609, 1.0
  %v614 = vadd.f32 %v611, 1.0
  %v615 = vrcp.pop %v612
  %v616 = vmul.f32 %v612, %v615
  %v617 = vsub.f32 1.0, %v616
  %v618 = vmul.f32 %v615, %v617
  %v619 = vadd.f32 %v615, %v618
  %vm620 = vweird.f32 %v612
  %vm621 = vweird.f32 %v615
  %vm622 = vmor %vm620, %vm621
  %v623 = vsel %vm622, %v615, %v619
  %v624 = vand.u32 2147483647, %v612
  %vm625 = vcmp.eq.f32.partialorder %v624, 8.507059e+37
  %v626 = vand.u32 %v612, 2147483648
  %v627 = vor.u32 1.1754944e-38, %v626
  %v628 = vsel %vm625, %v627, %v623
  %v629 = vmul.f32 1.0, %v628
  %v630 = vrcp.pop %v613
  %v631 = vmul.f32 %v613, %v630
  %v632 = vsub.f32 1.0, %v631
  %v633 = vmul.f32 %v630, %v632
  %v634 = vadd.f32 %v630, %v633
  %vm635 = vweird.f32 %v613
  %vm636 = vweird.f32 %v630
  %vm637 = vmor %vm635, %vm636
  %v638 = vsel %vm637, %v630, %v634
  %v639 = vand.u32 2147483647, %v613
  %vm640 = vcmp.eq.f32.partialorder %v639, 8.507059e+37
  %v641 = vand.u32 %v613, 2147483648
  %v642 = vor.u32 1.1754944e-38, %v641
  %v643 = vsel %vm640, %v642, %v638
  %v644 = vmul.f32 1.0, %v643
  %v645 = vrcp.pop %v614
  %v646 = vmul.f32 %v614, %v645
  %v647 = vsub.f32 1.0, %v646
  %v648 = vmul.f32 %v645, %v647
  %v649 = vadd.f32 %v645, %v648
  %vm650 = vweird.f32 %v614
  %vm651 = vweird.f32 %v645
  %vm652 = vmor %vm650, %vm651
  %v653 = vsel %vm652, %v645, %v649
  %v654 = vand.u32 2147483647, %v614
  %vm655 = vcmp.eq.f32.partialorder %v654, 8.507059e+37
  %v656 = vand.u32 %v614, 2147483648
  %v657 = vor.u32 1.1754944e-38, %v656
  %v658 = vsel %vm655, %v657, %v653
  %v659 = vmul.f32 1.0, %v658
  %v660 = vtanh.pop %v602
  %v661 = vmul.f32 %v644, 0.0
  %v662 = vmul.f32 %v629, %v660
  %v663 = vadd.f32 %v661, %v662
  %v664 = vtanh.pop %v663
  %v665 = vmul.f32 %v659, %v664
  %666 = vmatpush.msra.mxu0 %v501
  %667 = vmatpush.msra.mxu0 %v497
  %668 = vmatpush.msra.mxu0 %v493
  %669 = vmatpush.msra.mxu0 %v489
  %670 = vmatpush.msra.mxu0 %v485
  %671 = vmatpush.msra.mxu0 %v481
  %672 = vmatpush.msra.mxu0 %v477
  %673 = vmatpush.msra.mxu0 %v473
  %674 = vmatpush.msra.mxu0 %v469
  %675 = vmatpush.msra.mxu0 %v465
  %676 = vmatpush.msra.mxu0 %v461
  %677 = vmatpush.msra.mxu0 %v457
  %678 = vmatpush.msra.mxu0 %v453
  %679 = vmatpush.msra.mxu0 %v449
  %680 = vmatpush.msra.mxu0 %v445
  %681 = vmatpush.msra.mxu0 %v441
  %682 = vmatmul.f32.gmra.mxu0 0.0
  %v683 = vpop.f32.mrf.mxu0
  %v684 = vadd.f32 0.0, %v683
  %685 = vdwg.mxu0
  %686 = vmatpush.msra.mxu0 %v502
  %687 = vmatpush.msra.mxu0 %v498
  %688 = vmatpush.msra.mxu0 %v494
  %689 = vmatpush.msra.mxu0 %v490
  %690 = vmatpush.msra.mxu0 %v486
  %691 = vmatpush.msra.mxu0 %v482
  %692 = vmatpush.msra.mxu0 %v478
  %693 = vmatpush.msra.mxu0 %v474
  %694 = vmatpush.msra.mxu0 %v470
  %695 = vmatpush.msra.mxu0 %v466
  %696 = vmatpush.msra.mxu0 %v462
  %697 = vmatpush.msra.mxu0 %v458
  %698 = vmatpush.msra.mxu0 %v454
  %699 = vmatpush.msra.mxu0 %v450
  %700 = vmatpush.msra.mxu0 %v446
  %701 = vmatpush.msra.mxu0 %v442
  %702 = vmatmul.f32.gmra.mxu0 0.0
  %v703 = vpop.f32.mrf.mxu0
  %v704 = vadd.f32 0.0, %v703
  %705 = vdwg.mxu0
  %706 = vmatpush.msra.mxu0 %v503
  %707 = vmatpush.msra.mxu0 %v499
  %708 = vmatpush.msra.mxu0 %v495
  %709 = vmatpush.msra.mxu0 %v491
  %710 = vmatpush.msra.mxu0 %v487
  %711 = vmatpush.msra.mxu0 %v483
  %712 = vmatpush.msra.mxu0 %v479
  %713 = vmatpush.msra.mxu0 %v475
  %714 = vmatpush.msra.mxu0 %v471
  %715 = vmatpush.msra.mxu0 %v467
  %716 = vmatpush.msra.mxu0 %v463
  %717 = vmatpush.msra.mxu0 %v459
  %718 = vmatpush.msra.mxu0 %v455
  %719 = vmatpush.msra.mxu0 %v451
  %720 = vmatpush.msra.mxu0 %v447
  %721 = vmatpush.msra.mxu0 %v443
  %722 = vmatmul.f32.gmra.mxu0 0.0
  %v723 = vpop.f32.mrf.mxu0
  %v724 = vadd.f32 0.0, %v723
  %725 = vdwg.mxu0
  %726 = vmatpush.msra.mxu0 %v504
  %727 = vmatpush.msra.mxu0 %v500
  %728 = vmatpush.msra.mxu0 %v496
  %729 = vmatpush.msra.mxu0 %v492
  %730 = vmatpush.msra.mxu0 %v488
  %731 = vmatpush.msra.mxu0 %v484
  %732 = vmatpush.msra.mxu0 %v480
  %733 = vmatpush.msra.mxu0 %v476
  %734 = vmatpush.msra.mxu0 %v472
  %735 = vmatpush.msra.mxu0 %v468
  %736 = vmatpush.msra.mxu0 %v464
  %737 = vmatpush.msra.mxu0 %v460
  %738 = vmatpush.msra.mxu0 %v456
  %739 = vmatpush.msra.mxu0 %v452
  %740 = vmatpush.msra.mxu0 %v448
  %741 = vmatpush.msra.mxu0 %v444
  %742 = vmatmul.f32.gmra.mxu0 0.0
  %v743 = vpop.f32.mrf.mxu0
  %v744 = vadd.f32 0.0, %v743
  %745 = vdwg.mxu0
  %746 = vmatpush.msra.mxu0 %v437
  %747 = vmatpush.msra.mxu0 %v433
  %748 = vmatpush.msra.mxu0 %v429
  %749 = vmatpush.msra.mxu0 %v425
  %750 = vmatpush.msra.mxu0 %v421
  %751 = vmatpush.msra.mxu0 %v417
  %752 = vmatpush.msra.mxu0 %v413
  %753 = vmatpush.msra.mxu0 %v409
  %754 = vmatpush.msra.mxu0 %v405
  %755 = vmatpush.msra.mxu0 %v401
  %756 = vmatpush.msra.mxu0 %v397
  %757 = vmatpush.msra.mxu0 %v393
  %758 = vmatpush.msra.mxu0 %v389
  %759 = vmatpush.msra.mxu0 %v385
  %760 = vmatpush.msra.mxu0 %v381
  %761 = vmatpush.msra.mxu0 %v377
  %762 = vmatmul.f32.gmra.mxu0 %v665
  %v763 = vpop.f32.mrf.mxu0
  %v764 = vadd.f32 %v684, %v763
  %765 = vdwg.mxu0
  %766 = vmatpush.msra.mxu0 %v438
  %767 = vmatpush.msra.mxu0 %v434
  %768 = vmatpush.msra.mxu0 %v430
  %769 = vmatpush.msra.mxu0 %v426
  %770 = vmatpush.msra.mxu0 %v422
  %771 = vmatpush.msra.mxu0 %v418
  %772 = vmatpush.msra.mxu0 %v414
  %773 = vmatpush.msra.mxu0 %v410
  %774 = vmatpush.msra.mxu0 %v406
  %775 = vmatpush.msra.mxu0 %v402
  %776 = vmatpush.msra.mxu0 %v398
  %777 = vmatpush.msra.mxu0 %v394
  %778 = vmatpush.msra.mxu0 %v390
  %779 = vmatpush.msra.mxu0 %v386
  %780 = vmatpush.msra.mxu0 %v382
  %781 = vmatpush.msra.mxu0 %v378
  %782 = vmatmul.f32.gmra.mxu0 %v665
  %v783 = vpop.f32.mrf.mxu0
  %v784 = vadd.f32 %v704, %v783
  %785 = vdwg.mxu0
  %786 = vmatpush.msra.mxu0 %v439
  %787 = vmatpush.msra.mxu0 %v435
  %788 = vmatpush.msra.mxu0 %v431
  %789 = vmatpush.msra.mxu0 %v427
  %790 = vmatpush.msra.mxu0 %v423
  %791 = vmatpush.msra.mxu0 %v419
  %792 = vmatpush.msra.mxu0 %v415
  %793 = vmatpush.msra.mxu0 %v411
  %794 = vmatpush.msra.mxu0 %v407
  %795 = vmatpush.msra.mxu0 %v403
  %796 = vmatpush.msra.mxu0 %v399
  %797 = vmatpush.msra.mxu0 %v395
  %798 = vmatpush.msra.mxu0 %v391
  %799 = vmatpush.msra.mxu0 %v387
  %800 = vmatpush.msra.mxu0 %v383
  %801 = vmatpush.msra.mxu0 %v379
  %802 = vmatmul.f32.gmra.mxu0 %v665
  %v803 = vpop.f32.mrf.mxu0
  %v804 = vadd.f32 %v724, %v803
  %805 = vdwg.mxu0
  %806 = vmatpush.msra.mxu0 %v440
  %807 = vmatpush.msra.mxu0 %v436
  %808 = vmatpush.msra.mxu0 %v432
  %809 = vmatpush.msra.mxu0 %v428
  %810 = vmatpush.msra.mxu0 %v424
  %811 = vmatpush.msra.mxu0 %v420
  %812 = vmatpush.msra.mxu0 %v416
  %813 = vmatpush.msra.mxu0 %v412
  %814 = vmatpush.msra.mxu0 %v408
  %815 = vmatpush.msra.mxu0 %v404
  %816 = vmatpush.msra.mxu0 %v400
  %817 = vmatpush.msra.mxu0 %v396
  %818 = vmatpush.msra.mxu0 %v392
  %819 = vmatpush.msra.mxu0 %v388
  %820 = vmatpush.msra.mxu0 %v384
  %821 = vmatpush.msra.mxu0 %v380
  %822 = vmatmul.f32.gmra.mxu0 %v665
  %v823 = vpop.f32.mrf.mxu0
  %v824 = vadd.f32 %v744, %v823
  %825 = vdwg.mxu0
  %v826 = vadd.f32 %v764, %v507
  %v827 = vadd.f32 %v784, %v508
  %v828 = vadd.f32 %v804, %v509
  %v829 = vadd.f32 %v824, %v510
  %v830 = vxor.u32 %v826, 2147483648
  %v831 = vxor.u32 %v827, 2147483648
  %v832 = vxor.u32 %v828, 2147483648
  %v833 = vmul.f32 %v830, 1.442695
  %v834 = vpow.pop %v833
  %v835 = vmul.f32 %v831, 1.442695
  %v836 = vpow.pop %v835
  %v837 = vmul.f32 %v832, 1.442695
  %v838 = vpow.pop %v837
  %v839 = vadd.f32 %v834, 1.0
  %v840 = vadd.f32 %v836, 1.0
  %v841 = vadd.f32 %v838, 1.0
  %v842 = vrcp.pop %v839
  %v843 = vmul.f32 %v839, %v842
  %v844 = vsub.f32 1.0, %v843
  %v845 = vmul.f32 %v842, %v844
  %v846 = vadd.f32 %v842, %v845
  %vm847 = vweird.f32 %v839
  %vm848 = vweird.f32 %v842
  %vm849 = vmor %vm847, %vm848
  %v850 = vsel %vm849, %v842, %v846
  %v851 = vand.u32 2147483647, %v839
  %vm852 = vcmp.eq.f32.partialorder %v851, 8.507059e+37
  %v853 = vand.u32 %v839, 2147483648
  %v854 = vor.u32 1.1754944e-38, %v853
  %v855 = vsel %vm852, %v854, %v850
  %v856 = vmul.f32 1.0, %v855
  %v857 = vrcp.pop %v840
  %v858 = vmul.f32 %v840, %v857
  %v859 = vsub.f32 1.0, %v858
  %v860 = vmul.f32 %v857, %v859
  %v861 = vadd.f32 %v857, %v860
  %vm862 = vweird.f32 %v840
  %vm863 = vweird.f32 %v857
  %vm864 = vmor %vm862, %vm863
  %v865 = vsel %vm864, %v857, %v861
  %v866 = vand.u32 2147483647, %v840
  %vm867 = vcmp.eq.f32.partialorder %v866, 8.507059e+37
  %v868 = vand.u32 %v840, 2147483648
  %v869 = vor.u32 1.1754944e-38, %v868
  %v870 = vsel %vm867, %v869, %v865
  %v871 = vmul.f32 1.0, %v870
  %v872 = vrcp.pop %v841
  %v873 = vmul.f32 %v841, %v872
  %v874 = vsub.f32 1.0, %v873
  %v875 = vmul.f32 %v872, %v874
  %v876 = vadd.f32 %v872, %v875
  %vm877 = vweird.f32 %v841
  %vm878 = vweird.f32 %v872
  %vm879 = vmor %vm877, %vm878
  %v880 = vsel %vm879, %v872, %v876
  %v881 = vand.u32 2147483647, %v841
  %vm882 = vcmp.eq.f32.partialorder %v881, 8.507059e+37
  %v883 = vand.u32 %v841, 2147483648
  %v884 = vor.u32 1.1754944e-38, %v883
  %v885 = vsel %vm882, %v884, %v880
  %v886 = vmul.f32 1.0, %v885
  %v887 = vtanh.pop %v829
  %v888 = vmul.f32 %v871, 0.0
  %v889 = vmul.f32 %v856, %v887
  %v890 = vadd.f32 %v888, %v889
  %v891 = vtanh.pop %v890
  %v892 = vmul.f32 %v886, %v891
  %893 = vst [vmem:[#allocation3] sm:$0xff] %v892
  %s894 = scalar_lea.vmem [#allocation2], 32
  %v895 = vld [vmem:[%s894] sm:$0xff]
  %v896 = vld [vmem:[%s894 + $0x8] sm:$0xff]
  %v897 = vld [vmem:[%s894 + $0x10] sm:$0xff]
  %v898 = vld [vmem:[%s894 + $0x18] sm:$0xff]
  %899 = vmatpush.msra.mxu0 %v373
  %900 = vmatpush.msra.mxu0 %v369
  %901 = vmatpush.msra.mxu0 %v365
  %902 = vmatpush.msra.mxu0 %v361
  %903 = vmatpush.msra.mxu0 %v357
  %904 = vmatpush.msra.mxu0 %v353
  %905 = vmatpush.msra.mxu0 %v349
  %906 = vmatpush.msra.mxu0 %v345
  %907 = vmatpush.msra.mxu0 %v341
  %908 = vmatpush.msra.mxu0 %v337
  %909 = vmatpush.msra.mxu0 %v333
  %910 = vmatpush.msra.mxu0 %v329
  %911 = vmatpush.msra.mxu0 %v325
  %912 = vmatpush.msra.mxu0 %v321
  %913 = vmatpush.msra.mxu0 %v317
  %914 = vmatpush.msra.mxu0 %v313
  %915 = vmatmul.f32.gmra.mxu0 %v665
  %v916 = vpop.f32.mrf.mxu0
  %v917 = vadd.f32 0.0, %v916
  %918 = vdwg.mxu0
  %919 = vmatpush.msra.mxu0 %v374
  %920 = vmatpush.msra.mxu0 %v370
  %921 = vmatpush.msra.mxu0 %v366
  %922 = vmatpush.msra.mxu0 %v362
  %923 = vmatpush.msra.mxu0 %v358
  %924 = vmatpush.msra.mxu0 %v354
  %925 = vmatpush.msra.mxu0 %v350
  %926 = vmatpush.msra.mxu0 %v346
  %927 = vmatpush.msra.mxu0 %v342
  %928 = vmatpush.msra.mxu0 %v338
  %929 = vmatpush.msra.mxu0 %v334
  %930 = vmatpush.msra.mxu0 %v330
  %931 = vmatpush.msra.mxu0 %v326
  %932 = vmatpush.msra.mxu0 %v322
  %933 = vmatpush.msra.mxu0 %v318
  %934 = vmatpush.msra.mxu0 %v314
  %935 = vmatmul.f32.gmra.mxu0 %v665
  %v936 = vpop.f32.mrf.mxu0
  %v937 = vadd.f32 0.0, %v936
  %938 = vdwg.mxu0
  %939 = vmatpush.msra.mxu0 %v375
  %940 = vmatpush.msra.mxu0 %v371
  %941 = vmatpush.msra.mxu0 %v367
  %942 = vmatpush.msra.mxu0 %v363
  %943 = vmatpush.msra.mxu0 %v359
  %944 = vmatpush.msra.mxu0 %v355
  %945 = vmatpush.msra.mxu0 %v351
  %946 = vmatpush.msra.mxu0 %v347
  %947 = vmatpush.msra.mxu0 %v343
  %948 = vmatpush.msra.mxu0 %v339
  %949 = vmatpush.msra.mxu0 %v335
  %950 = vmatpush.msra.mxu0 %v331
  %951 = vmatpush.msra.mxu0 %v327
  %952 = vmatpush.msra.mxu0 %v323
  %953 = vmatpush.msra.mxu0 %v319
  %954 = vmatpush.msra.mxu0 %v315
  %955 = vmatmul.f32.gmra.mxu0 %v665
  %v956 = vpop.f32.mrf.mxu0
  %v957 = vadd.f32 0.0, %v956
  %958 = vdwg.mxu0
  %959 = vmatpush.msra.mxu0 %v376
  %960 = vmatpush.msra.mxu0 %v372
  %961 = vmatpush.msra.mxu0 %v368
  %962 = vmatpush.msra.mxu0 %v364
  %963 = vmatpush.msra.mxu0 %v360
  %964 = vmatpush.msra.mxu0 %v356
  %965 = vmatpush.msra.mxu0 %v352
  %966 = vmatpush.msra.mxu0 %v348
  %967 = vmatpush.msra.mxu0 %v344
  %968 = vmatpush.msra.mxu0 %v340
  %969 = vmatpush.msra.mxu0 %v336
  %970 = vmatpush.msra.mxu0 %v332
  %971 = vmatpush.msra.mxu0 %v328
  %972 = vmatpush.msra.mxu0 %v324
  %973 = vmatpush.msra.mxu0 %v320
  %974 = vmatpush.msra.mxu0 %v316
  %975 = vmatmul.f32.gmra.mxu0 %v665
  %v976 = vpop.f32.mrf.mxu0
  %v977 = vadd.f32 0.0, %v976
  %978 = vdwg.mxu0
  %v979 = vadd.f32 %v895, %v917
  %v980 = vadd.f32 %v896, %v937
  %v981 = vadd.f32 %v897, %v957
  %v982 = vadd.f32 %v898, %v977
  %v983 = vxor.u32 %v979, 2147483648
  %v984 = vxor.u32 %v980, 2147483648
  %v985 = vxor.u32 %v981, 2147483648
  %v986 = vmul.f32 %v983, 1.442695
  %v987 = vpow.pop %v986
  %v988 = vmul.f32 %v984, 1.442695
  %v989 = vpow.pop %v988
  %v990 = vmul.f32 %v985, 1.442695
  %v991 = vpow.pop %v990
  %v992 = vadd.f32 %v987, 1.0
  %v993 = vadd.f32 %v989, 1.0
  %v994 = vadd.f32 %v991, 1.0
  %v995 = vrcp.pop %v992
  %v996 = vmul.f32 %v992, %v995
  %v997 = vsub.f32 1.0, %v996
  %v998 = vmul.f32 %v995, %v997
  %v999 = vadd.f32 %v995, %v998
  %vm1000 = vweird.f32 %v992
  %vm1001 = vweird.f32 %v995
  %vm1002 = vmor %vm1000, %vm1001
  %v1003 = vsel %vm1002, %v995, %v999
  %v1004 = vand.u32 2147483647, %v992
  %vm1005 = vcmp.eq.f32.partialorder %v1004, 8.507059e+37
  %v1006 = vand.u32 %v992, 2147483648
  %v1007 = vor.u32 1.1754944e-38, %v1006
  %v1008 = vsel %vm1005, %v1007, %v1003
  %v1009 = vmul.f32 1.0, %v1008
  %v1010 = vrcp.pop %v993
  %v1011 = vmul.f32 %v993, %v1010
  %v1012 = vsub.f32 1.0, %v1011
  %v1013 = vmul.f32 %v1010, %v1012
  %v1014 = vadd.f32 %v1010, %v1013
  %vm1015 = vweird.f32 %v993
  %vm1016 = vweird.f32 %v1010
  %vm1017 = vmor %vm1015, %vm1016
  %v1018 = vsel %vm1017, %v1010, %v1014
  %v1019 = vand.u32 2147483647, %v993
  %vm1020 = vcmp.eq.f32.partialorder %v1019, 8.507059e+37
  %v1021 = vand.u32 %v993, 2147483648
  %v1022 = vor.u32 1.1754944e-38, %v1021
  %v1023 = vsel %vm1020, %v1022, %v1018
  %v1024 = vmul.f32 1.0, %v1023
  %v1025 = vrcp.pop %v994
  %v1026 = vmul.f32 %v994, %v1025
  %v1027 = vsub.f32 1.0, %v1026
  %v1028 = vmul.f32 %v1025, %v1027
  %v1029 = vadd.f32 %v1025, %v1028
  %vm1030 = vweird.f32 %v994
  %vm1031 = vweird.f32 %v1025
  %vm1032 = vmor %vm1030, %vm1031
  %v1033 = vsel %vm1032, %v1025, %v1029
  %v1034 = vand.u32 2147483647, %v994
  %vm1035 = vcmp.eq.f32.partialorder %v1034, 8.507059e+37
  %v1036 = vand.u32 %v994, 2147483648
  %v1037 = vor.u32 1.1754944e-38, %v1036
  %v1038 = vsel %vm1035, %v1037, %v1033
  %v1039 = vmul.f32 1.0, %v1038
  %v1040 = vtanh.pop %v982
  %v1041 = vmul.f32 %v1024, %v663
  %v1042 = vmul.f32 %v1009, %v1040
  %v1043 = vadd.f32 %v1041, %v1042
  %v1044 = vtanh.pop %v1043
  %v1045 = vmul.f32 %v1039, %v1044
  %1046 = vmatpush.msra.mxu0 %v501
  %1047 = vmatpush.msra.mxu0 %v497
  %1048 = vmatpush.msra.mxu0 %v493
  %1049 = vmatpush.msra.mxu0 %v489
  %1050 = vmatpush.msra.mxu0 %v485
  %1051 = vmatpush.msra.mxu0 %v481
  %1052 = vmatpush.msra.mxu0 %v477
  %1053 = vmatpush.msra.mxu0 %v473
  %1054 = vmatpush.msra.mxu0 %v469
  %1055 = vmatpush.msra.mxu0 %v465
  %1056 = vmatpush.msra.mxu0 %v461
  %1057 = vmatpush.msra.mxu0 %v457
  %1058 = vmatpush.msra.mxu0 %v453
  %1059 = vmatpush.msra.mxu0 %v449
  %1060 = vmatpush.msra.mxu0 %v445
  %1061 = vmatpush.msra.mxu0 %v441
  %1062 = vmatmul.f32.gmra.mxu0 %v892
  %v1063 = vpop.f32.mrf.mxu0
  %v1064 = vadd.f32 0.0, %v1063
  %1065 = vdwg.mxu0
  %1066 = vmatpush.msra.mxu0 %v502
  %1067 = vmatpush.msra.mxu0 %v498
  %1068 = vmatpush.msra.mxu0 %v494
  %1069 = vmatpush.msra.mxu0 %v490
  %1070 = vmatpush.msra.mxu0 %v486
  %1071 = vmatpush.msra.mxu0 %v482
  %1072 = vmatpush.msra.mxu0 %v478
  %1073 = vmatpush.msra.mxu0 %v474
  %1074 = vmatpush.msra.mxu0 %v470
  %1075 = vmatpush.msra.mxu0 %v466
  %1076 = vmatpush.msra.mxu0 %v462
  %1077 = vmatpush.msra.mxu0 %v458
  %1078 = vmatpush.msra.mxu0 %v454
  %1079 = vmatpush.msra.mxu0 %v450
  %1080 = vmatpush.msra.mxu0 %v446
  %1081 = vmatpush.msra.mxu0 %v442
  %1082 = vmatmul.f32.gmra.mxu0 %v892
  %v1083 = vpop.f32.mrf.mxu0
  %v1084 = vadd.f32 0.0, %v1083
  %1085 = vdwg.mxu0
  %1086 = vmatpush.msra.mxu0 %v503
  %1087 = vmatpush.msra.mxu0 %v499
  %1088 = vmatpush.msra.mxu0 %v495
  %1089 = vmatpush.msra.mxu0 %v491
  %1090 = vmatpush.msra.mxu0 %v487
  %1091 = vmatpush.msra.mxu0 %v483
  %1092 = vmatpush.msra.mxu0 %v479
  %1093 = vmatpush.msra.mxu0 %v475
  %1094 = vmatpush.msra.mxu0 %v471
  %1095 = vmatpush.msra.mxu0 %v467
  %1096 = vmatpush.msra.mxu0 %v463
  %1097 = vmatpush.msra.mxu0 %v459
  %1098 = vmatpush.msra.mxu0 %v455
  %1099 = vmatpush.msra.mxu0 %v451
  %1100 = vmatpush.msra.mxu0 %v447
  %1101 = vmatpush.msra.mxu0 %v443
  %1102 = vmatmul.f32.gmra.mxu0 %v892
  %v1103 = vpop.f32.mrf.mxu0
  %v1104 = vadd.f32 0.0, %v1103
  %1105 = vdwg.mxu0
  %1106 = vmatpush.msra.mxu0 %v504
  %1107 = vmatpush.msra.mxu0 %v500
  %1108 = vmatpush.msra.mxu0 %v496
  %1109 = vmatpush.msra.mxu0 %v492
  %1110 = vmatpush.msra.mxu0 %v488
  %1111 = vmatpush.msra.mxu0 %v484
  %1112 = vmatpush.msra.mxu0 %v480
  %1113 = vmatpush.msra.mxu0 %v476
  %1114 = vmatpush.msra.mxu0 %v472
  %1115 = vmatpush.msra.mxu0 %v468
  %1116 = vmatpush.msra.mxu0 %v464
  %1117 = vmatpush.msra.mxu0 %v460
  %1118 = vmatpush.msra.mxu0 %v456
  %1119 = vmatpush.msra.mxu0 %v452
  %1120 = vmatpush.msra.mxu0 %v448
  %1121 = vmatpush.msra.mxu0 %v444
  %1122 = vmatmul.f32.gmra.mxu0 %v892
  %v1123 = vpop.f32.mrf.mxu0
  %v1124 = vadd.f32 0.0, %v1123
  %1125 = vdwg.mxu0
  %1126 = vmatpush.msra.mxu0 %v437
  %1127 = vmatpush.msra.mxu0 %v433
  %1128 = vmatpush.msra.mxu0 %v429
  %1129 = vmatpush.msra.mxu0 %v425
  %1130 = vmatpush.msra.mxu0 %v421
  %1131 = vmatpush.msra.mxu0 %v417
  %1132 = vmatpush.msra.mxu0 %v413
  %1133 = vmatpush.msra.mxu0 %v409
  %1134 = vmatpush.msra.mxu0 %v405
  %1135 = vmatpush.msra.mxu0 %v401
  %1136 = vmatpush.msra.mxu0 %v397
  %1137 = vmatpush.msra.mxu0 %v393
  %1138 = vmatpush.msra.mxu0 %v389
  %1139 = vmatpush.msra.mxu0 %v385
  %1140 = vmatpush.msra.mxu0 %v381
  %1141 = vmatpush.msra.mxu0 %v377
  %1142 = vmatmul.f32.gmra.mxu0 %v1045
  %v1143 = vpop.f32.mrf.mxu0
  %v1144 = vadd.f32 %v1064, %v1143
  %1145 = vdwg.mxu0
  %1146 = vmatpush.msra.mxu0 %v438
  %1147 = vmatpush.msra.mxu0 %v434
  %1148 = vmatpush.msra.mxu0 %v430
  %1149 = vmatpush.msra.mxu0 %v426
  %1150 = vmatpush.msra.mxu0 %v422
  %1151 = vmatpush.msra.mxu0 %v418
  %1152 = vmatpush.msra.mxu0 %v414
  %1153 = vmatpush.msra.mxu0 %v410
  %1154 = vmatpush.msra.mxu0 %v406
  %1155 = vmatpush.msra.mxu0 %v402
  %1156 = vmatpush.msra.mxu0 %v398
  %1157 = vmatpush.msra.mxu0 %v394
  %1158 = vmatpush.msra.mxu0 %v390
  %1159 = vmatpush.msra.mxu0 %v386
  %1160 = vmatpush.msra.mxu0 %v382
  %1161 = vmatpush.msra.mxu0 %v378
  %1162 = vmatmul.f32.gmra.mxu0 %v1045
  %v1163 = vpop.f32.mrf.mxu0
  %v1164 = vadd.f32 %v1084, %v1163
  %1165 = vdwg.mxu0
  %1166 = vmatpush.msra.mxu0 %v439
  %1167 = vmatpush.msra.mxu0 %v435
  %1168 = vmatpush.msra.mxu0 %v431
  %1169 = vmatpush.msra.mxu0 %v427
  %1170 = vmatpush.msra.mxu0 %v423
  %1171 = vmatpush.msra.mxu0 %v419
  %1172 = vmatpush.msra.mxu0 %v415
  %1173 = vmatpush.msra.mxu0 %v411
  %1174 = vmatpush.msra.mxu0 %v407
  %1175 = vmatpush.msra.mxu0 %v403
  %1176 = vmatpush.msra.mxu0 %v399
  %1177 = vmatpush.msra.mxu0 %v395
  %1178 = vmatpush.msra.mxu0 %v391
  %1179 = vmatpush.msra.mxu0 %v387
  %1180 = vmatpush.msra.mxu0 %v383
  %1181 = vmatpush.msra.mxu0 %v379
  %1182 = vmatmul.f32.gmra.mxu0 %v1045
  %v1183 = vpop.f32.mrf.mxu0
  %v1184 = vadd.f32 %v1104, %v1183
  %1185 = vdwg.mxu0
  %1186 = vmatpush.msra.mxu0 %v440
  %1187 = vmatpush.msra.mxu0 %v436
  %1188 = vmatpush.msra.mxu0 %v432
  %1189 = vmatpush.msra.mxu0 %v428
  %1190 = vmatpush.msra.mxu0 %v424
  %1191 = vmatpush.msra.mxu0 %v420
  %1192 = vmatpush.msra.mxu0 %v416
  %1193 = vmatpush.msra.mxu0 %v412
  %1194 = vmatpush.msra.mxu0 %v408
  %1195 = vmatpush.msra.mxu0 %v404
  %1196 = vmatpush.msra.mxu0 %v400
  %1197 = vmatpush.msra.mxu0 %v396
  %1198 = vmatpush.msra.mxu0 %v392
  %1199 = vmatpush.msra.mxu0 %v388
  %1200 = vmatpush.msra.mxu0 %v384
  %1201 = vmatpush.msra.mxu0 %v380
  %1202 = vmatmul.f32.gmra.mxu0 %v1045
  %v1203 = vpop.f32.mrf.mxu0
  %v1204 = vadd.f32 %v1124, %v1203
  %1205 = vdwg.mxu0
  %v1206 = vadd.f32 %v1144, %v507
  %v1207 = vadd.f32 %v1164, %v508
  %v1208 = vadd.f32 %v1184, %v509
  %v1209 = vadd.f32 %v1204, %v510
  %v1210 = vxor.u32 %v1206, 2147483648
  %v1211 = vxor.u32 %v1207, 2147483648
  %v1212 = vxor.u32 %v1208, 2147483648
  %v1213 = vmul.f32 %v1210, 1.442695
  %v1214 = vpow.pop %v1213
  %v1215 = vmul.f32 %v1211, 1.442695
  %v1216 = vpow.pop %v1215
  %v1217 = vmul.f32 %v1212, 1.442695
  %v1218 = vpow.pop %v1217
  %v1219 = vadd.f32 %v1214, 1.0
  %v1220 = vadd.f32 %v1216, 1.0
  %v1221 = vadd.f32 %v1218, 1.0
  %v1222 = vrcp.pop %v1219
  %v1223 = vmul.f32 %v1219, %v1222
  %v1224 = vsub.f32 1.0, %v1223
  %v1225 = vmul.f32 %v1222, %v1224
  %v1226 = vadd.f32 %v1222, %v1225
  %vm1227 = vweird.f32 %v1219
  %vm1228 = vweird.f32 %v1222
  %vm1229 = vmor %vm1227, %vm1228
  %v1230 = vsel %vm1229, %v1222, %v1226
  %v1231 = vand.u32 2147483647, %v1219
  %vm1232 = vcmp.eq.f32.partialorder %v1231, 8.507059e+37
  %v1233 = vand.u32 %v1219, 2147483648
  %v1234 = vor.u32 1.1754944e-38, %v1233
  %v1235 = vsel %vm1232, %v1234, %v1230
  %v1236 = vmul.f32 1.0, %v1235
  %v1237 = vrcp.pop %v1220
  %v1238 = vmul.f32 %v1220, %v1237
  %v1239 = vsub.f32 1.0, %v1238
  %v1240 = vmul.f32 %v1237, %v1239
  %v1241 = vadd.f32 %v1237, %v1240
  %vm1242 = vweird.f32 %v1220
  %vm1243 = vweird.f32 %v1237
  %vm1244 = vmor %vm1242, %vm1243
  %v1245 = vsel %vm1244, %v1237, %v1241
  %v1246 = vand.u32 2147483647, %v1220
  %vm1247 = vcmp.eq.f32.partialorder %v1246, 8.507059e+37
  %v1248 = vand.u32 %v1220, 2147483648
  %v1249 = vor.u32 1.1754944e-38, %v1248
  %v1250 = vsel %vm1247, %v1249, %v1245
  %v1251 = vmul.f32 1.0, %v1250
  %v1252 = vrcp.pop %v1221
  %v1253 = vmul.f32 %v1221, %v1252
  %v1254 = vsub.f32 1.0, %v1253
  %v1255 = vmul.f32 %v1252, %v1254
  %v1256 = vadd.f32 %v1252, %v1255
  %vm1257 = vweird.f32 %v1221
  %vm1258 = vweird.f32 %v1252
  %vm1259 = vmor %vm1257, %vm1258
  %v1260 = vsel %vm1259, %v1252, %v1256
  %v1261 = vand.u32 2147483647, %v1221
  %vm1262 = vcmp.eq.f32.partialorder %v1261, 8.507059e+37
  %v1263 = vand.u32 %v1221, 2147483648
  %v1264 = vor.u32 1.1754944e-38, %v1263
  %v1265 = vsel %vm1262, %v1264, %v1260
  %v1266 = vmul.f32 1.0, %v1265
  %v1267 = vtanh.pop %v1209
  %v1268 = vmul.f32 %v1251, %v890
  %v1269 = vmul.f32 %v1236, %v1267
  %v1270 = vadd.f32 %v1268, %v1269
  %v1271 = vtanh.pop %v1270
  %v1272 = vmul.f32 %v1266, %v1271
  %s1273 = scalar_lea.vmem [#allocation3], 8
  %1274 = vst [vmem:[%s1273] sm:$0xff] %v1272
  %s1275 = scalar_lea.vmem [#allocation2], 64
  %v1276 = vld [vmem:[%s1275] sm:$0xff]
  %v1277 = vld [vmem:[%s1275 + $0x8] sm:$0xff]
  %v1278 = vld [vmem:[%s1275 + $0x10] sm:$0xff]
  %v1279 = vld [vmem:[%s1275 + $0x18] sm:$0xff]
  %1280 = vmatpush.msra.mxu0 %v373
  %1281 = vmatpush.msra.mxu0 %v369
  %1282 = vmatpush.msra.mxu0 %v365
  %1283 = vmatpush.msra.mxu0 %v361
  %1284 = vmatpush.msra.mxu0 %v357
  %1285 = vmatpush.msra.mxu0 %v353
  %1286 = vmatpush.msra.mxu0 %v349
  %1287 = vmatpush.msra.mxu0 %v345
  %1288 = vmatpush.msra.mxu0 %v341
  %1289 = vmatpush.msra.mxu0 %v337
  %1290 = vmatpush.msra.mxu0 %v333
  %1291 = vmatpush.msra.mxu0 %v329
  %1292 = vmatpush.msra.mxu0 %v325
  %1293 = vmatpush.msra.mxu0 %v321
  %1294 = vmatpush.msra.mxu0 %v317
  %1295 = vmatpush.msra.mxu0 %v313
  %1296 = vmatmul.f32.gmra.mxu0 %v1045
  %v1297 = vpop.f32.mrf.mxu0
  %v1298 = vadd.f32 0.0, %v1297
  %1299 = vdwg.mxu0
  %1300 = vmatpush.msra.mxu0 %v374
  %1301 = vmatpush.msra.mxu0 %v370
  %1302 = vmatpush.msra.mxu0 %v366
  %1303 = vmatpush.msra.mxu0 %v362
  %1304 = vmatpush.msra.mxu0 %v358
  %1305 = vmatpush.msra.mxu0 %v354
  %1306 = vmatpush.msra.mxu0 %v350
  %1307 = vmatpush.msra.mxu0 %v346
  %1308 = vmatpush.msra.mxu0 %v342
  %1309 = vmatpush.msra.mxu0 %v338
  %1310 = vmatpush.msra.mxu0 %v334
  %1311 = vmatpush.msra.mxu0 %v330
  %1312 = vmatpush.msra.mxu0 %v326
  %1313 = vmatpush.msra.mxu0 %v322
  %1314 = vmatpush.msra.mxu0 %v318
  %1315 = vmatpush.msra.mxu0 %v314
  %1316 = vmatmul.f32.gmra.mxu0 %v1045
  %v1317 = vpop.f32.mrf.mxu0
  %v1318 = vadd.f32 0.0, %v1317
  %1319 = vdwg.mxu0
  %1320 = vmatpush.msra.mxu0 %v375
  %1321 = vmatpush.msra.mxu0 %v371
  %1322 = vmatpush.msra.mxu0 %v367
  %1323 = vmatpush.msra.mxu0 %v363
  %1324 = vmatpush.msra.mxu0 %v359
  %1325 = vmatpush.msra.mxu0 %v355
  %1326 = vmatpush.msra.mxu0 %v351
  %1327 = vmatpush.msra.mxu0 %v347
  %1328 = vmatpush.msra.mxu0 %v343
  %1329 = vmatpush.msra.mxu0 %v339
  %1330 = vmatpush.msra.mxu0 %v335
  %1331 = vmatpush.msra.mxu0 %v331
  %1332 = vmatpush.msra.mxu0 %v327
  %1333 = vmatpush.msra.mxu0 %v323
  %1334 = vmatpush.msra.mxu0 %v319
  %1335 = vmatpush.msra.mxu0 %v315
  %1336 = vmatmul.f32.gmra.mxu0 %v1045
  %v1337 = vpop.f32.mrf.mxu0
  %v1338 = vadd.f32 0.0, %v1337
  %1339 = vdwg.mxu0
  %1340 = vmatpush.msra.mxu0 %v376
  %1341 = vmatpush.msra.mxu0 %v372
  %1342 = vmatpush.msra.mxu0 %v368
  %1343 = vmatpush.msra.mxu0 %v364
  %1344 = vmatpush.msra.mxu0 %v360
  %1345 = vmatpush.msra.mxu0 %v356
  %1346 = vmatpush.msra.mxu0 %v352
  %1347 = vmatpush.msra.mxu0 %v348
  %1348 = vmatpush.msra.mxu0 %v344
  %1349 = vmatpush.msra.mxu0 %v340
  %1350 = vmatpush.msra.mxu0 %v336
  %1351 = vmatpush.msra.mxu0 %v332
  %1352 = vmatpush.msra.mxu0 %v328
  %1353 = vmatpush.msra.mxu0 %v324
  %1354 = vmatpush.msra.mxu0 %v320
  %1355 = vmatpush.msra.mxu0 %v316
  %1356 = vmatmul.f32.gmra.mxu0 %v1045
  %v1357 = vpop.f32.mrf.mxu0
  %v1358 = vadd.f32 0.0, %v1357
  %1359 = vdwg.mxu0
  %v1360 = vadd.f32 %v1276, %v1298
  %v1361 = vadd.f32 %v1277, %v1318
  %v1362 = vadd.f32 %v1278, %v1338
  %v1363 = vadd.f32 %v1279, %v1358
  %v1364 = vxor.u32 %v1360, 2147483648
  %v1365 = vxor.u32 %v1361, 2147483648
  %v1366 = vxor.u32 %v1362, 2147483648
  %v1367 = vmul.f32 %v1364, 1.442695
  %v1368 = vpow.pop %v1367
  %v1369 = vmul.f32 %v1365, 1.442695
  %v1370 = vpow.pop %v1369
  %v1371 = vmul.f32 %v1366, 1.442695
  %v1372 = vpow.pop %v1371
  %v1373 = vadd.f32 %v1368, 1.0
  %v1374 = vadd.f32 %v1370, 1.0
  %v1375 = vadd.f32 %v1372, 1.0
  %v1376 = vrcp.pop %v1373
  %v1377 = vmul.f32 %v1373, %v1376
  %v1378 = vsub.f32 1.0, %v1377
  %v1379 = vmul.f32 %v1376, %v1378
  %v1380 = vadd.f32 %v1376, %v1379
  %vm1381 = vweird.f32 %v1373
  %vm1382 = vweird.f32 %v1376
  %vm1383 = vmor %vm1381, %vm1382
  %v1384 = vsel %vm1383, %v1376, %v1380
  %v1385 = vand.u32 2147483647, %v1373
  %vm1386 = vcmp.eq.f32.partialorder %v1385, 8.507059e+37
  %v1387 = vand.u32 %v1373, 2147483648
  %v1388 = vor.u32 1.1754944e-38, %v1387
  %v1389 = vsel %vm1386, %v1388, %v1384
  %v1390 = vmul.f32 1.0, %v1389
  %v1391 = vrcp.pop %v1374
  %v1392 = vmul.f32 %v1374, %v1391
  %v1393 = vsub.f32 1.0, %v1392
  %v1394 = vmul.f32 %v1391, %v1393
  %v1395 = vadd.f32 %v1391, %v1394
  %vm1396 = vweird.f32 %v1374
  %vm1397 = vweird.f32 %v1391
  %vm1398 = vmor %vm1396, %vm1397
  %v1399 = vsel %vm1398, %v1391, %v1395
  %v1400 = vand.u32 2147483647, %v1374
  %vm1401 = vcmp.eq.f32.partialorder %v1400, 8.507059e+37
  %v1402 = vand.u32 %v1374, 2147483648
  %v1403 = vor.u32 1.1754944e-38, %v1402
  %v1404 = vsel %vm1401, %v1403, %v1399
  %v1405 = vmul.f32 1.0, %v1404
  %v1406 = vrcp.pop %v1375
  %v1407 = vmul.f32 %v1375, %v1406
  %v1408 = vsub.f32 1.0, %v1407
  %v1409 = vmul.f32 %v1406, %v1408
  %v1410 = vadd.f32 %v1406, %v1409
  %vm1411 = vweird.f32 %v1375
  %vm1412 = vweird.f32 %v1406
  %vm1413 = vmor %vm1411, %vm1412
  %v1414 = vsel %vm1413, %v1406, %v1410
  %v1415 = vand.u32 2147483647, %v1375
  %vm1416 = vcmp.eq.f32.partialorder %v1415, 8.507059e+37
  %v1417 = vand.u32 %v1375, 2147483648
  %v1418 = vor.u32 1.1754944e-38, %v1417
  %v1419 = vsel %vm1416, %v1418, %v1414
  %v1420 = vmul.f32 1.0, %v1419
  %v1421 = vtanh.pop %v1363
  %v1422 = vmul.f32 %v1405, %v1043
  %v1423 = vmul.f32 %v1390, %v1421
  %v1424 = vadd.f32 %v1422, %v1423
  %v1425 = vtanh.pop %v1424
  %v1426 = vmul.f32 %v1420, %v1425
  %1427 = vmatpush.msra.mxu0 %v501
  %1428 = vmatpush.msra.mxu0 %v497
  %1429 = vmatpush.msra.mxu0 %v493
  %1430 = vmatpush.msra.mxu0 %v489
  %1431 = vmatpush.msra.mxu0 %v485
  %1432 = vmatpush.msra.mxu0 %v481
  %1433 = vmatpush.msra.mxu0 %v477
  %1434 = vmatpush.msra.mxu0 %v473
  %1435 = vmatpush.msra.mxu0 %v469
  %1436 = vmatpush.msra.mxu0 %v465
  %1437 = vmatpush.msra.mxu0 %v461
  %1438 = vmatpush.msra.mxu0 %v457
  %1439 = vmatpush.msra.mxu0 %v453
  %1440 = vmatpush.msra.mxu0 %v449
  %1441 = vmatpush.msra.mxu0 %v445
  %1442 = vmatpush.msra.mxu0 %v441
  %1443 = vmatmul.f32.gmra.mxu0 %v1272
  %v1444 = vpop.f32.mrf.mxu0
  %v1445 = vadd.f32 0.0, %v1444
  %1446 = vdwg.mxu0
  %1447 = vmatpush.msra.mxu0 %v502
  %1448 = vmatpush.msra.mxu0 %v498
  %1449 = vmatpush.msra.mxu0 %v494
  %1450 = vmatpush.msra.mxu0 %v490
  %1451 = vmatpush.msra.mxu0 %v486
  %1452 = vmatpush.msra.mxu0 %v482
  %1453 = vmatpush.msra.mxu0 %v478
  %1454 = vmatpush.msra.mxu0 %v474
  %1455 = vmatpush.msra.mxu0 %v470
  %1456 = vmatpush.msra.mxu0 %v466
  %1457 = vmatpush.msra.mxu0 %v462
  %1458 = vmatpush.msra.mxu0 %v458
  %1459 = vmatpush.msra.mxu0 %v454
  %1460 = vmatpush.msra.mxu0 %v450
  %1461 = vmatpush.msra.mxu0 %v446
  %1462 = vmatpush.msra.mxu0 %v442
  %1463 = vmatmul.f32.gmra.mxu0 %v1272
  %v1464 = vpop.f32.mrf.mxu0
  %v1465 = vadd.f32 0.0, %v1464
  %1466 = vdwg.mxu0
  %1467 = vmatpush.msra.mxu0 %v503
  %1468 = vmatpush.msra.mxu0 %v499
  %1469 = vmatpush.msra.mxu0 %v495
  %1470 = vmatpush.msra.mxu0 %v491
  %1471 = vmatpush.msra.mxu0 %v487
  %1472 = vmatpush.msra.mxu0 %v483
  %1473 = vmatpush.msra.mxu0 %v479
  %1474 = vmatpush.msra.mxu0 %v475
  %1475 = vmatpush.msra.mxu0 %v471
  %1476 = vmatpush.msra.mxu0 %v467
  %1477 = vmatpush.msra.mxu0 %v463
  %1478 = vmatpush.msra.mxu0 %v459
  %1479 = vmatpush.msra.mxu0 %v455
  %1480 = vmatpush.msra.mxu0 %v451
  %1481 = vmatpush.msra.mxu0 %v447
  %1482 = vmatpush.msra.mxu0 %v443
  %1483 = vmatmul.f32.gmra.mxu0 %v1272
  %v1484 = vpop.f32.mrf.mxu0
  %v1485 = vadd.f32 0.0, %v1484
  %1486 = vdwg.mxu0
  %1487 = vmatpush.msra.mxu0 %v504
  %1488 = vmatpush.msra.mxu0 %v500
  %1489 = vmatpush.msra.mxu0 %v496
  %1490 = vmatpush.msra.mxu0 %v492
  %1491 = vmatpush.msra.mxu0 %v488
  %1492 = vmatpush.msra.mxu0 %v484
  %1493 = vmatpush.msra.mxu0 %v480
  %1494 = vmatpush.msra.mxu0 %v476
  %1495 = vmatpush.msra.mxu0 %v472
  %1496 = vmatpush.msra.mxu0 %v468
  %1497 = vmatpush.msra.mxu0 %v464
  %1498 = vmatpush.msra.mxu0 %v460
  %1499 = vmatpush.msra.mxu0 %v456
  %1500 = vmatpush.msra.mxu0 %v452
  %1501 = vmatpush.msra.mxu0 %v448
  %1502 = vmatpush.msra.mxu0 %v444
  %1503 = vmatmul.f32.gmra.mxu0 %v1272
  %v1504 = vpop.f32.mrf.mxu0
  %v1505 = vadd.f32 0.0, %v1504
  %1506 = vdwg.mxu0
  %1507 = vmatpush.msra.mxu0 %v437
  %1508 = vmatpush.msra.mxu0 %v433
  %1509 = vmatpush.msra.mxu0 %v429
  %1510 = vmatpush.msra.mxu0 %v425
  %1511 = vmatpush.msra.mxu0 %v421
  %1512 = vmatpush.msra.mxu0 %v417
  %1513 = vmatpush.msra.mxu0 %v413
  %1514 = vmatpush.msra.mxu0 %v409
  %1515 = vmatpush.msra.mxu0 %v405
  %1516 = vmatpush.msra.mxu0 %v401
  %1517 = vmatpush.msra.mxu0 %v397
  %1518 = vmatpush.msra.mxu0 %v393
  %1519 = vmatpush.msra.mxu0 %v389
  %1520 = vmatpush.msra.mxu0 %v385
  %1521 = vmatpush.msra.mxu0 %v381
  %1522 = vmatpush.msra.mxu0 %v377
  %1523 = vmatmul.f32.gmra.mxu0 %v1426
  %v1524 = vpop.f32.mrf.mxu0
  %v1525 = vadd.f32 %v1445, %v1524
  %1526 = vdwg.mxu0
  %1527 = vmatpush.msra.mxu0 %v438
  %1528 = vmatpush.msra.mxu0 %v434
  %1529 = vmatpush.msra.mxu0 %v430
  %1530 = vmatpush.msra.mxu0 %v426
  %1531 = vmatpush.msra.mxu0 %v422
  %1532 = vmatpush.msra.mxu0 %v418
  %1533 = vmatpush.msra.mxu0 %v414
  %1534 = vmatpush.msra.mxu0 %v410
  %1535 = vmatpush.msra.mxu0 %v406
  %1536 = vmatpush.msra.mxu0 %v402
  %1537 = vmatpush.msra.mxu0 %v398
  %1538 = vmatpush.msra.mxu0 %v394
  %1539 = vmatpush.msra.mxu0 %v390
  %1540 = vmatpush.msra.mxu0 %v386
  %1541 = vmatpush.msra.mxu0 %v382
  %1542 = vmatpush.msra.mxu0 %v378
  %1543 = vmatmul.f32.gmra.mxu0 %v1426
  %v1544 = vpop.f32.mrf.mxu0
  %v1545 = vadd.f32 %v1465, %v1544
  %1546 = vdwg.mxu0
  %1547 = vmatpush.msra.mxu0 %v439
  %1548 = vmatpush.msra.mxu0 %v435
  %1549 = vmatpush.msra.mxu0 %v431
  %1550 = vmatpush.msra.mxu0 %v427
  %1551 = vmatpush.msra.mxu0 %v423
  %1552 = vmatpush.msra.mxu0 %v419
  %1553 = vmatpush.msra.mxu0 %v415
  %1554 = vmatpush.msra.mxu0 %v411
  %1555 = vmatpush.msra.mxu0 %v407
  %1556 = vmatpush.msra.mxu0 %v403
  %1557 = vmatpush.msra.mxu0 %v399
  %1558 = vmatpush.msra.mxu0 %v395
  %1559 = vmatpush.msra.mxu0 %v391
  %1560 = vmatpush.msra.mxu0 %v387
  %1561 = vmatpush.msra.mxu0 %v383
  %1562 = vmatpush.msra.mxu0 %v379
  %1563 = vmatmul.f32.gmra.mxu0 %v1426
  %v1564 = vpop.f32.mrf.mxu0
  %v1565 = vadd.f32 %v1485, %v1564
  %1566 = vdwg.mxu0
  %1567 = vmatpush.msra.mxu0 %v440
  %1568 = vmatpush.msra.mxu0 %v436
  %1569 = vmatpush.msra.mxu0 %v432
  %1570 = vmatpush.msra.mxu0 %v428
  %1571 = vmatpush.msra.mxu0 %v424
  %1572 = vmatpush.msra.mxu0 %v420
  %1573 = vmatpush.msra.mxu0 %v416
  %1574 = vmatpush.msra.mxu0 %v412
  %1575 = vmatpush.msra.mxu0 %v408
  %1576 = vmatpush.msra.mxu0 %v404
  %1577 = vmatpush.msra.mxu0 %v400
  %1578 = vmatpush.msra.mxu0 %v396
  %1579 = vmatpush.msra.mxu0 %v392
  %1580 = vmatpush.msra.mxu0 %v388
  %1581 = vmatpush.msra.mxu0 %v384
  %1582 = vmatpush.msra.mxu0 %v380
  %1583 = vmatmul.f32.gmra.mxu0 %v1426
  %v1584 = vpop.f32.mrf.mxu0
  %v1585 = vadd.f32 %v1505, %v1584
  %1586 = vdwg.mxu0
  %v1587 = vadd.f32 %v1525, %v507
  %v1588 = vadd.f32 %v1545, %v508
  %v1589 = vadd.f32 %v1565, %v509
  %v1590 = vadd.f32 %v1585, %v510
  %v1591 = vxor.u32 %v1587, 2147483648
  %v1592 = vxor.u32 %v1588, 2147483648
  %v1593 = vxor.u32 %v1589, 2147483648
  %v1594 = vmul.f32 %v1591, 1.442695
  %v1595 = vpow.pop %v1594
  %v1596 = vmul.f32 %v1592, 1.442695
  %v1597 = vpow.pop %v1596
  %v1598 = vmul.f32 %v1593, 1.442695
  %v1599 = vpow.pop %v1598
  %v1600 = vadd.f32 %v1595, 1.0
  %v1601 = vadd.f32 %v1597, 1.0
  %v1602 = vadd.f32 %v1599, 1.0
  %v1603 = vrcp.pop %v1600
  %v1604 = vmul.f32 %v1600, %v1603
  %v1605 = vsub.f32 1.0, %v1604
  %v1606 = vmul.f32 %v1603, %v1605
  %v1607 = vadd.f32 %v1603, %v1606
  %vm1608 = vweird.f32 %v1600
  %vm1609 = vweird.f32 %v1603
  %vm1610 = vmor %vm1608, %vm1609
  %v1611 = vsel %vm1610, %v1603, %v1607
  %v1612 = vand.u32 2147483647, %v1600
  %vm1613 = vcmp.eq.f32.partialorder %v1612, 8.507059e+37
  %v1614 = vand.u32 %v1600, 2147483648
  %v1615 = vor.u32 1.1754944e-38, %v1614
  %v1616 = vsel %vm1613, %v1615, %v1611
  %v1617 = vmul.f32 1.0, %v1616
  %v1618 = vrcp.pop %v1601
  %v1619 = vmul.f32 %v1601, %v1618
  %v1620 = vsub.f32 1.0, %v1619
  %v1621 = vmul.f32 %v1618, %v1620
  %v1622 = vadd.f32 %v1618, %v1621
  %vm1623 = vweird.f32 %v1601
  %vm1624 = vweird.f32 %v1618
  %vm1625 = vmor %vm1623, %vm1624
  %v1626 = vsel %vm1625, %v1618, %v1622
  %v1627 = vand.u32 2147483647, %v1601
  %vm1628 = vcmp.eq.f32.partialorder %v1627, 8.507059e+37
  %v1629 = vand.u32 %v1601, 2147483648
  %v1630 = vor.u32 1.1754944e-38, %v1629
  %v1631 = vsel %vm1628, %v1630, %v1626
  %v1632 = vmul.f32 1.0, %v1631
  %v1633 = vrcp.pop %v1602
  %v1634 = vmul.f32 %v1602, %v1633
  %v1635 = vsub.f32 1.0, %v1634
  %v1636 = vmul.f32 %v1633, %v1635
  %v1637 = vadd.f32 %v1633, %v1636
  %vm1638 = vweird.f32 %v1602
  %vm1639 = vweird.f32 %v1633
  %vm1640 = vmor %vm1638, %vm1639
  %v1641 = vsel %vm1640, %v1633, %v1637
  %v1642 = vand.u32 2147483647, %v1602
  %vm1643 = vcmp.eq.f32.partialorder %v1642, 8.507059e+37
  %v1644 = vand.u32 %v1602, 2147483648
  %v1645 = vor.u32 1.1754944e-38, %v1644
  %v1646 = vsel %vm1643, %v1645, %v1641
  %v1647 = vmul.f32 1.0, %v1646
  %v1648 = vtanh.pop %v1590
  %v1649 = vmul.f32 %v1632, %v1270
  %v1650 = vmul.f32 %v1617, %v1648
  %v1651 = vadd.f32 %v1649, %v1650
  %v1652 = vtanh.pop %v1651
  %v1653 = vmul.f32 %v1647, %v1652
  %s1654 = scalar_lea.vmem [#allocation3], 16
  %1655 = vst [vmem:[%s1654] sm:$0xff] %v1653
  %s1656 = scalar_lea.vmem [#allocation2], 96
  %v1657 = vld [vmem:[%s1656] sm:$0xff]
  %v1658 = vld [vmem:[%s1656 + $0x8] sm:$0xff]
  %v1659 = vld [vmem:[%s1656 + $0x10] sm:$0xff]
  %v1660 = vld [vmem:[%s1656 + $0x18] sm:$0xff]
  %1661 = vmatpush.msra.mxu0 %v373
  %1662 = vmatpush.msra.mxu0 %v369
  %1663 = vmatpush.msra.mxu0 %v365
  %1664 = vmatpush.msra.mxu0 %v361
  %1665 = vmatpush.msra.mxu0 %v357
  %1666 = vmatpush.msra.mxu0 %v353
  %1667 = vmatpush.msra.mxu0 %v349
  %1668 = vmatpush.msra.mxu0 %v345
  %1669 = vmatpush.msra.mxu0 %v341
  %1670 = vmatpush.msra.mxu0 %v337
  %1671 = vmatpush.msra.mxu0 %v333
  %1672 = vmatpush.msra.mxu0 %v329
  %1673 = vmatpush.msra.mxu0 %v325
  %1674 = vmatpush.msra.mxu0 %v321
  %1675 = vmatpush.msra.mxu0 %v317
  %1676 = vmatpush.msra.mxu0 %v313
  %1677 = vmatmul.f32.gmra.mxu0 %v1426
  %v1678 = vpop.f32.mrf.mxu0
  %v1679 = vadd.f32 0.0, %v1678
  %1680 = vdwg.mxu0
  %1681 = vmatpush.msra.mxu0 %v374
  %1682 = vmatpush.msra.mxu0 %v370
  %1683 = vmatpush.msra.mxu0 %v366
  %1684 = vmatpush.msra.mxu0 %v362
  %1685 = vmatpush.msra.mxu0 %v358
  %1686 = vmatpush.msra.mxu0 %v354
  %1687 = vmatpush.msra.mxu0 %v350
  %1688 = vmatpush.msra.mxu0 %v346
  %1689 = vmatpush.msra.mxu0 %v342
  %1690 = vmatpush.msra.mxu0 %v338
  %1691 = vmatpush.msra.mxu0 %v334
  %1692 = vmatpush.msra.mxu0 %v330
  %1693 = vmatpush.msra.mxu0 %v326
  %1694 = vmatpush.msra.mxu0 %v322
  %1695 = vmatpush.msra.mxu0 %v318
  %1696 = vmatpush.msra.mxu0 %v314
  %1697 = vmatmul.f32.gmra.mxu0 %v1426
  %v1698 = vpop.f32.mrf.mxu0
  %v1699 = vadd.f32 0.0, %v1698
  %1700 = vdwg.mxu0
  %1701 = vmatpush.msra.mxu0 %v375
  %1702 = vmatpush.msra.mxu0 %v371
  %1703 = vmatpush.msra.mxu0 %v367
  %1704 = vmatpush.msra.mxu0 %v363
  %1705 = vmatpush.msra.mxu0 %v359
  %1706 = vmatpush.msra.mxu0 %v355
  %1707 = vmatpush.msra.mxu0 %v351
  %1708 = vmatpush.msra.mxu0 %v347
  %1709 = vmatpush.msra.mxu0 %v343
  %1710 = vmatpush.msra.mxu0 %v339
  %1711 = vmatpush.msra.mxu0 %v335
  %1712 = vmatpush.msra.mxu0 %v331
  %1713 = vmatpush.msra.mxu0 %v327
  %1714 = vmatpush.msra.mxu0 %v323
  %1715 = vmatpush.msra.mxu0 %v319
  %1716 = vmatpush.msra.mxu0 %v315
  %1717 = vmatmul.f32.gmra.mxu0 %v1426
  %v1718 = vpop.f32.mrf.mxu0
  %v1719 = vadd.f32 0.0, %v1718
  %1720 = vdwg.mxu0
  %1721 = vmatpush.msra.mxu0 %v376
  %1722 = vmatpush.msra.mxu0 %v372
  %1723 = vmatpush.msra.mxu0 %v368
  %1724 = vmatpush.msra.mxu0 %v364
  %1725 = vmatpush.msra.mxu0 %v360
  %1726 = vmatpush.msra.mxu0 %v356
  %1727 = vmatpush.msra.mxu0 %v352
  %1728 = vmatpush.msra.mxu0 %v348
  %1729 = vmatpush.msra.mxu0 %v344
  %1730 = vmatpush.msra.mxu0 %v340
  %1731 = vmatpush.msra.mxu0 %v336
  %1732 = vmatpush.msra.mxu0 %v332
  %1733 = vmatpush.msra.mxu0 %v328
  %1734 = vmatpush.msra.mxu0 %v324
  %1735 = vmatpush.msra.mxu0 %v320
  %1736 = vmatpush.msra.mxu0 %v316
  %1737 = vmatmul.f32.gmra.mxu0 %v1426
  %v1738 = vpop.f32.mrf.mxu0
  %v1739 = vadd.f32 0.0, %v1738
  %1740 = vdwg.mxu0
  %v1741 = vadd.f32 %v1657, %v1679
  %v1742 = vadd.f32 %v1658, %v1699
  %v1743 = vadd.f32 %v1659, %v1719
  %v1744 = vadd.f32 %v1660, %v1739
  %v1745 = vxor.u32 %v1741, 2147483648
  %v1746 = vxor.u32 %v1742, 2147483648
  %v1747 = vxor.u32 %v1743, 2147483648
  %v1748 = vmul.f32 %v1745, 1.442695
  %v1749 = vpow.pop %v1748
  %v1750 = vmul.f32 %v1746, 1.442695
  %v1751 = vpow.pop %v1750
  %v1752 = vmul.f32 %v1747, 1.442695
  %v1753 = vpow.pop %v1752
  %v1754 = vadd.f32 %v1749, 1.0
  %v1755 = vadd.f32 %v1751, 1.0
  %v1756 = vadd.f32 %v1753, 1.0
  %v1757 = vrcp.pop %v1754
  %v1758 = vmul.f32 %v1754, %v1757
  %v1759 = vsub.f32 1.0, %v1758
  %v1760 = vmul.f32 %v1757, %v1759
  %v1761 = vadd.f32 %v1757, %v1760
  %vm1762 = vweird.f32 %v1754
  %vm1763 = vweird.f32 %v1757
  %vm1764 = vmor %vm1762, %vm1763
  %v1765 = vsel %vm1764, %v1757, %v1761
  %v1766 = vand.u32 2147483647, %v1754
  %vm1767 = vcmp.eq.f32.partialorder %v1766, 8.507059e+37
  %v1768 = vand.u32 %v1754, 2147483648
  %v1769 = vor.u32 1.1754944e-38, %v1768
  %v1770 = vsel %vm1767, %v1769, %v1765
  %v1771 = vmul.f32 1.0, %v1770
  %v1772 = vrcp.pop %v1755
  %v1773 = vmul.f32 %v1755, %v1772
  %v1774 = vsub.f32 1.0, %v1773
  %v1775 = vmul.f32 %v1772, %v1774
  %v1776 = vadd.f32 %v1772, %v1775
  %vm1777 = vweird.f32 %v1755
  %vm1778 = vweird.f32 %v1772
  %vm1779 = vmor %vm1777, %vm1778
  %v1780 = vsel %vm1779, %v1772, %v1776
  %v1781 = vand.u32 2147483647, %v1755
  %vm1782 = vcmp.eq.f32.partialorder %v1781, 8.507059e+37
  %v1783 = vand.u32 %v1755, 2147483648
  %v1784 = vor.u32 1.1754944e-38, %v1783
  %v1785 = vsel %vm1782, %v1784, %v1780
  %v1786 = vmul.f32 1.0, %v1785
  %v1787 = vrcp.pop %v1756
  %v1788 = vmul.f32 %v1756, %v1787
  %v1789 = vsub.f32 1.0, %v1788
  %v1790 = vmul.f32 %v1787, %v1789
  %v1791 = vadd.f32 %v1787, %v1790
  %vm1792 = vweird.f32 %v1756
  %vm1793 = vweird.f32 %v1787
  %vm1794 = vmor %vm1792, %vm1793
  %v1795 = vsel %vm1794, %v1787, %v1791
  %v1796 = vand.u32 2147483647, %v1756
  %vm1797 = vcmp.eq.f32.partialorder %v1796, 8.507059e+37
  %v1798 = vand.u32 %v1756, 2147483648
  %v1799 = vor.u32 1.1754944e-38, %v1798
  %v1800 = vsel %vm1797, %v1799, %v1795
  %v1801 = vmul.f32 1.0, %v1800
  %v1802 = vtanh.pop %v1744
  %v1803 = vmul.f32 %v1786, %v1424
  %v1804 = vmul.f32 %v1771, %v1802
  %v1805 = vadd.f32 %v1803, %v1804
  %v1806 = vtanh.pop %v1805
  %v1807 = vmul.f32 %v1801, %v1806
  %1808 = vmatpush.msra.mxu0 %v501
  %1809 = vmatpush.msra.mxu0 %v497
  %1810 = vmatpush.msra.mxu0 %v493
  %1811 = vmatpush.msra.mxu0 %v489
  %1812 = vmatpush.msra.mxu0 %v485
  %1813 = vmatpush.msra.mxu0 %v481
  %1814 = vmatpush.msra.mxu0 %v477
  %1815 = vmatpush.msra.mxu0 %v473
  %1816 = vmatpush.msra.mxu0 %v469
  %1817 = vmatpush.msra.mxu0 %v465
  %1818 = vmatpush.msra.mxu0 %v461
  %1819 = vmatpush.msra.mxu0 %v457
  %1820 = vmatpush.msra.mxu0 %v453
  %1821 = vmatpush.msra.mxu0 %v449
  %1822 = vmatpush.msra.mxu0 %v445
  %1823 = vmatpush.msra.mxu0 %v441
  %1824 = vmatmul.f32.gmra.mxu0 %v1653
  %v1825 = vpop.f32.mrf.mxu0
  %v1826 = vadd.f32 0.0, %v1825
  %1827 = vdwg.mxu0
  %1828 = vmatpush.msra.mxu0 %v502
  %1829 = vmatpush.msra.mxu0 %v498
  %1830 = vmatpush.msra.mxu0 %v494
  %1831 = vmatpush.msra.mxu0 %v490
  %1832 = vmatpush.msra.mxu0 %v486
  %1833 = vmatpush.msra.mxu0 %v482
  %1834 = vmatpush.msra.mxu0 %v478
  %1835 = vmatpush.msra.mxu0 %v474
  %1836 = vmatpush.msra.mxu0 %v470
  %1837 = vmatpush.msra.mxu0 %v466
  %1838 = vmatpush.msra.mxu0 %v462
  %1839 = vmatpush.msra.mxu0 %v458
  %1840 = vmatpush.msra.mxu0 %v454
  %1841 = vmatpush.msra.mxu0 %v450
  %1842 = vmatpush.msra.mxu0 %v446
  %1843 = vmatpush.msra.mxu0 %v442
  %1844 = vmatmul.f32.gmra.mxu0 %v1653
  %v1845 = vpop.f32.mrf.mxu0
  %v1846 = vadd.f32 0.0, %v1845
  %1847 = vdwg.mxu0
  %1848 = vmatpush.msra.mxu0 %v503
  %1849 = vmatpush.msra.mxu0 %v499
  %1850 = vmatpush.msra.mxu0 %v495
  %1851 = vmatpush.msra.mxu0 %v491
  %1852 = vmatpush.msra.mxu0 %v487
  %1853 = vmatpush.msra.mxu0 %v483
  %1854 = vmatpush.msra.mxu0 %v479
  %1855 = vmatpush.msra.mxu0 %v475
  %1856 = vmatpush.msra.mxu0 %v471
  %1857 = vmatpush.msra.mxu0 %v467
  %1858 = vmatpush.msra.mxu0 %v463
  %1859 = vmatpush.msra.mxu0 %v459
  %1860 = vmatpush.msra.mxu0 %v455
  %1861 = vmatpush.msra.mxu0 %v451
  %1862 = vmatpush.msra.mxu0 %v447
  %1863 = vmatpush.msra.mxu0 %v443
  %1864 = vmatmul.f32.gmra.mxu0 %v1653
  %v1865 = vpop.f32.mrf.mxu0
  %v1866 = vadd.f32 0.0, %v1865
  %1867 = vdwg.mxu0
  %1868 = vmatpush.msra.mxu0 %v504
  %1869 = vmatpush.msra.mxu0 %v500
  %1870 = vmatpush.msra.mxu0 %v496
  %1871 = vmatpush.msra.mxu0 %v492
  %1872 = vmatpush.msra.mxu0 %v488
  %1873 = vmatpush.msra.mxu0 %v484
  %1874 = vmatpush.msra.mxu0 %v480
  %1875 = vmatpush.msra.mxu0 %v476
  %1876 = vmatpush.msra.mxu0 %v472
  %1877 = vmatpush.msra.mxu0 %v468
  %1878 = vmatpush.msra.mxu0 %v464
  %1879 = vmatpush.msra.mxu0 %v460
  %1880 = vmatpush.msra.mxu0 %v456
  %1881 = vmatpush.msra.mxu0 %v452
  %1882 = vmatpush.msra.mxu0 %v448
  %1883 = vmatpush.msra.mxu0 %v444
  %1884 = vmatmul.f32.gmra.mxu0 %v1653
  %v1885 = vpop.f32.mrf.mxu0
  %v1886 = vadd.f32 0.0, %v1885
  %1887 = vdwg.mxu0
  %1888 = vmatpush.msra.mxu0 %v437
  %1889 = vmatpush.msra.mxu0 %v433
  %1890 = vmatpush.msra.mxu0 %v429
  %1891 = vmatpush.msra.mxu0 %v425
  %1892 = vmatpush.msra.mxu0 %v421
  %1893 = vmatpush.msra.mxu0 %v417
  %1894 = vmatpush.msra.mxu0 %v413
  %1895 = vmatpush.msra.mxu0 %v409
  %1896 = vmatpush.msra.mxu0 %v405
  %1897 = vmatpush.msra.mxu0 %v401
  %1898 = vmatpush.msra.mxu0 %v397
  %1899 = vmatpush.msra.mxu0 %v393
  %1900 = vmatpush.msra.mxu0 %v389
  %1901 = vmatpush.msra.mxu0 %v385
  %1902 = vmatpush.msra.mxu0 %v381
  %1903 = vmatpush.msra.mxu0 %v377
  %1904 = vmatmul.f32.gmra.mxu0 %v1807
  %v1905 = vpop.f32.mrf.mxu0
  %v1906 = vadd.f32 %v1826, %v1905
  %1907 = vdwg.mxu0
  %1908 = vmatpush.msra.mxu0 %v438
  %1909 = vmatpush.msra.mxu0 %v434
  %1910 = vmatpush.msra.mxu0 %v430
  %1911 = vmatpush.msra.mxu0 %v426
  %1912 = vmatpush.msra.mxu0 %v422
  %1913 = vmatpush.msra.mxu0 %v418
  %1914 = vmatpush.msra.mxu0 %v414
  %1915 = vmatpush.msra.mxu0 %v410
  %1916 = vmatpush.msra.mxu0 %v406
  %1917 = vmatpush.msra.mxu0 %v402
  %1918 = vmatpush.msra.mxu0 %v398
  %1919 = vmatpush.msra.mxu0 %v394
  %1920 = vmatpush.msra.mxu0 %v390
  %1921 = vmatpush.msra.mxu0 %v386
  %1922 = vmatpush.msra.mxu0 %v382
  %1923 = vmatpush.msra.mxu0 %v378
  %1924 = vmatmul.f32.gmra.mxu0 %v1807
  %v1925 = vpop.f32.mrf.mxu0
  %v1926 = vadd.f32 %v1846, %v1925
  %1927 = vdwg.mxu0
  %1928 = vmatpush.msra.mxu0 %v439
  %1929 = vmatpush.msra.mxu0 %v435
  %1930 = vmatpush.msra.mxu0 %v431
  %1931 = vmatpush.msra.mxu0 %v427
  %1932 = vmatpush.msra.mxu0 %v423
  %1933 = vmatpush.msra.mxu0 %v419
  %1934 = vmatpush.msra.mxu0 %v415
  %1935 = vmatpush.msra.mxu0 %v411
  %1936 = vmatpush.msra.mxu0 %v407
  %1937 = vmatpush.msra.mxu0 %v403
  %1938 = vmatpush.msra.mxu0 %v399
  %1939 = vmatpush.msra.mxu0 %v395
  %1940 = vmatpush.msra.mxu0 %v391
  %1941 = vmatpush.msra.mxu0 %v387
  %1942 = vmatpush.msra.mxu0 %v383
  %1943 = vmatpush.msra.mxu0 %v379
  %1944 = vmatmul.f32.gmra.mxu0 %v1807
  %v1945 = vpop.f32.mrf.mxu0
  %v1946 = vadd.f32 %v1866, %v1945
  %1947 = vdwg.mxu0
  %1948 = vmatpush.msra.mxu0 %v440
  %1949 = vmatpush.msra.mxu0 %v436
  %1950 = vmatpush.msra.mxu0 %v432
  %1951 = vmatpush.msra.mxu0 %v428
  %1952 = vmatpush.msra.mxu0 %v424
  %1953 = vmatpush.msra.mxu0 %v420
  %1954 = vmatpush.msra.mxu0 %v416
  %1955 = vmatpush.msra.mxu0 %v412
  %1956 = vmatpush.msra.mxu0 %v408
  %1957 = vmatpush.msra.mxu0 %v404
  %1958 = vmatpush.msra.mxu0 %v400
  %1959 = vmatpush.msra.mxu0 %v396
  %1960 = vmatpush.msra.mxu0 %v392
  %1961 = vmatpush.msra.mxu0 %v388
  %1962 = vmatpush.msra.mxu0 %v384
  %1963 = vmatpush.msra.mxu0 %v380
  %1964 = vmatmul.f32.gmra.mxu0 %v1807
  %v1965 = vpop.f32.mrf.mxu0
  %v1966 = vadd.f32 %v1886, %v1965
  %1967 = vdwg.mxu0
  %v1968 = vadd.f32 %v1906, %v507
  %v1969 = vadd.f32 %v1926, %v508
  %v1970 = vadd.f32 %v1946, %v509
  %v1971 = vadd.f32 %v1966, %v510
  %v1972 = vxor.u32 %v1968, 2147483648
  %v1973 = vxor.u32 %v1969, 2147483648
  %v1974 = vxor.u32 %v1970, 2147483648
  %v1975 = vmul.f32 %v1972, 1.442695
  %v1976 = vpow.pop %v1975
  %v1977 = vmul.f32 %v1973, 1.442695
  %v1978 = vpow.pop %v1977
  %v1979 = vmul.f32 %v1974, 1.442695
  %v1980 = vpow.pop %v1979
  %v1981 = vadd.f32 %v1976, 1.0
  %v1982 = vadd.f32 %v1978, 1.0
  %v1983 = vadd.f32 %v1980, 1.0
  %v1984 = vrcp.pop %v1981
  %v1985 = vmul.f32 %v1981, %v1984
  %v1986 = vsub.f32 1.0, %v1985
  %v1987 = vmul.f32 %v1984, %v1986
  %v1988 = vadd.f32 %v1984, %v1987
  %vm1989 = vweird.f32 %v1981
  %vm1990 = vweird.f32 %v1984
  %vm1991 = vmor %vm1989, %vm1990
  %v1992 = vsel %vm1991, %v1984, %v1988
  %v1993 = vand.u32 2147483647, %v1981
  %vm1994 = vcmp.eq.f32.partialorder %v1993, 8.507059e+37
  %v1995 = vand.u32 %v1981, 2147483648
  %v1996 = vor.u32 1.1754944e-38, %v1995
  %v1997 = vsel %vm1994, %v1996, %v1992
  %v1998 = vmul.f32 1.0, %v1997
  %v1999 = vrcp.pop %v1982
  %v2000 = vmul.f32 %v1982, %v1999
  %v2001 = vsub.f32 1.0, %v2000
  %v2002 = vmul.f32 %v1999, %v2001
  %v2003 = vadd.f32 %v1999, %v2002
  %vm2004 = vweird.f32 %v1982
  %vm2005 = vweird.f32 %v1999
  %vm2006 = vmor %vm2004, %vm2005
  %v2007 = vsel %vm2006, %v1999, %v2003
  %v2008 = vand.u32 2147483647, %v1982
  %vm2009 = vcmp.eq.f32.partialorder %v2008, 8.507059e+37
  %v2010 = vand.u32 %v1982, 2147483648
  %v2011 = vor.u32 1.1754944e-38, %v2010
  %v2012 = vsel %vm2009, %v2011, %v2007
  %v2013 = vmul.f32 1.0, %v2012
  %v2014 = vrcp.pop %v1983
  %v2015 = vmul.f32 %v1983, %v2014
  %v2016 = vsub.f32 1.0, %v2015
  %v2017 = vmul.f32 %v2014, %v2016
  %v2018 = vadd.f32 %v2014, %v2017
  %vm2019 = vweird.f32 %v1983
  %vm2020 = vweird.f32 %v2014
  %vm2021 = vmor %vm2019, %vm2020
  %v2022 = vsel %vm2021, %v2014, %v2018
  %v2023 = vand.u32 2147483647, %v1983
  %vm2024 = vcmp.eq.f32.partialorder %v2023, 8.507059e+37
  %v2025 = vand.u32 %v1983, 2147483648
  %v2026 = vor.u32 1.1754944e-38, %v2025
  %v2027 = vsel %vm2024, %v2026, %v2022
  %v2028 = vmul.f32 1.0, %v2027
  %v2029 = vtanh.pop %v1971
  %v2030 = vmul.f32 %v2013, %v1651
  %v2031 = vmul.f32 %v1998, %v2029
  %v2032 = vadd.f32 %v2030, %v2031
  %v2033 = vtanh.pop %v2032
  %v2034 = vmul.f32 %v2028, %v2033
  %s2035 = scalar_lea.vmem [#allocation3], 24
  %2036 = vst [vmem:[%s2035] sm:$0xff] %v2034
  %s2037 = scalar_lea.vmem [#allocation2], 128
  %v2038 = vld [vmem:[%s2037] sm:$0xff]
  %v2039 = vld [vmem:[%s2037 + $0x8] sm:$0xff]
  %v2040 = vld [vmem:[%s2037 + $0x10] sm:$0xff]
  %v2041 = vld [vmem:[%s2037 + $0x18] sm:$0xff]
  %2042 = vmatpush.msra.mxu0 %v373
  %2043 = vmatpush.msra.mxu0 %v369
  %2044 = vmatpush.msra.mxu0 %v365
  %2045 = vmatpush.msra.mxu0 %v361
  %2046 = vmatpush.msra.mxu0 %v357
  %2047 = vmatpush.msra.mxu0 %v353
  %2048 = vmatpush.msra.mxu0 %v349
  %2049 = vmatpush.msra.mxu0 %v345
  %2050 = vmatpush.msra.mxu0 %v341
  %2051 = vmatpush.msra.mxu0 %v337
  %2052 = vmatpush.msra.mxu0 %v333
  %2053 = vmatpush.msra.mxu0 %v329
  %2054 = vmatpush.msra.mxu0 %v325
  %2055 = vmatpush.msra.mxu0 %v321
  %2056 = vmatpush.msra.mxu0 %v317
  %2057 = vmatpush.msra.mxu0 %v313
  %2058 = vmatmul.f32.gmra.mxu0 %v1807
  %v2059 = vpop.f32.mrf.mxu0
  %v2060 = vadd.f32 0.0, %v2059
  %2061 = vdwg.mxu0
  %2062 = vmatpush.msra.mxu0 %v374
  %2063 = vmatpush.msra.mxu0 %v370
  %2064 = vmatpush.msra.mxu0 %v366
  %2065 = vmatpush.msra.mxu0 %v362
  %2066 = vmatpush.msra.mxu0 %v358
  %2067 = vmatpush.msra.mxu0 %v354
  %2068 = vmatpush.msra.mxu0 %v350
  %2069 = vmatpush.msra.mxu0 %v346
  %2070 = vmatpush.msra.mxu0 %v342
  %2071 = vmatpush.msra.mxu0 %v338
  %2072 = vmatpush.msra.mxu0 %v334
  %2073 = vmatpush.msra.mxu0 %v330
  %2074 = vmatpush.msra.mxu0 %v326
  %2075 = vmatpush.msra.mxu0 %v322
  %2076 = vmatpush.msra.mxu0 %v318
  %2077 = vmatpush.msra.mxu0 %v314
  %2078 = vmatmul.f32.gmra.mxu0 %v1807
  %v2079 = vpop.f32.mrf.mxu0
  %v2080 = vadd.f32 0.0, %v2079
  %2081 = vdwg.mxu0
  %2082 = vmatpush.msra.mxu0 %v375
  %2083 = vmatpush.msra.mxu0 %v371
  %2084 = vmatpush.msra.mxu0 %v367
  %2085 = vmatpush.msra.mxu0 %v363
  %2086 = vmatpush.msra.mxu0 %v359
  %2087 = vmatpush.msra.mxu0 %v355
  %2088 = vmatpush.msra.mxu0 %v351
  %2089 = vmatpush.msra.mxu0 %v347
  %2090 = vmatpush.msra.mxu0 %v343
  %2091 = vmatpush.msra.mxu0 %v339
  %2092 = vmatpush.msra.mxu0 %v335
  %2093 = vmatpush.msra.mxu0 %v331
  %2094 = vmatpush.msra.mxu0 %v327
  %2095 = vmatpush.msra.mxu0 %v323
  %2096 = vmatpush.msra.mxu0 %v319
  %2097 = vmatpush.msra.mxu0 %v315
  %2098 = vmatmul.f32.gmra.mxu0 %v1807
  %v2099 = vpop.f32.mrf.mxu0
  %v2100 = vadd.f32 0.0, %v2099
  %2101 = vdwg.mxu0
  %2102 = vmatpush.msra.mxu0 %v376
  %2103 = vmatpush.msra.mxu0 %v372
  %2104 = vmatpush.msra.mxu0 %v368
  %2105 = vmatpush.msra.mxu0 %v364
  %2106 = vmatpush.msra.mxu0 %v360
  %2107 = vmatpush.msra.mxu0 %v356
  %2108 = vmatpush.msra.mxu0 %v352
  %2109 = vmatpush.msra.mxu0 %v348
  %2110 = vmatpush.msra.mxu0 %v344
  %2111 = vmatpush.msra.mxu0 %v340
  %2112 = vmatpush.msra.mxu0 %v336
  %2113 = vmatpush.msra.mxu0 %v332
  %2114 = vmatpush.msra.mxu0 %v328
  %2115 = vmatpush.msra.mxu0 %v324
  %2116 = vmatpush.msra.mxu0 %v320
  %2117 = vmatpush.msra.mxu0 %v316
  %2118 = vmatmul.f32.gmra.mxu0 %v1807
  %v2119 = vpop.f32.mrf.mxu0
  %v2120 = vadd.f32 0.0, %v2119
  %2121 = vdwg.mxu0
  %v2122 = vadd.f32 %v2038, %v2060
  %v2123 = vadd.f32 %v2039, %v2080
  %v2124 = vadd.f32 %v2040, %v2100
  %v2125 = vadd.f32 %v2041, %v2120
  %v2126 = vxor.u32 %v2122, 2147483648
  %v2127 = vxor.u32 %v2123, 2147483648
  %v2128 = vxor.u32 %v2124, 2147483648
  %v2129 = vmul.f32 %v2126, 1.442695
  %v2130 = vpow.pop %v2129
  %v2131 = vmul.f32 %v2127, 1.442695
  %v2132 = vpow.pop %v2131
  %v2133 = vmul.f32 %v2128, 1.442695
  %v2134 = vpow.pop %v2133
  %v2135 = vadd.f32 %v2130, 1.0
  %v2136 = vadd.f32 %v2132, 1.0
  %v2137 = vadd.f32 %v2134, 1.0
  %v2138 = vrcp.pop %v2135
  %v2139 = vmul.f32 %v2135, %v2138
  %v2140 = vsub.f32 1.0, %v2139
  %v2141 = vmul.f32 %v2138, %v2140
  %v2142 = vadd.f32 %v2138, %v2141
  %vm2143 = vweird.f32 %v2135
  %vm2144 = vweird.f32 %v2138
  %vm2145 = vmor %vm2143, %vm2144
  %v2146 = vsel %vm2145, %v2138, %v2142
  %v2147 = vand.u32 2147483647, %v2135
  %vm2148 = vcmp.eq.f32.partialorder %v2147, 8.507059e+37
  %v2149 = vand.u32 %v2135, 2147483648
  %v2150 = vor.u32 1.1754944e-38, %v2149
  %v2151 = vsel %vm2148, %v2150, %v2146
  %v2152 = vmul.f32 1.0, %v2151
  %v2153 = vrcp.pop %v2136
  %v2154 = vmul.f32 %v2136, %v2153
  %v2155 = vsub.f32 1.0, %v2154
  %v2156 = vmul.f32 %v2153, %v2155
  %v2157 = vadd.f32 %v2153, %v2156
  %vm2158 = vweird.f32 %v2136
  %vm2159 = vweird.f32 %v2153
  %vm2160 = vmor %vm2158, %vm2159
  %v2161 = vsel %vm2160, %v2153, %v2157
  %v2162 = vand.u32 2147483647, %v2136
  %vm2163 = vcmp.eq.f32.partialorder %v2162, 8.507059e+37
  %v2164 = vand.u32 %v2136, 2147483648
  %v2165 = vor.u32 1.1754944e-38, %v2164
  %v2166 = vsel %vm2163, %v2165, %v2161
  %v2167 = vmul.f32 1.0, %v2166
  %v2168 = vrcp.pop %v2137
  %v2169 = vmul.f32 %v2137, %v2168
  %v2170 = vsub.f32 1.0, %v2169
  %v2171 = vmul.f32 %v2168, %v2170
  %v2172 = vadd.f32 %v2168, %v2171
  %vm2173 = vweird.f32 %v2137
  %vm2174 = vweird.f32 %v2168
  %vm2175 = vmor %vm2173, %vm2174
  %v2176 = vsel %vm2175, %v2168, %v2172
  %v2177 = vand.u32 2147483647, %v2137
  %vm2178 = vcmp.eq.f32.partialorder %v2177, 8.507059e+37
  %v2179 = vand.u32 %v2137, 2147483648
  %v2180 = vor.u32 1.1754944e-38, %v2179
  %v2181 = vsel %vm2178, %v2180, %v2176
  %v2182 = vmul.f32 1.0, %v2181
  %v2183 = vtanh.pop %v2125
  %v2184 = vmul.f32 %v2167, %v1805
  %v2185 = vmul.f32 %v2152, %v2183
  %v2186 = vadd.f32 %v2184, %v2185
  %v2187 = vtanh.pop %v2186
  %v2188 = vmul.f32 %v2182, %v2187
  %2189 = vmatpush.msra.mxu0 %v501
  %2190 = vmatpush.msra.mxu0 %v497
  %2191 = vmatpush.msra.mxu0 %v493
  %2192 = vmatpush.msra.mxu0 %v489
  %2193 = vmatpush.msra.mxu0 %v485
  %2194 = vmatpush.msra.mxu0 %v481
  %2195 = vmatpush.msra.mxu0 %v477
  %2196 = vmatpush.msra.mxu0 %v473
  %2197 = vmatpush.msra.mxu0 %v469
  %2198 = vmatpush.msra.mxu0 %v465
  %2199 = vmatpush.msra.mxu0 %v461
  %2200 = vmatpush.msra.mxu0 %v457
  %2201 = vmatpush.msra.mxu0 %v453
  %2202 = vmatpush.msra.mxu0 %v449
  %2203 = vmatpush.msra.mxu0 %v445
  %2204 = vmatpush.msra.mxu0 %v441
  %2205 = vmatmul.f32.gmra.mxu0 %v2034
  %v2206 = vpop.f32.mrf.mxu0
  %v2207 = vadd.f32 0.0, %v2206
  %2208 = vdwg.mxu0
  %2209 = vmatpush.msra.mxu0 %v502
  %2210 = vmatpush.msra.mxu0 %v498
  %2211 = vmatpush.msra.mxu0 %v494
  %2212 = vmatpush.msra.mxu0 %v490
  %2213 = vmatpush.msra.mxu0 %v486
  %2214 = vmatpush.msra.mxu0 %v482
  %2215 = vmatpush.msra.mxu0 %v478
  %2216 = vmatpush.msra.mxu0 %v474
  %2217 = vmatpush.msra.mxu0 %v470
  %2218 = vmatpush.msra.mxu0 %v466
  %2219 = vmatpush.msra.mxu0 %v462
  %2220 = vmatpush.msra.mxu0 %v458
  %2221 = vmatpush.msra.mxu0 %v454
  %2222 = vmatpush.msra.mxu0 %v450
  %2223 = vmatpush.msra.mxu0 %v446
  %2224 = vmatpush.msra.mxu0 %v442
  %2225 = vmatmul.f32.gmra.mxu0 %v2034
  %v2226 = vpop.f32.mrf.mxu0
  %v2227 = vadd.f32 0.0, %v2226
  %2228 = vdwg.mxu0
  %2229 = vmatpush.msra.mxu0 %v503
  %2230 = vmatpush.msra.mxu0 %v499
  %2231 = vmatpush.msra.mxu0 %v495
  %2232 = vmatpush.msra.mxu0 %v491
  %2233 = vmatpush.msra.mxu0 %v487
  %2234 = vmatpush.msra.mxu0 %v483
  %2235 = vmatpush.msra.mxu0 %v479
  %2236 = vmatpush.msra.mxu0 %v475
  %2237 = vmatpush.msra.mxu0 %v471
  %2238 = vmatpush.msra.mxu0 %v467
  %2239 = vmatpush.msra.mxu0 %v463
  %2240 = vmatpush.msra.mxu0 %v459
  %2241 = vmatpush.msra.mxu0 %v455
  %2242 = vmatpush.msra.mxu0 %v451
  %2243 = vmatpush.msra.mxu0 %v447
  %2244 = vmatpush.msra.mxu0 %v443
  %2245 = vmatmul.f32.gmra.mxu0 %v2034
  %v2246 = vpop.f32.mrf.mxu0
  %v2247 = vadd.f32 0.0, %v2246
  %2248 = vdwg.mxu0
  %2249 = vmatpush.msra.mxu0 %v504
  %2250 = vmatpush.msra.mxu0 %v500
  %2251 = vmatpush.msra.mxu0 %v496
  %2252 = vmatpush.msra.mxu0 %v492
  %2253 = vmatpush.msra.mxu0 %v488
  %2254 = vmatpush.msra.mxu0 %v484
  %2255 = vmatpush.msra.mxu0 %v480
  %2256 = vmatpush.msra.mxu0 %v476
  %2257 = vmatpush.msra.mxu0 %v472
  %2258 = vmatpush.msra.mxu0 %v468
  %2259 = vmatpush.msra.mxu0 %v464
  %2260 = vmatpush.msra.mxu0 %v460
  %2261 = vmatpush.msra.mxu0 %v456
  %2262 = vmatpush.msra.mxu0 %v452
  %2263 = vmatpush.msra.mxu0 %v448
  %2264 = vmatpush.msra.mxu0 %v444
  %2265 = vmatmul.f32.gmra.mxu0 %v2034
  %v2266 = vpop.f32.mrf.mxu0
  %v2267 = vadd.f32 0.0, %v2266
  %2268 = vdwg.mxu0
  %2269 = vmatpush.msra.mxu0 %v437
  %2270 = vmatpush.msra.mxu0 %v433
  %2271 = vmatpush.msra.mxu0 %v429
  %2272 = vmatpush.msra.mxu0 %v425
  %2273 = vmatpush.msra.mxu0 %v421
  %2274 = vmatpush.msra.mxu0 %v417
  %2275 = vmatpush.msra.mxu0 %v413
  %2276 = vmatpush.msra.mxu0 %v409
  %2277 = vmatpush.msra.mxu0 %v405
  %2278 = vmatpush.msra.mxu0 %v401
  %2279 = vmatpush.msra.mxu0 %v397
  %2280 = vmatpush.msra.mxu0 %v393
  %2281 = vmatpush.msra.mxu0 %v389
  %2282 = vmatpush.msra.mxu0 %v385
  %2283 = vmatpush.msra.mxu0 %v381
  %2284 = vmatpush.msra.mxu0 %v377
  %2285 = vmatmul.f32.gmra.mxu0 %v2188
  %v2286 = vpop.f32.mrf.mxu0
  %v2287 = vadd.f32 %v2207, %v2286
  %2288 = vdwg.mxu0
  %2289 = vmatpush.msra.mxu0 %v438
  %2290 = vmatpush.msra.mxu0 %v434
  %2291 = vmatpush.msra.mxu0 %v430
  %2292 = vmatpush.msra.mxu0 %v426
  %2293 = vmatpush.msra.mxu0 %v422
  %2294 = vmatpush.msra.mxu0 %v418
  %2295 = vmatpush.msra.mxu0 %v414
  %2296 = vmatpush.msra.mxu0 %v410
  %2297 = vmatpush.msra.mxu0 %v406
  %2298 = vmatpush.msra.mxu0 %v402
  %2299 = vmatpush.msra.mxu0 %v398
  %2300 = vmatpush.msra.mxu0 %v394
  %2301 = vmatpush.msra.mxu0 %v390
  %2302 = vmatpush.msra.mxu0 %v386
  %2303 = vmatpush.msra.mxu0 %v382
  %2304 = vmatpush.msra.mxu0 %v378
  %2305 = vmatmul.f32.gmra.mxu0 %v2188
  %v2306 = vpop.f32.mrf.mxu0
  %v2307 = vadd.f32 %v2227, %v2306
  %2308 = vdwg.mxu0
  %2309 = vmatpush.msra.mxu0 %v439
  %2310 = vmatpush.msra.mxu0 %v435
  %2311 = vmatpush.msra.mxu0 %v431
  %2312 = vmatpush.msra.mxu0 %v427
  %2313 = vmatpush.msra.mxu0 %v423
  %2314 = vmatpush.msra.mxu0 %v419
  %2315 = vmatpush.msra.mxu0 %v415
  %2316 = vmatpush.msra.mxu0 %v411
  %2317 = vmatpush.msra.mxu0 %v407
  %2318 = vmatpush.msra.mxu0 %v403
  %2319 = vmatpush.msra.mxu0 %v399
  %2320 = vmatpush.msra.mxu0 %v395
  %2321 = vmatpush.msra.mxu0 %v391
  %2322 = vmatpush.msra.mxu0 %v387
  %2323 = vmatpush.msra.mxu0 %v383
  %2324 = vmatpush.msra.mxu0 %v379
  %2325 = vmatmul.f32.gmra.mxu0 %v2188
  %v2326 = vpop.f32.mrf.mxu0
  %v2327 = vadd.f32 %v2247, %v2326
  %2328 = vdwg.mxu0
  %2329 = vmatpush.msra.mxu0 %v440
  %2330 = vmatpush.msra.mxu0 %v436
  %2331 = vmatpush.msra.mxu0 %v432
  %2332 = vmatpush.msra.mxu0 %v428
  %2333 = vmatpush.msra.mxu0 %v424
  %2334 = vmatpush.msra.mxu0 %v420
  %2335 = vmatpush.msra.mxu0 %v416
  %2336 = vmatpush.msra.mxu0 %v412
  %2337 = vmatpush.msra.mxu0 %v408
  %2338 = vmatpush.msra.mxu0 %v404
  %2339 = vmatpush.msra.mxu0 %v400
  %2340 = vmatpush.msra.mxu0 %v396
  %2341 = vmatpush.msra.mxu0 %v392
  %2342 = vmatpush.msra.mxu0 %v388
  %2343 = vmatpush.msra.mxu0 %v384
  %2344 = vmatpush.msra.mxu0 %v380
  %2345 = vmatmul.f32.gmra.mxu0 %v2188
  %v2346 = vpop.f32.mrf.mxu0
  %v2347 = vadd.f32 %v2267, %v2346
  %2348 = vdwg.mxu0
  %v2349 = vadd.f32 %v2287, %v507
  %v2350 = vadd.f32 %v2307, %v508
  %v2351 = vadd.f32 %v2327, %v509
  %v2352 = vadd.f32 %v2347, %v510
  %v2353 = vxor.u32 %v2349, 2147483648
  %v2354 = vxor.u32 %v2350, 2147483648
  %v2355 = vxor.u32 %v2351, 2147483648
  %v2356 = vmul.f32 %v2353, 1.442695
  %v2357 = vpow.pop %v2356
  %v2358 = vmul.f32 %v2354, 1.442695
  %v2359 = vpow.pop %v2358
  %v2360 = vmul.f32 %v2355, 1.442695
  %v2361 = vpow.pop %v2360
  %v2362 = vadd.f32 %v2357, 1.0
  %v2363 = vadd.f32 %v2359, 1.0
  %v2364 = vadd.f32 %v2361, 1.0
  %v2365 = vrcp.pop %v2362
  %v2366 = vmul.f32 %v2362, %v2365
  %v2367 = vsub.f32 1.0, %v2366
  %v2368 = vmul.f32 %v2365, %v2367
  %v2369 = vadd.f32 %v2365, %v2368
  %vm2370 = vweird.f32 %v2362
  %vm2371 = vweird.f32 %v2365
  %vm2372 = vmor %vm2370, %vm2371
  %v2373 = vsel %vm2372, %v2365, %v2369
  %v2374 = vand.u32 2147483647, %v2362
  %vm2375 = vcmp.eq.f32.partialorder %v2374, 8.507059e+37
  %v2376 = vand.u32 %v2362, 2147483648
  %v2377 = vor.u32 1.1754944e-38, %v2376
  %v2378 = vsel %vm2375, %v2377, %v2373
  %v2379 = vmul.f32 1.0, %v2378
  %v2380 = vrcp.pop %v2363
  %v2381 = vmul.f32 %v2363, %v2380
  %v2382 = vsub.f32 1.0, %v2381
  %v2383 = vmul.f32 %v2380, %v2382
  %v2384 = vadd.f32 %v2380, %v2383
  %vm2385 = vweird.f32 %v2363
  %vm2386 = vweird.f32 %v2380
  %vm2387 = vmor %vm2385, %vm2386
  %v2388 = vsel %vm2387, %v2380, %v2384
  %v2389 = vand.u32 2147483647, %v2363
  %vm2390 = vcmp.eq.f32.partialorder %v2389, 8.507059e+37
  %v2391 = vand.u32 %v2363, 2147483648
  %v2392 = vor.u32 1.1754944e-38, %v2391
  %v2393 = vsel %vm2390, %v2392, %v2388
  %v2394 = vmul.f32 1.0, %v2393
  %v2395 = vrcp.pop %v2364
  %v2396 = vmul.f32 %v2364, %v2395
  %v2397 = vsub.f32 1.0, %v2396
  %v2398 = vmul.f32 %v2395, %v2397
  %v2399 = vadd.f32 %v2395, %v2398
  %vm2400 = vweird.f32 %v2364
  %vm2401 = vweird.f32 %v2395
  %vm2402 = vmor %vm2400, %vm2401
  %v2403 = vsel %vm2402, %v2395, %v2399
  %v2404 = vand.u32 2147483647, %v2364
  %vm2405 = vcmp.eq.f32.partialorder %v2404, 8.507059e+37
  %v2406 = vand.u32 %v2364, 2147483648
  %v2407 = vor.u32 1.1754944e-38, %v2406
  %v2408 = vsel %vm2405, %v2407, %v2403
  %v2409 = vmul.f32 1.0, %v2408
  %v2410 = vtanh.pop %v2352
  %v2411 = vmul.f32 %v2394, %v2032
  %v2412 = vmul.f32 %v2379, %v2410
  %v2413 = vadd.f32 %v2411, %v2412
  %v2414 = vtanh.pop %v2413
  %v2415 = vmul.f32 %v2409, %v2414
  %s2416 = scalar_lea.vmem [#allocation3], 32
  %2417 = vst [vmem:[%s2416] sm:$0xff] %v2415
  %s2418 = scalar_lea.vmem [#allocation2], 160
  %v2419 = vld [vmem:[%s2418] sm:$0xff]
  %v2420 = vld [vmem:[%s2418 + $0x8] sm:$0xff]
  %v2421 = vld [vmem:[%s2418 + $0x10] sm:$0xff]
  %v2422 = vld [vmem:[%s2418 + $0x18] sm:$0xff]
  %2423 = vmatpush.msra.mxu0 %v373
  %2424 = vmatpush.msra.mxu0 %v369
  %2425 = vmatpush.msra.mxu0 %v365
  %2426 = vmatpush.msra.mxu0 %v361
  %2427 = vmatpush.msra.mxu0 %v357
  %2428 = vmatpush.msra.mxu0 %v353
  %2429 = vmatpush.msra.mxu0 %v349
  %2430 = vmatpush.msra.mxu0 %v345
  %2431 = vmatpush.msra.mxu0 %v341
  %2432 = vmatpush.msra.mxu0 %v337
  %2433 = vmatpush.msra.mxu0 %v333
  %2434 = vmatpush.msra.mxu0 %v329
  %2435 = vmatpush.msra.mxu0 %v325
  %2436 = vmatpush.msra.mxu0 %v321
  %2437 = vmatpush.msra.mxu0 %v317
  %2438 = vmatpush.msra.mxu0 %v313
  %2439 = vmatmul.f32.gmra.mxu0 %v2188
  %v2440 = vpop.f32.mrf.mxu0
  %v2441 = vadd.f32 0.0, %v2440
  %2442 = vdwg.mxu0
  %2443 = vmatpush.msra.mxu0 %v374
  %2444 = vmatpush.msra.mxu0 %v370
  %2445 = vmatpush.msra.mxu0 %v366
  %2446 = vmatpush.msra.mxu0 %v362
  %2447 = vmatpush.msra.mxu0 %v358
  %2448 = vmatpush.msra.mxu0 %v354
  %2449 = vmatpush.msra.mxu0 %v350
  %2450 = vmatpush.msra.mxu0 %v346
  %2451 = vmatpush.msra.mxu0 %v342
  %2452 = vmatpush.msra.mxu0 %v338
  %2453 = vmatpush.msra.mxu0 %v334
  %2454 = vmatpush.msra.mxu0 %v330
  %2455 = vmatpush.msra.mxu0 %v326
  %2456 = vmatpush.msra.mxu0 %v322
  %2457 = vmatpush.msra.mxu0 %v318
  %2458 = vmatpush.msra.mxu0 %v314
  %2459 = vmatmul.f32.gmra.mxu0 %v2188
  %v2460 = vpop.f32.mrf.mxu0
  %v2461 = vadd.f32 0.0, %v2460
  %2462 = vdwg.mxu0
  %2463 = vmatpush.msra.mxu0 %v375
  %2464 = vmatpush.msra.mxu0 %v371
  %2465 = vmatpush.msra.mxu0 %v367
  %2466 = vmatpush.msra.mxu0 %v363
  %2467 = vmatpush.msra.mxu0 %v359
  %2468 = vmatpush.msra.mxu0 %v355
  %2469 = vmatpush.msra.mxu0 %v351
  %2470 = vmatpush.msra.mxu0 %v347
  %2471 = vmatpush.msra.mxu0 %v343
  %2472 = vmatpush.msra.mxu0 %v339
  %2473 = vmatpush.msra.mxu0 %v335
  %2474 = vmatpush.msra.mxu0 %v331
  %2475 = vmatpush.msra.mxu0 %v327
  %2476 = vmatpush.msra.mxu0 %v323
  %2477 = vmatpush.msra.mxu0 %v319
  %2478 = vmatpush.msra.mxu0 %v315
  %2479 = vmatmul.f32.gmra.mxu0 %v2188
  %v2480 = vpop.f32.mrf.mxu0
  %v2481 = vadd.f32 0.0, %v2480
  %2482 = vdwg.mxu0
  %2483 = vmatpush.msra.mxu0 %v376
  %2484 = vmatpush.msra.mxu0 %v372
  %2485 = vmatpush.msra.mxu0 %v368
  %2486 = vmatpush.msra.mxu0 %v364
  %2487 = vmatpush.msra.mxu0 %v360
  %2488 = vmatpush.msra.mxu0 %v356
  %2489 = vmatpush.msra.mxu0 %v352
  %2490 = vmatpush.msra.mxu0 %v348
  %2491 = vmatpush.msra.mxu0 %v344
  %2492 = vmatpush.msra.mxu0 %v340
  %2493 = vmatpush.msra.mxu0 %v336
  %2494 = vmatpush.msra.mxu0 %v332
  %2495 = vmatpush.msra.mxu0 %v328
  %2496 = vmatpush.msra.mxu0 %v324
  %2497 = vmatpush.msra.mxu0 %v320
  %2498 = vmatpush.msra.mxu0 %v316
  %2499 = vmatmul.f32.gmra.mxu0 %v2188
  %v2500 = vpop.f32.mrf.mxu0
  %v2501 = vadd.f32 0.0, %v2500
  %2502 = vdwg.mxu0
  %v2503 = vadd.f32 %v2419, %v2441
  %v2504 = vadd.f32 %v2420, %v2461
  %v2505 = vadd.f32 %v2421, %v2481
  %v2506 = vadd.f32 %v2422, %v2501
  %v2507 = vxor.u32 %v2503, 2147483648
  %v2508 = vxor.u32 %v2504, 2147483648
  %v2509 = vxor.u32 %v2505, 2147483648
  %v2510 = vmul.f32 %v2507, 1.442695
  %v2511 = vpow.pop %v2510
  %v2512 = vmul.f32 %v2508, 1.442695
  %v2513 = vpow.pop %v2512
  %v2514 = vmul.f32 %v2509, 1.442695
  %v2515 = vpow.pop %v2514
  %v2516 = vadd.f32 %v2511, 1.0
  %v2517 = vadd.f32 %v2513, 1.0
  %v2518 = vadd.f32 %v2515, 1.0
  %v2519 = vrcp.pop %v2516
  %v2520 = vmul.f32 %v2516, %v2519
  %v2521 = vsub.f32 1.0, %v2520
  %v2522 = vmul.f32 %v2519, %v2521
  %v2523 = vadd.f32 %v2519, %v2522
  %vm2524 = vweird.f32 %v2516
  %vm2525 = vweird.f32 %v2519
  %vm2526 = vmor %vm2524, %vm2525
  %v2527 = vsel %vm2526, %v2519, %v2523
  %v2528 = vand.u32 2147483647, %v2516
  %vm2529 = vcmp.eq.f32.partialorder %v2528, 8.507059e+37
  %v2530 = vand.u32 %v2516, 2147483648
  %v2531 = vor.u32 1.1754944e-38, %v2530
  %v2532 = vsel %vm2529, %v2531, %v2527
  %v2533 = vmul.f32 1.0, %v2532
  %v2534 = vrcp.pop %v2517
  %v2535 = vmul.f32 %v2517, %v2534
  %v2536 = vsub.f32 1.0, %v2535
  %v2537 = vmul.f32 %v2534, %v2536
  %v2538 = vadd.f32 %v2534, %v2537
  %vm2539 = vweird.f32 %v2517
  %vm2540 = vweird.f32 %v2534
  %vm2541 = vmor %vm2539, %vm2540
  %v2542 = vsel %vm2541, %v2534, %v2538
  %v2543 = vand.u32 2147483647, %v2517
  %vm2544 = vcmp.eq.f32.partialorder %v2543, 8.507059e+37
  %v2545 = vand.u32 %v2517, 2147483648
  %v2546 = vor.u32 1.1754944e-38, %v2545
  %v2547 = vsel %vm2544, %v2546, %v2542
  %v2548 = vmul.f32 1.0, %v2547
  %v2549 = vrcp.pop %v2518
  %v2550 = vmul.f32 %v2518, %v2549
  %v2551 = vsub.f32 1.0, %v2550
  %v2552 = vmul.f32 %v2549, %v2551
  %v2553 = vadd.f32 %v2549, %v2552
  %vm2554 = vweird.f32 %v2518
  %vm2555 = vweird.f32 %v2549
  %vm2556 = vmor %vm2554, %vm2555
  %v2557 = vsel %vm2556, %v2549, %v2553
  %v2558 = vand.u32 2147483647, %v2518
  %vm2559 = vcmp.eq.f32.partialorder %v2558, 8.507059e+37
  %v2560 = vand.u32 %v2518, 2147483648
  %v2561 = vor.u32 1.1754944e-38, %v2560
  %v2562 = vsel %vm2559, %v2561, %v2557
  %v2563 = vmul.f32 1.0, %v2562
  %v2564 = vtanh.pop %v2506
  %v2565 = vmul.f32 %v2548, %v2186
  %v2566 = vmul.f32 %v2533, %v2564
  %v2567 = vadd.f32 %v2565, %v2566
  %v2568 = vtanh.pop %v2567
  %v2569 = vmul.f32 %v2563, %v2568
  %2570 = vmatpush.msra.mxu0 %v501
  %2571 = vmatpush.msra.mxu0 %v497
  %2572 = vmatpush.msra.mxu0 %v493
  %2573 = vmatpush.msra.mxu0 %v489
  %2574 = vmatpush.msra.mxu0 %v485
  %2575 = vmatpush.msra.mxu0 %v481
  %2576 = vmatpush.msra.mxu0 %v477
  %2577 = vmatpush.msra.mxu0 %v473
  %2578 = vmatpush.msra.mxu0 %v469
  %2579 = vmatpush.msra.mxu0 %v465
  %2580 = vmatpush.msra.mxu0 %v461
  %2581 = vmatpush.msra.mxu0 %v457
  %2582 = vmatpush.msra.mxu0 %v453
  %2583 = vmatpush.msra.mxu0 %v449
  %2584 = vmatpush.msra.mxu0 %v445
  %2585 = vmatpush.msra.mxu0 %v441
  %2586 = vmatmul.f32.gmra.mxu0 %v2415
  %v2587 = vpop.f32.mrf.mxu0
  %v2588 = vadd.f32 0.0, %v2587
  %2589 = vdwg.mxu0
  %2590 = vmatpush.msra.mxu0 %v502
  %2591 = vmatpush.msra.mxu0 %v498
  %2592 = vmatpush.msra.mxu0 %v494
  %2593 = vmatpush.msra.mxu0 %v490
  %2594 = vmatpush.msra.mxu0 %v486
  %2595 = vmatpush.msra.mxu0 %v482
  %2596 = vmatpush.msra.mxu0 %v478
  %2597 = vmatpush.msra.mxu0 %v474
  %2598 = vmatpush.msra.mxu0 %v470
  %2599 = vmatpush.msra.mxu0 %v466
  %2600 = vmatpush.msra.mxu0 %v462
  %2601 = vmatpush.msra.mxu0 %v458
  %2602 = vmatpush.msra.mxu0 %v454
  %2603 = vmatpush.msra.mxu0 %v450
  %2604 = vmatpush.msra.mxu0 %v446
  %2605 = vmatpush.msra.mxu0 %v442
  %2606 = vmatmul.f32.gmra.mxu0 %v2415
  %v2607 = vpop.f32.mrf.mxu0
  %v2608 = vadd.f32 0.0, %v2607
  %2609 = vdwg.mxu0
  %2610 = vmatpush.msra.mxu0 %v503
  %2611 = vmatpush.msra.mxu0 %v499
  %2612 = vmatpush.msra.mxu0 %v495
  %2613 = vmatpush.msra.mxu0 %v491
  %2614 = vmatpush.msra.mxu0 %v487
  %2615 = vmatpush.msra.mxu0 %v483
  %2616 = vmatpush.msra.mxu0 %v479
  %2617 = vmatpush.msra.mxu0 %v475
  %2618 = vmatpush.msra.mxu0 %v471
  %2619 = vmatpush.msra.mxu0 %v467
  %2620 = vmatpush.msra.mxu0 %v463
  %2621 = vmatpush.msra.mxu0 %v459
  %2622 = vmatpush.msra.mxu0 %v455
  %2623 = vmatpush.msra.mxu0 %v451
  %2624 = vmatpush.msra.mxu0 %v447
  %2625 = vmatpush.msra.mxu0 %v443
  %2626 = vmatmul.f32.gmra.mxu0 %v2415
  %v2627 = vpop.f32.mrf.mxu0
  %v2628 = vadd.f32 0.0, %v2627
  %2629 = vdwg.mxu0
  %2630 = vmatpush.msra.mxu0 %v504
  %2631 = vmatpush.msra.mxu0 %v500
  %2632 = vmatpush.msra.mxu0 %v496
  %2633 = vmatpush.msra.mxu0 %v492
  %2634 = vmatpush.msra.mxu0 %v488
  %2635 = vmatpush.msra.mxu0 %v484
  %2636 = vmatpush.msra.mxu0 %v480
  %2637 = vmatpush.msra.mxu0 %v476
  %2638 = vmatpush.msra.mxu0 %v472
  %2639 = vmatpush.msra.mxu0 %v468
  %2640 = vmatpush.msra.mxu0 %v464
  %2641 = vmatpush.msra.mxu0 %v460
  %2642 = vmatpush.msra.mxu0 %v456
  %2643 = vmatpush.msra.mxu0 %v452
  %2644 = vmatpush.msra.mxu0 %v448
  %2645 = vmatpush.msra.mxu0 %v444
  %2646 = vmatmul.f32.gmra.mxu0 %v2415
  %v2647 = vpop.f32.mrf.mxu0
  %v2648 = vadd.f32 0.0, %v2647
  %2649 = vdwg.mxu0
  %2650 = vmatpush.msra.mxu0 %v437
  %2651 = vmatpush.msra.mxu0 %v433
  %2652 = vmatpush.msra.mxu0 %v429
  %2653 = vmatpush.msra.mxu0 %v425
  %2654 = vmatpush.msra.mxu0 %v421
  %2655 = vmatpush.msra.mxu0 %v417
  %2656 = vmatpush.msra.mxu0 %v413
  %2657 = vmatpush.msra.mxu0 %v409
  %2658 = vmatpush.msra.mxu0 %v405
  %2659 = vmatpush.msra.mxu0 %v401
  %2660 = vmatpush.msra.mxu0 %v397
  %2661 = vmatpush.msra.mxu0 %v393
  %2662 = vmatpush.msra.mxu0 %v389
  %2663 = vmatpush.msra.mxu0 %v385
  %2664 = vmatpush.msra.mxu0 %v381
  %2665 = vmatpush.msra.mxu0 %v377
  %2666 = vmatmul.f32.gmra.mxu0 %v2569
  %v2667 = vpop.f32.mrf.mxu0
  %v2668 = vadd.f32 %v2588, %v2667
  %2669 = vdwg.mxu0
  %2670 = vmatpush.msra.mxu0 %v438
  %2671 = vmatpush.msra.mxu0 %v434
  %2672 = vmatpush.msra.mxu0 %v430
  %2673 = vmatpush.msra.mxu0 %v426
  %2674 = vmatpush.msra.mxu0 %v422
  %2675 = vmatpush.msra.mxu0 %v418
  %2676 = vmatpush.msra.mxu0 %v414
  %2677 = vmatpush.msra.mxu0 %v410
  %2678 = vmatpush.msra.mxu0 %v406
  %2679 = vmatpush.msra.mxu0 %v402
  %2680 = vmatpush.msra.mxu0 %v398
  %2681 = vmatpush.msra.mxu0 %v394
  %2682 = vmatpush.msra.mxu0 %v390
  %2683 = vmatpush.msra.mxu0 %v386
  %2684 = vmatpush.msra.mxu0 %v382
  %2685 = vmatpush.msra.mxu0 %v378
  %2686 = vmatmul.f32.gmra.mxu0 %v2569
  %v2687 = vpop.f32.mrf.mxu0
  %v2688 = vadd.f32 %v2608, %v2687
  %2689 = vdwg.mxu0
  %2690 = vmatpush.msra.mxu0 %v439
  %2691 = vmatpush.msra.mxu0 %v435
  %2692 = vmatpush.msra.mxu0 %v431
  %2693 = vmatpush.msra.mxu0 %v427
  %2694 = vmatpush.msra.mxu0 %v423
  %2695 = vmatpush.msra.mxu0 %v419
  %2696 = vmatpush.msra.mxu0 %v415
  %2697 = vmatpush.msra.mxu0 %v411
  %2698 = vmatpush.msra.mxu0 %v407
  %2699 = vmatpush.msra.mxu0 %v403
  %2700 = vmatpush.msra.mxu0 %v399
  %2701 = vmatpush.msra.mxu0 %v395
  %2702 = vmatpush.msra.mxu0 %v391
  %2703 = vmatpush.msra.mxu0 %v387
  %2704 = vmatpush.msra.mxu0 %v383
  %2705 = vmatpush.msra.mxu0 %v379
  %2706 = vmatmul.f32.gmra.mxu0 %v2569
  %v2707 = vpop.f32.mrf.mxu0
  %v2708 = vadd.f32 %v2628, %v2707
  %2709 = vdwg.mxu0
  %2710 = vmatpush.msra.mxu0 %v440
  %2711 = vmatpush.msra.mxu0 %v436
  %2712 = vmatpush.msra.mxu0 %v432
  %2713 = vmatpush.msra.mxu0 %v428
  %2714 = vmatpush.msra.mxu0 %v424
  %2715 = vmatpush.msra.mxu0 %v420
  %2716 = vmatpush.msra.mxu0 %v416
  %2717 = vmatpush.msra.mxu0 %v412
  %2718 = vmatpush.msra.mxu0 %v408
  %2719 = vmatpush.msra.mxu0 %v404
  %2720 = vmatpush.msra.mxu0 %v400
  %2721 = vmatpush.msra.mxu0 %v396
  %2722 = vmatpush.msra.mxu0 %v392
  %2723 = vmatpush.msra.mxu0 %v388
  %2724 = vmatpush.msra.mxu0 %v384
  %2725 = vmatpush.msra.mxu0 %v380
  %2726 = vmatmul.f32.gmra.mxu0 %v2569
  %v2727 = vpop.f32.mrf.mxu0
  %v2728 = vadd.f32 %v2648, %v2727
  %2729 = vdwg.mxu0
  %v2730 = vadd.f32 %v2668, %v507
  %v2731 = vadd.f32 %v2688, %v508
  %v2732 = vadd.f32 %v2708, %v509
  %v2733 = vadd.f32 %v2728, %v510
  %v2734 = vxor.u32 %v2730, 2147483648
  %v2735 = vxor.u32 %v2731, 2147483648
  %v2736 = vxor.u32 %v2732, 2147483648
  %v2737 = vmul.f32 %v2734, 1.442695
  %v2738 = vpow.pop %v2737
  %v2739 = vmul.f32 %v2735, 1.442695
  %v2740 = vpow.pop %v2739
  %v2741 = vmul.f32 %v2736, 1.442695
  %v2742 = vpow.pop %v2741
  %v2743 = vadd.f32 %v2738, 1.0
  %v2744 = vadd.f32 %v2740, 1.0
  %v2745 = vadd.f32 %v2742, 1.0
  %v2746 = vrcp.pop %v2743
  %v2747 = vmul.f32 %v2743, %v2746
  %v2748 = vsub.f32 1.0, %v2747
  %v2749 = vmul.f32 %v2746, %v2748
  %v2750 = vadd.f32 %v2746, %v2749
  %vm2751 = vweird.f32 %v2743
  %vm2752 = vweird.f32 %v2746
  %vm2753 = vmor %vm2751, %vm2752
  %v2754 = vsel %vm2753, %v2746, %v2750
  %v2755 = vand.u32 2147483647, %v2743
  %vm2756 = vcmp.eq.f32.partialorder %v2755, 8.507059e+37
  %v2757 = vand.u32 %v2743, 2147483648
  %v2758 = vor.u32 1.1754944e-38, %v2757
  %v2759 = vsel %vm2756, %v2758, %v2754
  %v2760 = vmul.f32 1.0, %v2759
  %v2761 = vrcp.pop %v2744
  %v2762 = vmul.f32 %v2744, %v2761
  %v2763 = vsub.f32 1.0, %v2762
  %v2764 = vmul.f32 %v2761, %v2763
  %v2765 = vadd.f32 %v2761, %v2764
  %vm2766 = vweird.f32 %v2744
  %vm2767 = vweird.f32 %v2761
  %vm2768 = vmor %vm2766, %vm2767
  %v2769 = vsel %vm2768, %v2761, %v2765
  %v2770 = vand.u32 2147483647, %v2744
  %vm2771 = vcmp.eq.f32.partialorder %v2770, 8.507059e+37
  %v2772 = vand.u32 %v2744, 2147483648
  %v2773 = vor.u32 1.1754944e-38, %v2772
  %v2774 = vsel %vm2771, %v2773, %v2769
  %v2775 = vmul.f32 1.0, %v2774
  %v2776 = vrcp.pop %v2745
  %v2777 = vmul.f32 %v2745, %v2776
  %v2778 = vsub.f32 1.0, %v2777
  %v2779 = vmul.f32 %v2776, %v2778
  %v2780 = vadd.f32 %v2776, %v2779
  %vm2781 = vweird.f32 %v2745
  %vm2782 = vweird.f32 %v2776
  %vm2783 = vmor %vm2781, %vm2782
  %v2784 = vsel %vm2783, %v2776, %v2780
  %v2785 = vand.u32 2147483647, %v2745
  %vm2786 = vcmp.eq.f32.partialorder %v2785, 8.507059e+37
  %v2787 = vand.u32 %v2745, 2147483648
  %v2788 = vor.u32 1.1754944e-38, %v2787
  %v2789 = vsel %vm2786, %v2788, %v2784
  %v2790 = vmul.f32 1.0, %v2789
  %v2791 = vtanh.pop %v2733
  %v2792 = vmul.f32 %v2775, %v2413
  %v2793 = vmul.f32 %v2760, %v2791
  %v2794 = vadd.f32 %v2792, %v2793
  %v2795 = vtanh.pop %v2794
  %v2796 = vmul.f32 %v2790, %v2795
  %s2797 = scalar_lea.vmem [#allocation3], 40
  %2798 = vst [vmem:[%s2797] sm:$0xff] %v2796
  %s2799 = scalar_lea.vmem [#allocation2], 192
  %v2800 = vld [vmem:[%s2799] sm:$0xff]
  %v2801 = vld [vmem:[%s2799 + $0x8] sm:$0xff]
  %v2802 = vld [vmem:[%s2799 + $0x10] sm:$0xff]
  %v2803 = vld [vmem:[%s2799 + $0x18] sm:$0xff]
  %2804 = vmatpush.msra.mxu0 %v373
  %2805 = vmatpush.msra.mxu0 %v369
  %2806 = vmatpush.msra.mxu0 %v365
  %2807 = vmatpush.msra.mxu0 %v361
  %2808 = vmatpush.msra.mxu0 %v357
  %2809 = vmatpush.msra.mxu0 %v353
  %2810 = vmatpush.msra.mxu0 %v349
  %2811 = vmatpush.msra.mxu0 %v345
  %2812 = vmatpush.msra.mxu0 %v341
  %2813 = vmatpush.msra.mxu0 %v337
  %2814 = vmatpush.msra.mxu0 %v333
  %2815 = vmatpush.msra.mxu0 %v329
  %2816 = vmatpush.msra.mxu0 %v325
  %2817 = vmatpush.msra.mxu0 %v321
  %2818 = vmatpush.msra.mxu0 %v317
  %2819 = vmatpush.msra.mxu0 %v313
  %2820 = vmatmul.f32.gmra.mxu0 %v2569
  %v2821 = vpop.f32.mrf.mxu0
  %v2822 = vadd.f32 0.0, %v2821
  %2823 = vdwg.mxu0
  %2824 = vmatpush.msra.mxu0 %v374
  %2825 = vmatpush.msra.mxu0 %v370
  %2826 = vmatpush.msra.mxu0 %v366
  %2827 = vmatpush.msra.mxu0 %v362
  %2828 = vmatpush.msra.mxu0 %v358
  %2829 = vmatpush.msra.mxu0 %v354
  %2830 = vmatpush.msra.mxu0 %v350
  %2831 = vmatpush.msra.mxu0 %v346
  %2832 = vmatpush.msra.mxu0 %v342
  %2833 = vmatpush.msra.mxu0 %v338
  %2834 = vmatpush.msra.mxu0 %v334
  %2835 = vmatpush.msra.mxu0 %v330
  %2836 = vmatpush.msra.mxu0 %v326
  %2837 = vmatpush.msra.mxu0 %v322
  %2838 = vmatpush.msra.mxu0 %v318
  %2839 = vmatpush.msra.mxu0 %v314
  %2840 = vmatmul.f32.gmra.mxu0 %v2569
  %v2841 = vpop.f32.mrf.mxu0
  %v2842 = vadd.f32 0.0, %v2841
  %2843 = vdwg.mxu0
  %2844 = vmatpush.msra.mxu0 %v375
  %2845 = vmatpush.msra.mxu0 %v371
  %2846 = vmatpush.msra.mxu0 %v367
  %2847 = vmatpush.msra.mxu0 %v363
  %2848 = vmatpush.msra.mxu0 %v359
  %2849 = vmatpush.msra.mxu0 %v355
  %2850 = vmatpush.msra.mxu0 %v351
  %2851 = vmatpush.msra.mxu0 %v347
  %2852 = vmatpush.msra.mxu0 %v343
  %2853 = vmatpush.msra.mxu0 %v339
  %2854 = vmatpush.msra.mxu0 %v335
  %2855 = vmatpush.msra.mxu0 %v331
  %2856 = vmatpush.msra.mxu0 %v327
  %2857 = vmatpush.msra.mxu0 %v323
  %2858 = vmatpush.msra.mxu0 %v319
  %2859 = vmatpush.msra.mxu0 %v315
  %2860 = vmatmul.f32.gmra.mxu0 %v2569
  %v2861 = vpop.f32.mrf.mxu0
  %v2862 = vadd.f32 0.0, %v2861
  %2863 = vdwg.mxu0
  %2864 = vmatpush.msra.mxu0 %v376
  %2865 = vmatpush.msra.mxu0 %v372
  %2866 = vmatpush.msra.mxu0 %v368
  %2867 = vmatpush.msra.mxu0 %v364
  %2868 = vmatpush.msra.mxu0 %v360
  %2869 = vmatpush.msra.mxu0 %v356
  %2870 = vmatpush.msra.mxu0 %v352
  %2871 = vmatpush.msra.mxu0 %v348
  %2872 = vmatpush.msra.mxu0 %v344
  %2873 = vmatpush.msra.mxu0 %v340
  %2874 = vmatpush.msra.mxu0 %v336
  %2875 = vmatpush.msra.mxu0 %v332
  %2876 = vmatpush.msra.mxu0 %v328
  %2877 = vmatpush.msra.mxu0 %v324
  %2878 = vmatpush.msra.mxu0 %v320
  %2879 = vmatpush.msra.mxu0 %v316
  %2880 = vmatmul.f32.gmra.mxu0 %v2569
  %v2881 = vpop.f32.mrf.mxu0
  %v2882 = vadd.f32 0.0, %v2881
  %2883 = vdwg.mxu0
  %v2884 = vadd.f32 %v2800, %v2822
  %v2885 = vadd.f32 %v2801, %v2842
  %v2886 = vadd.f32 %v2802, %v2862
  %v2887 = vadd.f32 %v2803, %v2882
  %v2888 = vxor.u32 %v2884, 2147483648
  %v2889 = vxor.u32 %v2885, 2147483648
  %v2890 = vxor.u32 %v2886, 2147483648
  %v2891 = vmul.f32 %v2888, 1.442695
  %v2892 = vpow.pop %v2891
  %v2893 = vmul.f32 %v2889, 1.442695
  %v2894 = vpow.pop %v2893
  %v2895 = vmul.f32 %v2890, 1.442695
  %v2896 = vpow.pop %v2895
  %v2897 = vadd.f32 %v2892, 1.0
  %v2898 = vadd.f32 %v2894, 1.0
  %v2899 = vadd.f32 %v2896, 1.0
  %v2900 = vrcp.pop %v2897
  %v2901 = vmul.f32 %v2897, %v2900
  %v2902 = vsub.f32 1.0, %v2901
  %v2903 = vmul.f32 %v2900, %v2902
  %v2904 = vadd.f32 %v2900, %v2903
  %vm2905 = vweird.f32 %v2897
  %vm2906 = vweird.f32 %v2900
  %vm2907 = vmor %vm2905, %vm2906
  %v2908 = vsel %vm2907, %v2900, %v2904
  %v2909 = vand.u32 2147483647, %v2897
  %vm2910 = vcmp.eq.f32.partialorder %v2909, 8.507059e+37
  %v2911 = vand.u32 %v2897, 2147483648
  %v2912 = vor.u32 1.1754944e-38, %v2911
  %v2913 = vsel %vm2910, %v2912, %v2908
  %v2914 = vmul.f32 1.0, %v2913
  %v2915 = vrcp.pop %v2898
  %v2916 = vmul.f32 %v2898, %v2915
  %v2917 = vsub.f32 1.0, %v2916
  %v2918 = vmul.f32 %v2915, %v2917
  %v2919 = vadd.f32 %v2915, %v2918
  %vm2920 = vweird.f32 %v2898
  %vm2921 = vweird.f32 %v2915
  %vm2922 = vmor %vm2920, %vm2921
  %v2923 = vsel %vm2922, %v2915, %v2919
  %v2924 = vand.u32 2147483647, %v2898
  %vm2925 = vcmp.eq.f32.partialorder %v2924, 8.507059e+37
  %v2926 = vand.u32 %v2898, 2147483648
  %v2927 = vor.u32 1.1754944e-38, %v2926
  %v2928 = vsel %vm2925, %v2927, %v2923
  %v2929 = vmul.f32 1.0, %v2928
  %v2930 = vrcp.pop %v2899
  %v2931 = vmul.f32 %v2899, %v2930
  %v2932 = vsub.f32 1.0, %v2931
  %v2933 = vmul.f32 %v2930, %v2932
  %v2934 = vadd.f32 %v2930, %v2933
  %vm2935 = vweird.f32 %v2899
  %vm2936 = vweird.f32 %v2930
  %vm2937 = vmor %vm2935, %vm2936
  %v2938 = vsel %vm2937, %v2930, %v2934
  %v2939 = vand.u32 2147483647, %v2899
  %vm2940 = vcmp.eq.f32.partialorder %v2939, 8.507059e+37
  %v2941 = vand.u32 %v2899, 2147483648
  %v2942 = vor.u32 1.1754944e-38, %v2941
  %v2943 = vsel %vm2940, %v2942, %v2938
  %v2944 = vmul.f32 1.0, %v2943
  %v2945 = vtanh.pop %v2887
  %v2946 = vmul.f32 %v2929, %v2567
  %v2947 = vmul.f32 %v2914, %v2945
  %v2948 = vadd.f32 %v2946, %v2947
  %v2949 = vtanh.pop %v2948
  %v2950 = vmul.f32 %v2944, %v2949
  %2951 = vmatpush.msra.mxu0 %v501
  %2952 = vmatpush.msra.mxu0 %v497
  %2953 = vmatpush.msra.mxu0 %v493
  %2954 = vmatpush.msra.mxu0 %v489
  %2955 = vmatpush.msra.mxu0 %v485
  %2956 = vmatpush.msra.mxu0 %v481
  %2957 = vmatpush.msra.mxu0 %v477
  %2958 = vmatpush.msra.mxu0 %v473
  %2959 = vmatpush.msra.mxu0 %v469
  %2960 = vmatpush.msra.mxu0 %v465
  %2961 = vmatpush.msra.mxu0 %v461
  %2962 = vmatpush.msra.mxu0 %v457
  %2963 = vmatpush.msra.mxu0 %v453
  %2964 = vmatpush.msra.mxu0 %v449
  %2965 = vmatpush.msra.mxu0 %v445
  %2966 = vmatpush.msra.mxu0 %v441
  %2967 = vmatmul.f32.gmra.mxu0 %v2796
  %v2968 = vpop.f32.mrf.mxu0
  %v2969 = vadd.f32 0.0, %v2968
  %2970 = vdwg.mxu0
  %2971 = vmatpush.msra.mxu0 %v502
  %2972 = vmatpush.msra.mxu0 %v498
  %2973 = vmatpush.msra.mxu0 %v494
  %2974 = vmatpush.msra.mxu0 %v490
  %2975 = vmatpush.msra.mxu0 %v486
  %2976 = vmatpush.msra.mxu0 %v482
  %2977 = vmatpush.msra.mxu0 %v478
  %2978 = vmatpush.msra.mxu0 %v474
  %2979 = vmatpush.msra.mxu0 %v470
  %2980 = vmatpush.msra.mxu0 %v466
  %2981 = vmatpush.msra.mxu0 %v462
  %2982 = vmatpush.msra.mxu0 %v458
  %2983 = vmatpush.msra.mxu0 %v454
  %2984 = vmatpush.msra.mxu0 %v450
  %2985 = vmatpush.msra.mxu0 %v446
  %2986 = vmatpush.msra.mxu0 %v442
  %2987 = vmatmul.f32.gmra.mxu0 %v2796
  %v2988 = vpop.f32.mrf.mxu0
  %v2989 = vadd.f32 0.0, %v2988
  %2990 = vdwg.mxu0
  %2991 = vmatpush.msra.mxu0 %v503
  %2992 = vmatpush.msra.mxu0 %v499
  %2993 = vmatpush.msra.mxu0 %v495
  %2994 = vmatpush.msra.mxu0 %v491
  %2995 = vmatpush.msra.mxu0 %v487
  %2996 = vmatpush.msra.mxu0 %v483
  %2997 = vmatpush.msra.mxu0 %v479
  %2998 = vmatpush.msra.mxu0 %v475
  %2999 = vmatpush.msra.mxu0 %v471
  %3000 = vmatpush.msra.mxu0 %v467
  %3001 = vmatpush.msra.mxu0 %v463
  %3002 = vmatpush.msra.mxu0 %v459
  %3003 = vmatpush.msra.mxu0 %v455
  %3004 = vmatpush.msra.mxu0 %v451
  %3005 = vmatpush.msra.mxu0 %v447
  %3006 = vmatpush.msra.mxu0 %v443
  %3007 = vmatmul.f32.gmra.mxu0 %v2796
  %v3008 = vpop.f32.mrf.mxu0
  %v3009 = vadd.f32 0.0, %v3008
  %3010 = vdwg.mxu0
  %3011 = vmatpush.msra.mxu0 %v504
  %3012 = vmatpush.msra.mxu0 %v500
  %3013 = vmatpush.msra.mxu0 %v496
  %3014 = vmatpush.msra.mxu0 %v492
  %3015 = vmatpush.msra.mxu0 %v488
  %3016 = vmatpush.msra.mxu0 %v484
  %3017 = vmatpush.msra.mxu0 %v480
  %3018 = vmatpush.msra.mxu0 %v476
  %3019 = vmatpush.msra.mxu0 %v472
  %3020 = vmatpush.msra.mxu0 %v468
  %3021 = vmatpush.msra.mxu0 %v464
  %3022 = vmatpush.msra.mxu0 %v460
  %3023 = vmatpush.msra.mxu0 %v456
  %3024 = vmatpush.msra.mxu0 %v452
  %3025 = vmatpush.msra.mxu0 %v448
  %3026 = vmatpush.msra.mxu0 %v444
  %3027 = vmatmul.f32.gmra.mxu0 %v2796
  %v3028 = vpop.f32.mrf.mxu0
  %v3029 = vadd.f32 0.0, %v3028
  %3030 = vdwg.mxu0
  %3031 = vmatpush.msra.mxu0 %v437
  %3032 = vmatpush.msra.mxu0 %v433
  %3033 = vmatpush.msra.mxu0 %v429
  %3034 = vmatpush.msra.mxu0 %v425
  %3035 = vmatpush.msra.mxu0 %v421
  %3036 = vmatpush.msra.mxu0 %v417
  %3037 = vmatpush.msra.mxu0 %v413
  %3038 = vmatpush.msra.mxu0 %v409
  %3039 = vmatpush.msra.mxu0 %v405
  %3040 = vmatpush.msra.mxu0 %v401
  %3041 = vmatpush.msra.mxu0 %v397
  %3042 = vmatpush.msra.mxu0 %v393
  %3043 = vmatpush.msra.mxu0 %v389
  %3044 = vmatpush.msra.mxu0 %v385
  %3045 = vmatpush.msra.mxu0 %v381
  %3046 = vmatpush.msra.mxu0 %v377
  %3047 = vmatmul.f32.gmra.mxu0 %v2950
  %v3048 = vpop.f32.mrf.mxu0
  %v3049 = vadd.f32 %v2969, %v3048
  %3050 = vdwg.mxu0
  %3051 = vmatpush.msra.mxu0 %v438
  %3052 = vmatpush.msra.mxu0 %v434
  %3053 = vmatpush.msra.mxu0 %v430
  %3054 = vmatpush.msra.mxu0 %v426
  %3055 = vmatpush.msra.mxu0 %v422
  %3056 = vmatpush.msra.mxu0 %v418
  %3057 = vmatpush.msra.mxu0 %v414
  %3058 = vmatpush.msra.mxu0 %v410
  %3059 = vmatpush.msra.mxu0 %v406
  %3060 = vmatpush.msra.mxu0 %v402
  %3061 = vmatpush.msra.mxu0 %v398
  %3062 = vmatpush.msra.mxu0 %v394
  %3063 = vmatpush.msra.mxu0 %v390
  %3064 = vmatpush.msra.mxu0 %v386
  %3065 = vmatpush.msra.mxu0 %v382
  %3066 = vmatpush.msra.mxu0 %v378
  %3067 = vmatmul.f32.gmra.mxu0 %v2950
  %v3068 = vpop.f32.mrf.mxu0
  %v3069 = vadd.f32 %v2989, %v3068
  %3070 = vdwg.mxu0
  %3071 = vmatpush.msra.mxu0 %v439
  %3072 = vmatpush.msra.mxu0 %v435
  %3073 = vmatpush.msra.mxu0 %v431
  %3074 = vmatpush.msra.mxu0 %v427
  %3075 = vmatpush.msra.mxu0 %v423
  %3076 = vmatpush.msra.mxu0 %v419
  %3077 = vmatpush.msra.mxu0 %v415
  %3078 = vmatpush.msra.mxu0 %v411
  %3079 = vmatpush.msra.mxu0 %v407
  %3080 = vmatpush.msra.mxu0 %v403
  %3081 = vmatpush.msra.mxu0 %v399
  %3082 = vmatpush.msra.mxu0 %v395
  %3083 = vmatpush.msra.mxu0 %v391
  %3084 = vmatpush.msra.mxu0 %v387
  %3085 = vmatpush.msra.mxu0 %v383
  %3086 = vmatpush.msra.mxu0 %v379
  %3087 = vmatmul.f32.gmra.mxu0 %v2950
  %v3088 = vpop.f32.mrf.mxu0
  %v3089 = vadd.f32 %v3009, %v3088
  %3090 = vdwg.mxu0
  %3091 = vmatpush.msra.mxu0 %v440
  %3092 = vmatpush.msra.mxu0 %v436
  %3093 = vmatpush.msra.mxu0 %v432
  %3094 = vmatpush.msra.mxu0 %v428
  %3095 = vmatpush.msra.mxu0 %v424
  %3096 = vmatpush.msra.mxu0 %v420
  %3097 = vmatpush.msra.mxu0 %v416
  %3098 = vmatpush.msra.mxu0 %v412
  %3099 = vmatpush.msra.mxu0 %v408
  %3100 = vmatpush.msra.mxu0 %v404
  %3101 = vmatpush.msra.mxu0 %v400
  %3102 = vmatpush.msra.mxu0 %v396
  %3103 = vmatpush.msra.mxu0 %v392
  %3104 = vmatpush.msra.mxu0 %v388
  %3105 = vmatpush.msra.mxu0 %v384
  %3106 = vmatpush.msra.mxu0 %v380
  %3107 = vmatmul.f32.gmra.mxu0 %v2950
  %v3108 = vpop.f32.mrf.mxu0
  %v3109 = vadd.f32 %v3029, %v3108
  %3110 = vdwg.mxu0
  %v3111 = vadd.f32 %v3049, %v507
  %v3112 = vadd.f32 %v3069, %v508
  %v3113 = vadd.f32 %v3089, %v509
  %v3114 = vadd.f32 %v3109, %v510
  %v3115 = vxor.u32 %v3111, 2147483648
  %v3116 = vxor.u32 %v3112, 2147483648
  %v3117 = vxor.u32 %v3113, 2147483648
  %v3118 = vmul.f32 %v3115, 1.442695
  %v3119 = vpow.pop %v3118
  %v3120 = vmul.f32 %v3116, 1.442695
  %v3121 = vpow.pop %v3120
  %v3122 = vmul.f32 %v3117, 1.442695
  %v3123 = vpow.pop %v3122
  %v3124 = vadd.f32 %v3119, 1.0
  %v3125 = vadd.f32 %v3121, 1.0
  %v3126 = vadd.f32 %v3123, 1.0
  %v3127 = vrcp.pop %v3124
  %v3128 = vmul.f32 %v3124, %v3127
  %v3129 = vsub.f32 1.0, %v3128
  %v3130 = vmul.f32 %v3127, %v3129
  %v3131 = vadd.f32 %v3127, %v3130
  %vm3132 = vweird.f32 %v3124
  %vm3133 = vweird.f32 %v3127
  %vm3134 = vmor %vm3132, %vm3133
  %v3135 = vsel %vm3134, %v3127, %v3131
  %v3136 = vand.u32 2147483647, %v3124
  %vm3137 = vcmp.eq.f32.partialorder %v3136, 8.507059e+37
  %v3138 = vand.u32 %v3124, 2147483648
  %v3139 = vor.u32 1.1754944e-38, %v3138
  %v3140 = vsel %vm3137, %v3139, %v3135
  %v3141 = vmul.f32 1.0, %v3140
  %v3142 = vrcp.pop %v3125
  %v3143 = vmul.f32 %v3125, %v3142
  %v3144 = vsub.f32 1.0, %v3143
  %v3145 = vmul.f32 %v3142, %v3144
  %v3146 = vadd.f32 %v3142, %v3145
  %vm3147 = vweird.f32 %v3125
  %vm3148 = vweird.f32 %v3142
  %vm3149 = vmor %vm3147, %vm3148
  %v3150 = vsel %vm3149, %v3142, %v3146
  %v3151 = vand.u32 2147483647, %v3125
  %vm3152 = vcmp.eq.f32.partialorder %v3151, 8.507059e+37
  %v3153 = vand.u32 %v3125, 2147483648
  %v3154 = vor.u32 1.1754944e-38, %v3153
  %v3155 = vsel %vm3152, %v3154, %v3150
  %v3156 = vmul.f32 1.0, %v3155
  %v3157 = vrcp.pop %v3126
  %v3158 = vmul.f32 %v3126, %v3157
  %v3159 = vsub.f32 1.0, %v3158
  %v3160 = vmul.f32 %v3157, %v3159
  %v3161 = vadd.f32 %v3157, %v3160
  %vm3162 = vweird.f32 %v3126
  %vm3163 = vweird.f32 %v3157
  %vm3164 = vmor %vm3162, %vm3163
  %v3165 = vsel %vm3164, %v3157, %v3161
  %v3166 = vand.u32 2147483647, %v3126
  %vm3167 = vcmp.eq.f32.partialorder %v3166, 8.507059e+37
  %v3168 = vand.u32 %v3126, 2147483648
  %v3169 = vor.u32 1.1754944e-38, %v3168
  %v3170 = vsel %vm3167, %v3169, %v3165
  %v3171 = vmul.f32 1.0, %v3170
  %v3172 = vtanh.pop %v3114
  %v3173 = vmul.f32 %v3156, %v2794
  %v3174 = vmul.f32 %v3141, %v3172
  %v3175 = vadd.f32 %v3173, %v3174
  %v3176 = vtanh.pop %v3175
  %v3177 = vmul.f32 %v3171, %v3176
  %s3178 = scalar_lea.vmem [#allocation3], 48
  %3179 = vst [vmem:[%s3178] sm:$0xff] %v3177
  %s3180 = scalar_lea.vmem [#allocation2], 224
  %v3181 = vld [vmem:[%s3180] sm:$0xff]
  %v3182 = vld [vmem:[%s3180 + $0x8] sm:$0xff]
  %v3183 = vld [vmem:[%s3180 + $0x10] sm:$0xff]
  %v3184 = vld [vmem:[%s3180 + $0x18] sm:$0xff]
  %3185 = vmatpush.msra.mxu0 %v373
  %3186 = vmatpush.msra.mxu0 %v369
  %3187 = vmatpush.msra.mxu0 %v365
  %3188 = vmatpush.msra.mxu0 %v361
  %3189 = vmatpush.msra.mxu0 %v357
  %3190 = vmatpush.msra.mxu0 %v353
  %3191 = vmatpush.msra.mxu0 %v349
  %3192 = vmatpush.msra.mxu0 %v345
  %3193 = vmatpush.msra.mxu0 %v341
  %3194 = vmatpush.msra.mxu0 %v337
  %3195 = vmatpush.msra.mxu0 %v333
  %3196 = vmatpush.msra.mxu0 %v329
  %3197 = vmatpush.msra.mxu0 %v325
  %3198 = vmatpush.msra.mxu0 %v321
  %3199 = vmatpush.msra.mxu0 %v317
  %3200 = vmatpush.msra.mxu0 %v313
  %3201 = vmatmul.f32.gmra.mxu0 %v2950
  %v3202 = vpop.f32.mrf.mxu0
  %v3203 = vadd.f32 0.0, %v3202
  %3204 = vdwg.mxu0
  %3205 = vmatpush.msra.mxu0 %v374
  %3206 = vmatpush.msra.mxu0 %v370
  %3207 = vmatpush.msra.mxu0 %v366
  %3208 = vmatpush.msra.mxu0 %v362
  %3209 = vmatpush.msra.mxu0 %v358
  %3210 = vmatpush.msra.mxu0 %v354
  %3211 = vmatpush.msra.mxu0 %v350
  %3212 = vmatpush.msra.mxu0 %v346
  %3213 = vmatpush.msra.mxu0 %v342
  %3214 = vmatpush.msra.mxu0 %v338
  %3215 = vmatpush.msra.mxu0 %v334
  %3216 = vmatpush.msra.mxu0 %v330
  %3217 = vmatpush.msra.mxu0 %v326
  %3218 = vmatpush.msra.mxu0 %v322
  %3219 = vmatpush.msra.mxu0 %v318
  %3220 = vmatpush.msra.mxu0 %v314
  %3221 = vmatmul.f32.gmra.mxu0 %v2950
  %v3222 = vpop.f32.mrf.mxu0
  %v3223 = vadd.f32 0.0, %v3222
  %3224 = vdwg.mxu0
  %3225 = vmatpush.msra.mxu0 %v375
  %3226 = vmatpush.msra.mxu0 %v371
  %3227 = vmatpush.msra.mxu0 %v367
  %3228 = vmatpush.msra.mxu0 %v363
  %3229 = vmatpush.msra.mxu0 %v359
  %3230 = vmatpush.msra.mxu0 %v355
  %3231 = vmatpush.msra.mxu0 %v351
  %3232 = vmatpush.msra.mxu0 %v347
  %3233 = vmatpush.msra.mxu0 %v343
  %3234 = vmatpush.msra.mxu0 %v339
  %3235 = vmatpush.msra.mxu0 %v335
  %3236 = vmatpush.msra.mxu0 %v331
  %3237 = vmatpush.msra.mxu0 %v327
  %3238 = vmatpush.msra.mxu0 %v323
  %3239 = vmatpush.msra.mxu0 %v319
  %3240 = vmatpush.msra.mxu0 %v315
  %3241 = vmatmul.f32.gmra.mxu0 %v2950
  %v3242 = vpop.f32.mrf.mxu0
  %v3243 = vadd.f32 0.0, %v3242
  %3244 = vdwg.mxu0
  %3245 = vmatpush.msra.mxu0 %v376
  %3246 = vmatpush.msra.mxu0 %v372
  %3247 = vmatpush.msra.mxu0 %v368
  %3248 = vmatpush.msra.mxu0 %v364
  %3249 = vmatpush.msra.mxu0 %v360
  %3250 = vmatpush.msra.mxu0 %v356
  %3251 = vmatpush.msra.mxu0 %v352
  %3252 = vmatpush.msra.mxu0 %v348
  %3253 = vmatpush.msra.mxu0 %v344
  %3254 = vmatpush.msra.mxu0 %v340
  %3255 = vmatpush.msra.mxu0 %v336
  %3256 = vmatpush.msra.mxu0 %v332
  %3257 = vmatpush.msra.mxu0 %v328
  %3258 = vmatpush.msra.mxu0 %v324
  %3259 = vmatpush.msra.mxu0 %v320
  %3260 = vmatpush.msra.mxu0 %v316
  %3261 = vmatmul.f32.gmra.mxu0 %v2950
  %v3262 = vpop.f32.mrf.mxu0
  %v3263 = vadd.f32 0.0, %v3262
  %3264 = vdwg.mxu0
  %v3265 = vadd.f32 %v3181, %v3203
  %v3266 = vadd.f32 %v3182, %v3223
  %v3267 = vadd.f32 %v3183, %v3243
  %v3268 = vadd.f32 %v3184, %v3263
  %v3269 = vxor.u32 %v3265, 2147483648
  %v3270 = vxor.u32 %v3266, 2147483648
  %v3271 = vxor.u32 %v3267, 2147483648
  %v3272 = vmul.f32 %v3269, 1.442695
  %v3273 = vpow.pop %v3272
  %v3274 = vmul.f32 %v3270, 1.442695
  %v3275 = vpow.pop %v3274
  %v3276 = vmul.f32 %v3271, 1.442695
  %v3277 = vpow.pop %v3276
  %v3278 = vadd.f32 %v3273, 1.0
  %v3279 = vadd.f32 %v3275, 1.0
  %v3280 = vadd.f32 %v3277, 1.0
  %v3281 = vrcp.pop %v3278
  %v3282 = vmul.f32 %v3278, %v3281
  %v3283 = vsub.f32 1.0, %v3282
  %v3284 = vmul.f32 %v3281, %v3283
  %v3285 = vadd.f32 %v3281, %v3284
  %vm3286 = vweird.f32 %v3278
  %vm3287 = vweird.f32 %v3281
  %vm3288 = vmor %vm3286, %vm3287
  %v3289 = vsel %vm3288, %v3281, %v3285
  %v3290 = vand.u32 2147483647, %v3278
  %vm3291 = vcmp.eq.f32.partialorder %v3290, 8.507059e+37
  %v3292 = vand.u32 %v3278, 2147483648
  %v3293 = vor.u32 1.1754944e-38, %v3292
  %v3294 = vsel %vm3291, %v3293, %v3289
  %v3295 = vmul.f32 1.0, %v3294
  %v3296 = vrcp.pop %v3279
  %v3297 = vmul.f32 %v3279, %v3296
  %v3298 = vsub.f32 1.0, %v3297
  %v3299 = vmul.f32 %v3296, %v3298
  %v3300 = vadd.f32 %v3296, %v3299
  %vm3301 = vweird.f32 %v3279
  %vm3302 = vweird.f32 %v3296
  %vm3303 = vmor %vm3301, %vm3302
  %v3304 = vsel %vm3303, %v3296, %v3300
  %v3305 = vand.u32 2147483647, %v3279
  %vm3306 = vcmp.eq.f32.partialorder %v3305, 8.507059e+37
  %v3307 = vand.u32 %v3279, 2147483648
  %v3308 = vor.u32 1.1754944e-38, %v3307
  %v3309 = vsel %vm3306, %v3308, %v3304
  %v3310 = vmul.f32 1.0, %v3309
  %v3311 = vrcp.pop %v3280
  %v3312 = vmul.f32 %v3280, %v3311
  %v3313 = vsub.f32 1.0, %v3312
  %v3314 = vmul.f32 %v3311, %v3313
  %v3315 = vadd.f32 %v3311, %v3314
  %vm3316 = vweird.f32 %v3280
  %vm3317 = vweird.f32 %v3311
  %vm3318 = vmor %vm3316, %vm3317
  %v3319 = vsel %vm3318, %v3311, %v3315
  %v3320 = vand.u32 2147483647, %v3280
  %vm3321 = vcmp.eq.f32.partialorder %v3320, 8.507059e+37
  %v3322 = vand.u32 %v3280, 2147483648
  %v3323 = vor.u32 1.1754944e-38, %v3322
  %v3324 = vsel %vm3321, %v3323, %v3319
  %v3325 = vmul.f32 1.0, %v3324
  %v3326 = vtanh.pop %v3268
  %v3327 = vmul.f32 %v3310, %v2948
  %v3328 = vmul.f32 %v3295, %v3326
  %v3329 = vadd.f32 %v3327, %v3328
  %v3330 = vtanh.pop %v3329
  %v3331 = vmul.f32 %v3325, %v3330
  %3332 = vmatpush.msra.mxu0 %v501
  %3333 = vmatpush.msra.mxu0 %v497
  %3334 = vmatpush.msra.mxu0 %v493
  %3335 = vmatpush.msra.mxu0 %v489
  %3336 = vmatpush.msra.mxu0 %v485
  %3337 = vmatpush.msra.mxu0 %v481
  %3338 = vmatpush.msra.mxu0 %v477
  %3339 = vmatpush.msra.mxu0 %v473
  %3340 = vmatpush.msra.mxu0 %v469
  %3341 = vmatpush.msra.mxu0 %v465
  %3342 = vmatpush.msra.mxu0 %v461
  %3343 = vmatpush.msra.mxu0 %v457
  %3344 = vmatpush.msra.mxu0 %v453
  %3345 = vmatpush.msra.mxu0 %v449
  %3346 = vmatpush.msra.mxu0 %v445
  %3347 = vmatpush.msra.mxu0 %v441
  %3348 = vmatmul.f32.gmra.mxu0 %v3177
  %v3349 = vpop.f32.mrf.mxu0
  %v3350 = vadd.f32 0.0, %v3349
  %3351 = vdwg.mxu0
  %3352 = vmatpush.msra.mxu0 %v502
  %3353 = vmatpush.msra.mxu0 %v498
  %3354 = vmatpush.msra.mxu0 %v494
  %3355 = vmatpush.msra.mxu0 %v490
  %3356 = vmatpush.msra.mxu0 %v486
  %3357 = vmatpush.msra.mxu0 %v482
  %3358 = vmatpush.msra.mxu0 %v478
  %3359 = vmatpush.msra.mxu0 %v474
  %3360 = vmatpush.msra.mxu0 %v470
  %3361 = vmatpush.msra.mxu0 %v466
  %3362 = vmatpush.msra.mxu0 %v462
  %3363 = vmatpush.msra.mxu0 %v458
  %3364 = vmatpush.msra.mxu0 %v454
  %3365 = vmatpush.msra.mxu0 %v450
  %3366 = vmatpush.msra.mxu0 %v446
  %3367 = vmatpush.msra.mxu0 %v442
  %3368 = vmatmul.f32.gmra.mxu0 %v3177
  %v3369 = vpop.f32.mrf.mxu0
  %v3370 = vadd.f32 0.0, %v3369
  %3371 = vdwg.mxu0
  %3372 = vmatpush.msra.mxu0 %v503
  %3373 = vmatpush.msra.mxu0 %v499
  %3374 = vmatpush.msra.mxu0 %v495
  %3375 = vmatpush.msra.mxu0 %v491
  %3376 = vmatpush.msra.mxu0 %v487
  %3377 = vmatpush.msra.mxu0 %v483
  %3378 = vmatpush.msra.mxu0 %v479
  %3379 = vmatpush.msra.mxu0 %v475
  %3380 = vmatpush.msra.mxu0 %v471
  %3381 = vmatpush.msra.mxu0 %v467
  %3382 = vmatpush.msra.mxu0 %v463
  %3383 = vmatpush.msra.mxu0 %v459
  %3384 = vmatpush.msra.mxu0 %v455
  %3385 = vmatpush.msra.mxu0 %v451
  %3386 = vmatpush.msra.mxu0 %v447
  %3387 = vmatpush.msra.mxu0 %v443
  %3388 = vmatmul.f32.gmra.mxu0 %v3177
  %v3389 = vpop.f32.mrf.mxu0
  %v3390 = vadd.f32 0.0, %v3389
  %3391 = vdwg.mxu0
  %3392 = vmatpush.msra.mxu0 %v504
  %3393 = vmatpush.msra.mxu0 %v500
  %3394 = vmatpush.msra.mxu0 %v496
  %3395 = vmatpush.msra.mxu0 %v492
  %3396 = vmatpush.msra.mxu0 %v488
  %3397 = vmatpush.msra.mxu0 %v484
  %3398 = vmatpush.msra.mxu0 %v480
  %3399 = vmatpush.msra.mxu0 %v476
  %3400 = vmatpush.msra.mxu0 %v472
  %3401 = vmatpush.msra.mxu0 %v468
  %3402 = vmatpush.msra.mxu0 %v464
  %3403 = vmatpush.msra.mxu0 %v460
  %3404 = vmatpush.msra.mxu0 %v456
  %3405 = vmatpush.msra.mxu0 %v452
  %3406 = vmatpush.msra.mxu0 %v448
  %3407 = vmatpush.msra.mxu0 %v444
  %3408 = vmatmul.f32.gmra.mxu0 %v3177
  %v3409 = vpop.f32.mrf.mxu0
  %v3410 = vadd.f32 0.0, %v3409
  %3411 = vdwg.mxu0
  %3412 = vmatpush.msra.mxu0 %v437
  %3413 = vmatpush.msra.mxu0 %v433
  %3414 = vmatpush.msra.mxu0 %v429
  %3415 = vmatpush.msra.mxu0 %v425
  %3416 = vmatpush.msra.mxu0 %v421
  %3417 = vmatpush.msra.mxu0 %v417
  %3418 = vmatpush.msra.mxu0 %v413
  %3419 = vmatpush.msra.mxu0 %v409
  %3420 = vmatpush.msra.mxu0 %v405
  %3421 = vmatpush.msra.mxu0 %v401
  %3422 = vmatpush.msra.mxu0 %v397
  %3423 = vmatpush.msra.mxu0 %v393
  %3424 = vmatpush.msra.mxu0 %v389
  %3425 = vmatpush.msra.mxu0 %v385
  %3426 = vmatpush.msra.mxu0 %v381
  %3427 = vmatpush.msra.mxu0 %v377
  %3428 = vmatmul.f32.gmra.mxu0 %v3331
  %v3429 = vpop.f32.mrf.mxu0
  %v3430 = vadd.f32 %v3350, %v3429
  %3431 = vdwg.mxu0
  %3432 = vmatpush.msra.mxu0 %v438
  %3433 = vmatpush.msra.mxu0 %v434
  %3434 = vmatpush.msra.mxu0 %v430
  %3435 = vmatpush.msra.mxu0 %v426
  %3436 = vmatpush.msra.mxu0 %v422
  %3437 = vmatpush.msra.mxu0 %v418
  %3438 = vmatpush.msra.mxu0 %v414
  %3439 = vmatpush.msra.mxu0 %v410
  %3440 = vmatpush.msra.mxu0 %v406
  %3441 = vmatpush.msra.mxu0 %v402
  %3442 = vmatpush.msra.mxu0 %v398
  %3443 = vmatpush.msra.mxu0 %v394
  %3444 = vmatpush.msra.mxu0 %v390
  %3445 = vmatpush.msra.mxu0 %v386
  %3446 = vmatpush.msra.mxu0 %v382
  %3447 = vmatpush.msra.mxu0 %v378
  %3448 = vmatmul.f32.gmra.mxu0 %v3331
  %v3449 = vpop.f32.mrf.mxu0
  %v3450 = vadd.f32 %v3370, %v3449
  %3451 = vdwg.mxu0
  %3452 = vmatpush.msra.mxu0 %v439
  %3453 = vmatpush.msra.mxu0 %v435
  %3454 = vmatpush.msra.mxu0 %v431
  %3455 = vmatpush.msra.mxu0 %v427
  %3456 = vmatpush.msra.mxu0 %v423
  %3457 = vmatpush.msra.mxu0 %v419
  %3458 = vmatpush.msra.mxu0 %v415
  %3459 = vmatpush.msra.mxu0 %v411
  %3460 = vmatpush.msra.mxu0 %v407
  %3461 = vmatpush.msra.mxu0 %v403
  %3462 = vmatpush.msra.mxu0 %v399
  %3463 = vmatpush.msra.mxu0 %v395
  %3464 = vmatpush.msra.mxu0 %v391
  %3465 = vmatpush.msra.mxu0 %v387
  %3466 = vmatpush.msra.mxu0 %v383
  %3467 = vmatpush.msra.mxu0 %v379
  %3468 = vmatmul.f32.gmra.mxu0 %v3331
  %v3469 = vpop.f32.mrf.mxu0
  %v3470 = vadd.f32 %v3390, %v3469
  %3471 = vdwg.mxu0
  %3472 = vmatpush.msra.mxu0 %v440
  %3473 = vmatpush.msra.mxu0 %v436
  %3474 = vmatpush.msra.mxu0 %v432
  %3475 = vmatpush.msra.mxu0 %v428
  %3476 = vmatpush.msra.mxu0 %v424
  %3477 = vmatpush.msra.mxu0 %v420
  %3478 = vmatpush.msra.mxu0 %v416
  %3479 = vmatpush.msra.mxu0 %v412
  %3480 = vmatpush.msra.mxu0 %v408
  %3481 = vmatpush.msra.mxu0 %v404
  %3482 = vmatpush.msra.mxu0 %v400
  %3483 = vmatpush.msra.mxu0 %v396
  %3484 = vmatpush.msra.mxu0 %v392
  %3485 = vmatpush.msra.mxu0 %v388
  %3486 = vmatpush.msra.mxu0 %v384
  %3487 = vmatpush.msra.mxu0 %v380
  %3488 = vmatmul.f32.gmra.mxu0 %v3331
  %v3489 = vpop.f32.mrf.mxu0
  %v3490 = vadd.f32 %v3410, %v3489
  %3491 = vdwg.mxu0
  %v3492 = vadd.f32 %v3430, %v507
  %v3493 = vadd.f32 %v3450, %v508
  %v3494 = vadd.f32 %v3470, %v509
  %v3495 = vadd.f32 %v3490, %v510
  %v3496 = vxor.u32 %v3492, 2147483648
  %v3497 = vxor.u32 %v3493, 2147483648
  %v3498 = vxor.u32 %v3494, 2147483648
  %v3499 = vmul.f32 %v3496, 1.442695
  %v3500 = vpow.pop %v3499
  %v3501 = vmul.f32 %v3497, 1.442695
  %v3502 = vpow.pop %v3501
  %v3503 = vmul.f32 %v3498, 1.442695
  %v3504 = vpow.pop %v3503
  %v3505 = vadd.f32 %v3500, 1.0
  %v3506 = vadd.f32 %v3502, 1.0
  %v3507 = vadd.f32 %v3504, 1.0
  %v3508 = vrcp.pop %v3505
  %v3509 = vmul.f32 %v3505, %v3508
  %v3510 = vsub.f32 1.0, %v3509
  %v3511 = vmul.f32 %v3508, %v3510
  %v3512 = vadd.f32 %v3508, %v3511
  %vm3513 = vweird.f32 %v3505
  %vm3514 = vweird.f32 %v3508
  %vm3515 = vmor %vm3513, %vm3514
  %v3516 = vsel %vm3515, %v3508, %v3512
  %v3517 = vand.u32 2147483647, %v3505
  %vm3518 = vcmp.eq.f32.partialorder %v3517, 8.507059e+37
  %v3519 = vand.u32 %v3505, 2147483648
  %v3520 = vor.u32 1.1754944e-38, %v3519
  %v3521 = vsel %vm3518, %v3520, %v3516
  %v3522 = vmul.f32 1.0, %v3521
  %v3523 = vrcp.pop %v3506
  %v3524 = vmul.f32 %v3506, %v3523
  %v3525 = vsub.f32 1.0, %v3524
  %v3526 = vmul.f32 %v3523, %v3525
  %v3527 = vadd.f32 %v3523, %v3526
  %vm3528 = vweird.f32 %v3506
  %vm3529 = vweird.f32 %v3523
  %vm3530 = vmor %vm3528, %vm3529
  %v3531 = vsel %vm3530, %v3523, %v3527
  %v3532 = vand.u32 2147483647, %v3506
  %vm3533 = vcmp.eq.f32.partialorder %v3532, 8.507059e+37
  %v3534 = vand.u32 %v3506, 2147483648
  %v3535 = vor.u32 1.1754944e-38, %v3534
  %v3536 = vsel %vm3533, %v3535, %v3531
  %v3537 = vmul.f32 1.0, %v3536
  %v3538 = vrcp.pop %v3507
  %v3539 = vmul.f32 %v3507, %v3538
  %v3540 = vsub.f32 1.0, %v3539
  %v3541 = vmul.f32 %v3538, %v3540
  %v3542 = vadd.f32 %v3538, %v3541
  %vm3543 = vweird.f32 %v3507
  %vm3544 = vweird.f32 %v3538
  %vm3545 = vmor %vm3543, %vm3544
  %v3546 = vsel %vm3545, %v3538, %v3542
  %v3547 = vand.u32 2147483647, %v3507
  %vm3548 = vcmp.eq.f32.partialorder %v3547, 8.507059e+37
  %v3549 = vand.u32 %v3507, 2147483648
  %v3550 = vor.u32 1.1754944e-38, %v3549
  %v3551 = vsel %vm3548, %v3550, %v3546
  %v3552 = vmul.f32 1.0, %v3551
  %v3553 = vtanh.pop %v3495
  %v3554 = vmul.f32 %v3537, %v3175
  %v3555 = vmul.f32 %v3522, %v3553
  %v3556 = vadd.f32 %v3554, %v3555
  %v3557 = vtanh.pop %v3556
  %v3558 = vmul.f32 %v3552, %v3557
  %s3559 = scalar_lea.vmem [#allocation3], 56
  %3560 = vst [vmem:[%s3559] sm:$0xff] %v3558
  %3561 = vst [vmem:[%s10] sm:$0xff] %v3331
  %s3562 = scalar_lea.vmem %s10, 8
  %3563 = vst [vmem:[%s3562] sm:$0xff] %v3558
  %3564 = vst [vmem:[%s11] sm:$0xff] %v3329
  %s3565 = scalar_lea.vmem %s11, 8
  %3566 = vst [vmem:[%s3565] sm:$0xff] %v3556
  %v3567 = vld [vmem:[#allocation3] sm:$0xff]
  %v3568 = vld [vmem:[#allocation3 + $0x8] sm:$0xff]
  %v3569 = vld [vmem:[#allocation3 + $0x10] sm:$0xff]
  %v3570 = vld [vmem:[#allocation3 + $0x18] sm:$0xff]
  %v3571 = vld [vmem:[#allocation3 + $0x20] sm:$0xff]
  %v3572 = vld [vmem:[#allocation3 + $0x28] sm:$0xff]
  %v3573 = vld [vmem:[#allocation3 + $0x30] sm:$0xff]
  %v3574 = vld [vmem:[#allocation3 + $0x38] sm:$0xff]
  %v3575 = vld [vmem:[%s7] sm:$0xff]
  %v3576 = vld [vmem:[%s7 + $0x8] sm:$0xff]
  %v3577 = vld [vmem:[%s7 + $0x10] sm:$0xff]
  %v3578 = vld [vmem:[%s7 + $0x18] sm:$0xff]
  %v3579 = vld [vmem:[%s7 + $0x20] sm:$0xff]
  %v3580 = vld [vmem:[%s7 + $0x28] sm:$0xff]
  %v3581 = vld [vmem:[%s7 + $0x30] sm:$0xff]
  %v3582 = vld [vmem:[%s7 + $0x38] sm:$0xff]
  %v3583 = vld [vmem:[%s7 + $0x40] sm:$0xff]
  %v3584 = vld [vmem:[%s7 + $0x48] sm:$0xff]
  %v3585 = vld [vmem:[%s7 + $0x50] sm:$0xff]
  %v3586 = vld [vmem:[%s7 + $0x58] sm:$0xff]
  %v3587 = vld [vmem:[%s7 + $0x60] sm:$0xff]
  %v3588 = vld [vmem:[%s7 + $0x68] sm:$0xff]
  %v3589 = vld [vmem:[%s7 + $0x70] sm:$0xff]
  %v3590 = vld [vmem:[%s7 + $0x78] sm:$0xff]
  %v3591 = vld [vmem:[%s8] sm:$0x1]
  %v3593 = vperm.slane %v3591, 0
  %3595 = vmatpush.msra.mxu0 %v3590
  %3596 = vmatpush.msra.mxu0 %v3589
  %3597 = vmatpush.msra.mxu0 %v3588
  %3598 = vmatpush.msra.mxu0 %v3587
  %3599 = vmatpush.msra.mxu0 %v3586
  %3600 = vmatpush.msra.mxu0 %v3585
  %3601 = vmatpush.msra.mxu0 %v3584
  %3602 = vmatpush.msra.mxu0 %v3583
  %3603 = vmatpush.msra.mxu0 %v3582
  %3604 = vmatpush.msra.mxu0 %v3581
  %3605 = vmatpush.msra.mxu0 %v3580
  %3606 = vmatpush.msra.mxu0 %v3579
  %3607 = vmatpush.msra.mxu0 %v3578
  %3608 = vmatpush.msra.mxu0 %v3577
  %3609 = vmatpush.msra.mxu0 %v3576
  %3610 = vmatpush.msra.mxu0 %v3575
  %3611 = vmatmul.f32.gmra.mxu0 %v3567
  %v3612 = vpop.f32.mrf.mxu0
  %v3613 = vadd.f32 %v3593, %v3612
  %3614 = vmatmul.f32.gmra.mxu0 %v3568
  %v3615 = vpop.f32.mrf.mxu0
  %v3616 = vadd.f32 %v3593, %v3615
  %3617 = vmatmul.f32.gmra.mxu0 %v3569
  %v3618 = vpop.f32.mrf.mxu0
  %v3619 = vadd.f32 %v3593, %v3618
  %3620 = vmatmul.f32.gmra.mxu0 %v3570
  %v3621 = vpop.f32.mrf.mxu0
  %v3622 = vadd.f32 %v3593, %v3621
  %3623 = vmatmul.f32.gmra.mxu0 %v3571
  %v3624 = vpop.f32.mrf.mxu0
  %v3625 = vadd.f32 %v3593, %v3624
  %3626 = vmatmul.f32.gmra.mxu0 %v3572
  %v3627 = vpop.f32.mrf.mxu0
  %v3628 = vadd.f32 %v3593, %v3627
  %3629 = vmatmul.f32.gmra.mxu0 %v3573
  %v3630 = vpop.f32.mrf.mxu0
  %v3631 = vadd.f32 %v3593, %v3630
  %3632 = vmatmul.f32.gmra.mxu0 %v3574
  %v3633 = vpop.f32.mrf.mxu0
  %v3634 = vadd.f32 %v3593, %v3633
  %3635 = vdwg.mxu0
  %3636 = vst [vmem:[%s9] sm:$0xff] %v3613
  %3637 = vst [vmem:[%s9 + $0x8] sm:$0xff] %v3616
  %3638 = vst [vmem:[%s9 + $0x10] sm:$0xff] %v3619
  %3639 = vst [vmem:[%s9 + $0x18] sm:$0xff] %v3622
  %3640 = vst [vmem:[%s9 + $0x20] sm:$0xff] %v3625
  %3641 = vst [vmem:[%s9 + $0x28] sm:$0xff] %v3628
  %3642 = vst [vmem:[%s9 + $0x30] sm:$0xff] %v3631
  %3643 = vst [vmem:[%s9 + $0x38] sm:$0xff] %v3634
  // Predicated region
  $region38: #{lstm_drag_predictor.1} parent=0 // pred_check
    _
  $region39: #{lstm_drag_predictor.1} parent=0 // pred_check_branch
    %3645 = sbr.rel (0) target = $region41
  $region40: #{lstm_drag_predictor.1} parent=0 // pred_region
    _
  $region41: #{lstm_drag_predictor.1} parent=0 // pred_fallthru
    _
  // Predicated region
  $region42: #{lstm_drag_predictor.1} parent=0 // pred_check
    _
  $region43: #{lstm_drag_predictor.1} parent=0 // pred_check_branch
    %3647 = sbr.rel (0) target = $region45
  $region44: #{lstm_drag_predictor.1} parent=0 // pred_region
    _
  $region45: #{lstm_drag_predictor.1} parent=0 // pred_fallthru
    _
  // Predicated region
  $region46: #{lstm_drag_predictor.1} parent=0 // pred_check
    _
  $region47: #{lstm_drag_predictor.1} parent=0 // pred_check_branch
    %3649 = sbr.rel (0) target = $region49
  $region48: #{lstm_drag_predictor.1} parent=0 // pred_region
    _
  $region49: #{lstm_drag_predictor.1} parent=0 // pred_fallthru
    _
  // Predicated region
  $region50: #{lstm_drag_predictor.1} parent=0 // pred_check
    _
  $region51: #{lstm_drag_predictor.1} parent=0 // pred_check_branch
    %3651 = sbr.rel (0) target = $region53
  $region52: #{lstm_drag_predictor.1} parent=0 // pred_region
    _
  $region53: #{lstm_drag_predictor.1} parent=0 // pred_fallthru
    _
  // Predicated region
  $region54: #{lstm_drag_predictor.1} parent=0 // pred_check
    _
  $region55: #{lstm_drag_predictor.1} parent=0 // pred_check_branch
    %3653 = sbr.rel (0) target = $region57
  $region56: #{lstm_drag_predictor.1} parent=0 // pred_region
    _
  $region57: #{lstm_drag_predictor.1} parent=0 // pred_fallthru
    _
  // Predicated region
  $region58: #{lstm_drag_predictor.1} parent=0 // pred_check
    _
  $region59: #{lstm_drag_predictor.1} parent=0 // pred_check_branch
    %3655 = sbr.rel (0) target = $region61
  $region60: #{lstm_drag_predictor.1} parent=0 // pred_region
    _
  $region61: #{lstm_drag_predictor.1} parent=0 // pred_fallthru
    _

</llo_original>
